<compile_context>
chip_gen: v6e
topology: v6e:2x2x1
jax: 0.10.0
libtpu: 0.0.40
codegen_flags: <defaults>
</compile_context>

<pallas_src>
import jax
import jax.numpy as jnp
from jax import lax
from jax.experimental import pallas as pl
from jax.experimental.pallas import tpu as pltpu  # noqa: F401  (TPU backend assumed)


# ----------------------------- fused Pallas kernel ---------------------------

def _fused_forward_kernel(slab_ref, conv_w_ref, conv_b_ref, pool_ref,
                          fc_w_ref, fc_b_ref, a_ref, gcn_w_ref, gcn_b_ref,
                          gpool_ref, cls_w1_ref, cls_b1_ref, cls_w2_ref, cls_b2_ref,
                          logits_ref, emb_ref):
    """Whole batched forward pass in one invocation; pure MXU matmul chain."""
    f32 = jnp.float32

    # ---- 3x3 'same' conv as ONE stacked-tap matmul: (hid, 9C) @ (9C, B*F*H*W) ----
    conv = jnp.dot(conv_w_ref[...], slab_ref[...], preferred_element_type=f32)
    conv = jnp.maximum(conv + conv_b_ref[...], 0.0)                       # (hid, N)

    # ---- per-face global average pool (grouped lane reduction as a matmul) ------
    pooled = lax.dot_general(pool_ref[...], conv, (((1,), (1,)), ((), ())),
                             preferred_element_type=f32)                  # (B*F, hid)

    # ---- face FC + ReLU ----------------------------------------------------------
    face_emb = jnp.maximum(
        jnp.dot(pooled, fc_w_ref[...], preferred_element_type=f32)
        + fc_b_ref[...], 0.0)                                             # (B*F, nurbs)

    # ---- one GCN layer (block-diagonal A_norm) + mean graph readout --------------
    xw = jnp.dot(face_emb, gcn_w_ref[...], preferred_element_type=f32)    # (B*F, gdim)
    node = jnp.maximum(
        jnp.dot(a_ref[...], xw, preferred_element_type=f32)
        + gcn_b_ref[...], 0.0)                                            # (B*F, gdim)
    graph_emb = jnp.dot(gpool_ref[...], node, preferred_element_type=f32)  # (B, gdim)

    # ---- classifier MLP (dropout = identity at inference) ------------------------
    emb = jnp.maximum(
        jnp.dot(graph_emb, cls_w1_ref[...], preferred_element_type=f32)
        + cls_b1_ref[...], 0.0)                                           # (B, gdim)
    logits = (jnp.dot(emb, cls_w2_ref[...], preferred_element_type=f32)
              + cls_b2_ref[...])                                          # (B, ncls)

    logits_ref[...] = logits
    emb_ref[...] = emb


# ------------------------------ wrapper ---------------------------------------

def _im2col_slab(feat_f32, H, W):
    """(B*F, C, H, W) -> (9*C, B*F*H*W) masked/shifted tap slab (SAME padding=1)."""
    BF, C = feat_f32.shape[0], feat_f32.shape[1]
    xpad = jnp.pad(feat_f32, ((0, 0), (0, 0), (1, 1), (1, 1)))
    taps = [xpad[:, :, kh:kh + H, kw:kw + W]          # tap index k = kh*3 + kw
            for kh in range(3) for kw in range(3)]
    stacked = jnp.stack(taps, axis=0)                  # (9, BF, C, H, W)
    # row = k*C + c ; lane = bf*H*W + y*W + x
    return stacked.transpose(0, 2, 1, 3, 4).reshape(9 * C, BF * H * W)


def model_forward(params, a_norm, feat, *, B, F, H, W):
    """Single fused pallas_call reproducing Model.forward -> (logits, emb)."""
    f32 = jnp.float32
    C = feat.shape[1]
    S = H * W
    BF = B * F
    N = BF * S
    hid = params["conv_w"].shape[1]
    nurbs = params["face_fc_w"].shape[1]
    gdim = params["gcn_w"].shape[1]
    ncls = params["cls_w2"].shape[1]

    # Host-side (XLA) precomputation: im2col slab, pooling matrices, block-diag A.
    slab = _im2col_slab(feat.astype(f32), H, W)                        # (9C, N)
    conv_w2 = params["conv_w"].transpose(1, 0, 2).reshape(hid, 9 * C)  # (hid, 9C)
    pool_face = jnp.repeat(jnp.eye(BF, dtype=f32), S, axis=1) / S      # (BF, N)
    a_bd = (jnp.eye(B, dtype=f32)[:, None, :, None]
            * a_norm.astype(f32)[:, :, None, :]).reshape(BF, BF)       # block-diag
    g_pool = jnp.repeat(jnp.eye(B, dtype=f32), F, axis=1) / F          # (B, BF)

    args = (
        slab,
        conv_w2.astype(f32),
        params["conv_b"].reshape(hid, 1).astype(f32),
        pool_face,
        params["face_fc_w"].astype(f32),
        params["face_fc_b"].reshape(1, nurbs).astype(f32),
        a_bd,
        params["gcn_w"].astype(f32),
        params["gcn_b"].reshape(1, gdim).astype(f32),
        g_pool,
        params["cls_w1"].astype(f32),
        params["cls_b1"].reshape(1, gdim).astype(f32),
        params["cls_w2"].astype(f32),
        params["cls_b2"].reshape(1, ncls).astype(f32),
    )

    # Single invocation (no grid): every operand lives fully in VMEM (<1 MiB total),
    # no per-step pipeline overhead, no serial small-matmul tails.
    logits, emb = pl.pallas_call(
        _fused_forward_kernel,
        out_shape=(jax.ShapeDtypeStruct((B, ncls), f32),
                   jax.ShapeDtypeStruct((B, gdim), f32)),
    )(*args)
    return logits, emb


# ------------------------- pure-JAX reference (validation) --------------------

def reference_forward(params, a_norm, feat, *, B, F):
    hid = params["conv_w"].shape[1]
    C = feat.shape[1]
    # conv_w stored as (tap=ky*3+kx, out, in) -> rebuild OIHW for lax.conv.
    w_oihw = jnp.transpose(params["conv_w"], (1, 2, 0)).reshape(hid, C, 3, 3)
    conv = lax.conv_general_dilated(
        feat.astype(jnp.float32), w_oihw.astype(jnp.float32),
        window_strides=(1, 1), padding="SAME",
        dimension_numbers=("NCHW", "OIHW", "NCHW"))
    conv = jax.nn.relu(conv + params["conv_b"].reshape(1, hid, 1, 1))
    pooled = conv.mean(axis=(2, 3))                                  # (B*F, hid)
    face_emb = jax.nn.relu(pooled @ params["face_fc_w"] + params["face_fc_b"])
    node = face_emb.reshape(B, F, -1) @ params["gcn_w"]
    node = jax.nn.relu(jnp.einsum("bij,bjd->bid", a_norm, node) + params["gcn_b"])
    graph_emb = node.mean(axis=1)                                    # (B, gdim)
    emb = jax.nn.relu(graph_emb @ params["cls_w1"] + params["cls_b1"])
    logits = emb @ params["cls_w2"] + params["cls_b2"]
    return logits, emb


def init_params(key, *, input_channels, conv_hidden, nurbs_emb_dim,
                graph_emb_dim, num_classes):
    ks = jax.random.split(key, 5)
    s = 0.2
    return {
        "conv_w": s * jax.random.normal(ks[0], (9, conv_hidden, input_channels)),
        "conv_b": jnp.zeros((conv_hidden,)),
        "face_fc_w": s * jax.random.normal(ks[1], (conv_hidden, nurbs_emb_dim)),
        "face_fc_b": jnp.zeros((nurbs_emb_dim,)),
        "gcn_w": s * jax.random.normal(ks[2], (nurbs_emb_dim, graph_emb_dim)),
        "gcn_b": jnp.zeros((graph_emb_dim,)),
        "cls_w1": s * jax.random.normal(ks[3], (graph_emb_dim, graph_emb_dim)),
        "cls_b1": jnp.zeros((graph_emb_dim,)),
        "cls_w2": s * jax.random.normal(ks[4], (graph_emb_dim, num_classes)),
        "cls_b2": jnp.zeros((num_classes,)),
    }


# ------------------------------------ main -------------------------------------

if __name__ == "__main__":
    B, F = 2, 8                      # B-rep graphs in batch, faces per graph
    C, H, W = 4, 16, 16              # input_channels, UV-grid resolution
    CONV_HIDDEN, NURBS_EMB, GRAPH_EMB, NUM_CLASSES = 16, 32, 64, 10

    key = jax.random.PRNGKey(0)
    k_feat, k_adj, k_par = jax.random.split(key, 3)

    # Inputs: per-face UV-grid features (NCHW) and batched, row-normalized adjacency.
    feat = jax.random.normal(k_feat, (B * F, C, H, W), dtype=jnp.float32)
    a = (jax.random.uniform(k_adj, (B, F, F)) < 0.3).astype(jnp.float32)
    a = jnp.maximum(a, jnp.swapaxes(a, 1, 2))                  # symmetrize
    a_hat = a + jnp.eye(F, dtype=jnp.float32)[None]            # self loops
    a_norm = a_hat / a_hat.sum(axis=-1, keepdims=True)         # row-normalize

    params = init_params(k_par, input_channels=C, conv_hidden=CONV_HIDDEN,
                         nurbs_emb_dim=NURBS_EMB, graph_emb_dim=GRAPH_EMB,
                         num_classes=NUM_CLASSES)

    fwd = jax.jit(lambda p, a_, x_: model_forward(p, a_, x_, B=B, F=F, H=H, W=W))
    logits, emb = fwd(params, a_norm, feat)
    jax.block_until_ready((logits, emb))

    assert logits.shape == (B, NUM_CLASSES), logits.shape
    assert emb.shape == (B, GRAPH_EMB), emb.shape
    assert bool(jnp.all(jnp.isfinite(logits))) and bool(jnp.all(jnp.isfinite(emb)))

    # Validate the fused kernel against a pure-JAX reference.
    ref_logits, ref_emb = reference_forward(params, a_norm, feat, B=B, F=F)

    def _close(x, y, tol=5e-3):
        return float(jnp.max(jnp.abs(x - y))) <= tol * (1.0 + float(jnp.max(jnp.abs(y))))

    assert _close(logits, ref_logits), "logits mismatch vs pure-JAX reference"
    assert _close(emb, ref_emb), "emb mismatch vs pure-JAX reference"

    print("KERNEL_OK")
</pallas_src>

<mosaic_0001>
module attributes {stable_mosaic.version = 11 : i64} {
  func.func @_fused_forward_kernel(%arg0: memref<36x4096xf32, #tpu.memory_space<vmem>>, %arg1: memref<16x36xf32, #tpu.memory_space<vmem>>, %arg2: memref<16x1xf32, #tpu.memory_space<vmem>>, %arg3: memref<16x4096xf32, #tpu.memory_space<vmem>>, %arg4: memref<16x32xf32, #tpu.memory_space<vmem>>, %arg5: memref<1x32xf32, #tpu.memory_space<vmem>>, %arg6: memref<16x16xf32, #tpu.memory_space<vmem>>, %arg7: memref<32x64xf32, #tpu.memory_space<vmem>>, %arg8: memref<1x64xf32, #tpu.memory_space<vmem>>, %arg9: memref<2x16xf32, #tpu.memory_space<vmem>>, %arg10: memref<64x64xf32, #tpu.memory_space<vmem>>, %arg11: memref<1x64xf32, #tpu.memory_space<vmem>>, %arg12: memref<64x10xf32, #tpu.memory_space<vmem>>, %arg13: memref<1x10xf32, #tpu.memory_space<vmem>>, %arg14: memref<2x10xf32, #tpu.memory_space<vmem>>, %arg15: memref<2x64xf32, #tpu.memory_space<vmem>>) attributes {dimension_semantics = [], scalar_prefetch = 0 : i64, scratch_operands = 0 : i64, tpu.core_type = #tpu.core_type<tc>} {
    %c0 = arith.constant 0 : index
    %c0_0 = arith.constant 0 : index
    %0 = vector.load %arg1[%c0, %c0_0] : memref<16x36xf32, #tpu.memory_space<vmem>>, vector<16x36xf32>
    %c0_1 = arith.constant 0 : index
    %c0_2 = arith.constant 0 : index
    %1 = vector.load %arg0[%c0_1, %c0_2] : memref<36x4096xf32, #tpu.memory_space<vmem>>, vector<36x4096xf32>
    %cst = arith.constant dense<0.000000e+00> : vector<16x4096xf32>
    %2 = tpu.matmul %0, %1, %cst {dimension_numbers = #tpu.dot_dimension_numbers<[1], [0], [0], [1], [0, 0, 1, 1], [], []>} : vector<16x36xf32>, vector<36x4096xf32>, vector<16x4096xf32> -> vector<16x4096xf32>
    %c0_3 = arith.constant 0 : index
    %c0_4 = arith.constant 0 : index
    %3 = vector.load %arg2[%c0_3, %c0_4] : memref<16x1xf32, #tpu.memory_space<vmem>>, vector<16x1xf32>
    %4 = vector.broadcast %3 : vector<16x1xf32> to vector<16x4096xf32>
    %5 = arith.addf %2, %4 : vector<16x4096xf32>
    %cst_5 = arith.constant 0.000000e+00 : f32
    %6 = vector.broadcast %cst_5 : f32 to vector<16x4096xf32>
    %7 = arith.maximumf %5, %6 : vector<16x4096xf32>
    %c0_6 = arith.constant 0 : index
    %c0_7 = arith.constant 0 : index
    %8 = vector.load %arg3[%c0_6, %c0_7] : memref<16x4096xf32, #tpu.memory_space<vmem>>, vector<16x4096xf32>
    %cst_8 = arith.constant dense<0.000000e+00> : vector<16x16xf32>
    %9 = tpu.matmul %8, %7, %cst_8 {dimension_numbers = #tpu.dot_dimension_numbers<[1], [1], [0], [0], [0, 0, 1, 0], [], []>} : vector<16x4096xf32>, vector<16x4096xf32>, vector<16x16xf32> -> vector<16x16xf32>
    %c0_9 = arith.constant 0 : index
    %c0_10 = arith.constant 0 : index
    %10 = vector.load %arg4[%c0_9, %c0_10] : memref<16x32xf32, #tpu.memory_space<vmem>>, vector<16x32xf32>
    %cst_11 = arith.constant dense<0.000000e+00> : vector<16x32xf32>
    %11 = tpu.matmul %9, %10, %cst_11 {dimension_numbers = #tpu.dot_dimension_numbers<[1], [0], [0], [1], [0, 0, 1, 1], [], []>} : vector<16x16xf32>, vector<16x32xf32>, vector<16x32xf32> -> vector<16x32xf32>
    %c0_12 = arith.constant 0 : index
    %c0_13 = arith.constant 0 : index
    %12 = vector.load %arg5[%c0_12, %c0_13] : memref<1x32xf32, #tpu.memory_space<vmem>>, vector<1x32xf32>
    %13 = vector.broadcast %12 : vector<1x32xf32> to vector<16x32xf32>
    %14 = arith.addf %11, %13 : vector<16x32xf32>
    %cst_14 = arith.constant 0.000000e+00 : f32
    %15 = vector.broadcast %cst_14 : f32 to vector<16x32xf32>
    %16 = arith.maximumf %14, %15 : vector<16x32xf32>
    %c0_15 = arith.constant 0 : index
    %c0_16 = arith.constant 0 : index
    %17 = vector.load %arg7[%c0_15, %c0_16] : memref<32x64xf32, #tpu.memory_space<vmem>>, vector<32x64xf32>
    %cst_17 = arith.constant dense<0.000000e+00> : vector<16x64xf32>
    %18 = tpu.matmul %16, %17, %cst_17 {dimension_numbers = #tpu.dot_dimension_numbers<[1], [0], [0], [1], [0, 0, 1, 1], [], []>} : vector<16x32xf32>, vector<32x64xf32>, vector<16x64xf32> -> vector<16x64xf32>
    %c0_18 = arith.constant 0 : index
    %c0_19 = arith.constant 0 : index
    %19 = vector.load %arg6[%c0_18, %c0_19] : memref<16x16xf32, #tpu.memory_space<vmem>>, vector<16x16xf32>
    %cst_20 = arith.constant dense<0.000000e+00> : vector<16x64xf32>
    %20 = tpu.matmul %19, %18, %cst_20 {dimension_numbers = #tpu.dot_dimension_numbers<[1], [0], [0], [1], [0, 0, 1, 1], [], []>} : vector<16x16xf32>, vector<16x64xf32>, vector<16x64xf32> -> vector<16x64xf32>
    %c0_21 = arith.constant 0 : index
    %c0_22 = arith.constant 0 : index
    %21 = vector.load %arg8[%c0_21, %c0_22] : memref<1x64xf32, #tpu.memory_space<vmem>>, vector<1x64xf32>
    %22 = vector.broadcast %21 : vector<1x64xf32> to vector<16x64xf32>
    %23 = arith.addf %20, %22 : vector<16x64xf32>
    %cst_23 = arith.constant 0.000000e+00 : f32
    %24 = vector.broadcast %cst_23 : f32 to vector<16x64xf32>
    %25 = arith.maximumf %23, %24 : vector<16x64xf32>
    %c0_24 = arith.constant 0 : index
    %c0_25 = arith.constant 0 : index
    %26 = vector.load %arg9[%c0_24, %c0_25] : memref<2x16xf32, #tpu.memory_space<vmem>>, vector<2x16xf32>
    %cst_26 = arith.constant dense<0.000000e+00> : vector<2x64xf32>
    %27 = tpu.matmul %26, %25, %cst_26 {dimension_numbers = #tpu.dot_dimension_numbers<[1], [0], [0], [1], [0, 0, 1, 1], [], []>} : vector<2x16xf32>, vector<16x64xf32>, vector<2x64xf32> -> vector<2x64xf32>
    %c0_27 = arith.constant 0 : index
    %c0_28 = arith.constant 0 : index
    %28 = vector.load %arg10[%c0_27, %c0_28] : memref<64x64xf32, #tpu.memory_space<vmem>>, vector<64x64xf32>
    %cst_29 = arith.constant dense<0.000000e+00> : vector<2x64xf32>
    %29 = tpu.matmul %27, %28, %cst_29 {dimension_numbers = #tpu.dot_dimension_numbers<[1], [0], [0], [1], [0, 0, 1, 1], [], []>} : vector<2x64xf32>, vector<64x64xf32>, vector<2x64xf32> -> vector<2x64xf32>
    %c0_30 = arith.constant 0 : index
    %c0_31 = arith.constant 0 : index
    %30 = vector.load %arg11[%c0_30, %c0_31] : memref<1x64xf32, #tpu.memory_space<vmem>>, vector<1x64xf32>
    %31 = vector.broadcast %30 : vector<1x64xf32> to vector<2x64xf32>
    %32 = arith.addf %29, %31 : vector<2x64xf32>
    %cst_32 = arith.constant 0.000000e+00 : f32
    %33 = vector.broadcast %cst_32 : f32 to vector<2x64xf32>
    %34 = arith.maximumf %32, %33 : vector<2x64xf32>
    %c0_33 = arith.constant 0 : index
    %c0_34 = arith.constant 0 : index
    %35 = vector.load %arg12[%c0_33, %c0_34] : memref<64x10xf32, #tpu.memory_space<vmem>>, vector<64x10xf32>
    %cst_35 = arith.constant dense<0.000000e+00> : vector<2x10xf32>
    %36 = tpu.matmul %34, %35, %cst_35 {dimension_numbers = #tpu.dot_dimension_numbers<[1], [0], [0], [1], [0, 0, 1, 1], [], []>} : vector<2x64xf32>, vector<64x10xf32>, vector<2x10xf32> -> vector<2x10xf32>
    %c0_36 = arith.constant 0 : index
    %c0_37 = arith.constant 0 : index
    %37 = vector.load %arg13[%c0_36, %c0_37] : memref<1x10xf32, #tpu.memory_space<vmem>>, vector<1x10xf32>
    %38 = vector.broadcast %37 : vector<1x10xf32> to vector<2x10xf32>
    %39 = arith.addf %36, %38 : vector<2x10xf32>
    %c0_38 = arith.constant 0 : index
    %c0_39 = arith.constant 0 : index
    %40 = vector.load %arg14[%c0_38, %c0_39] : memref<2x10xf32, #tpu.memory_space<vmem>>, vector<2x10xf32>
    tpu.vector_store %arg14[%c0_38, %c0_39], %39 {strides = array<i32>} : memref<2x10xf32, #tpu.memory_space<vmem>>, vector<2x10xf32>,
    %c0_40 = arith.constant 0 : index
    %c0_41 = arith.constant 0 : index
    %41 = vector.load %arg15[%c0_40, %c0_41] : memref<2x64xf32, #tpu.memory_space<vmem>>, vector<2x64xf32>
    tpu.vector_store %arg15[%c0_40, %c0_41], %34 {strides = array<i32>} : memref<2x64xf32, #tpu.memory_space<vmem>>, vector<2x64xf32>,
    return
  }
}

</mosaic_0001>

<llo_original>
// kernel: _lambda_.1
$region0: #{_lambda_.1}
  #allocation0 [shape = 'u32[]', space=smem, size = 0x4, offset = 0x4, fixed_abs, tag = 'smem constant byte address 0x4 - core index']
  #allocation1 [shape = 'u32[144,128]{1,0:T(1,128)}', space=vmem, size = 0x12000, scoped, tag = 'internal scratch']
  %s0 = inlined_call_operand.vmem [shape: f32[36,4096], index: 0, kind: input, shape index: {}]
  %s1 = inlined_call_operand.vmem [shape: f32[16,36], index: 1, kind: input, shape index: {}]
  %s2 = inlined_call_operand.vmem [shape: f32[16,1], index: 2, kind: input, shape index: {}]
  %s3 = inlined_call_operand.vmem [shape: f32[16,4096], index: 3, kind: input, shape index: {}]
  %s4 = inlined_call_operand.vmem [shape: f32[16,32], index: 4, kind: input, shape index: {}]
  %s5 = inlined_call_operand.vmem [shape: f32[1,32], index: 5, kind: input, shape index: {}]
  %s6 = inlined_call_operand.vmem [shape: f32[16,16], index: 6, kind: input, shape index: {}]
  %s7 = inlined_call_operand.vmem [shape: f32[32,64], index: 7, kind: input, shape index: {}]
  %s8 = inlined_call_operand.vmem [shape: f32[1,64], index: 8, kind: input, shape index: {}]
  %s9 = inlined_call_operand.vmem [shape: f32[2,16], index: 9, kind: input, shape index: {}]
  %s10 = inlined_call_operand.vmem [shape: f32[64,64], index: 10, kind: input, shape index: {}]
  %s11 = inlined_call_operand.vmem [shape: f32[1,64], index: 11, kind: input, shape index: {}]
  %s12 = inlined_call_operand.vmem [shape: f32[64,10], index: 12, kind: input, shape index: {}]
  %s13 = inlined_call_operand.vmem [shape: f32[1,10], index: 13, kind: input, shape index: {}]
  %s14 = inlined_call_operand.hbm [shape: f32[2,10], index: 14, kind: output, shape index: {0}]
  %s15 = inlined_call_operand.hbm [shape: f32[2,64], index: 15, kind: output, shape index: {1}]
  %16 = xla_tuple %s14, %s15
  %s17 = sld [smem:[#allocation0]]
  $region74: #{_lambda_.1} parent=0
    _
  %s19 = ssub.s32 1, %s17
  %s20 = scalar_select 0, %s19, %s17
  $region1: #{_lambda_.1} parent=0
    #allocation2 [shape = 'u8[1024]{0}', space=vmem, size = 0x400, scoped, tag = 'output window, operand 0, single buffered']
    #allocation3 [shape = 's32[1]{0}', space=sflag, size = 0x4, scoped, tag = 'scoped memory for _lambda_.1']
    #allocation4 [shape = 'u8[1024]{0}', space=vmem, size = 0x400, scoped, tag = 'output window, operand 1, single buffered']
    #allocation5 [shape = 's32[1]{0}', space=sflag, size = 0x4, scoped, tag = 'scoped memory for _lambda_.1']
    %21 = vsyncpa [#allocation3], 0
    %22 = vsyncpa [#allocation5], 0
    // Predicated region
    $region2: #{_lambda_.1} parent=1 // pred_check
      _
    $region3: #{_lambda_.1} parent=1 // pred_check_branch
      %24 = sbr.rel (0) target = $region5
    $region4: #{_lambda_.1} parent=1 // pred_region
      _
    $region5: #{_lambda_.1} parent=1 // pred_fallthru
      _
    // Predicated region
    $region6: #{_lambda_.1} parent=1 // pred_check
      _
    $region7: #{_lambda_.1} parent=1 // pred_check_branch
      %26 = sbr.rel (0) target = $region9
    $region8: #{_lambda_.1} parent=1 // pred_region
      _
    $region9: #{_lambda_.1} parent=1 // pred_fallthru
      _
    // Predicated region
    $region10: #{_lambda_.1} parent=1 // pred_check
      _
    $region11: #{_lambda_.1} parent=1 // pred_check_branch
      %28 = sbr.rel (0) target = $region13
    $region12: #{_lambda_.1} parent=1 // pred_region
      _
    $region13: #{_lambda_.1} parent=1 // pred_fallthru
      _
    // Predicated region
    $region14: #{_lambda_.1} parent=1 // pred_check
      _
    $region15: #{_lambda_.1} parent=1 // pred_check_branch
      %30 = sbr.rel (0) target = $region17
    $region16: #{_lambda_.1} parent=1 // pred_region
      _
    $region17: #{_lambda_.1} parent=1 // pred_fallthru
      _
    // Predicated region
    $region18: #{_lambda_.1} parent=1 // pred_check
      _
    $region19: #{_lambda_.1} parent=1 // pred_check_branch
      %32 = sbr.rel (0) target = $region21
    $region20: #{_lambda_.1} parent=1 // pred_region
      _
    $region21: #{_lambda_.1} parent=1 // pred_fallthru
      _
    // Predicated region
    $region22: #{_lambda_.1} parent=1 // pred_check
      _
    $region23: #{_lambda_.1} parent=1 // pred_check_branch
      %34 = sbr.rel (0) target = $region25
    $region24: #{_lambda_.1} parent=1 // pred_region
      _
    $region25: #{_lambda_.1} parent=1 // pred_fallthru
      _
    // Predicated region
    $region26: #{_lambda_.1} parent=1 // pred_check
      _
    $region27: #{_lambda_.1} parent=1 // pred_check_branch
      %36 = sbr.rel (0) target = $region29
    $region28: #{_lambda_.1} parent=1 // pred_region
      _
    $region29: #{_lambda_.1} parent=1 // pred_fallthru
      _
    // Predicated region
    $region30: #{_lambda_.1} parent=1 // pred_check
      _
    $region31: #{_lambda_.1} parent=1 // pred_check_branch
      %38 = sbr.rel (0) target = $region33
    $region32: #{_lambda_.1} parent=1 // pred_region
      _
    $region33: #{_lambda_.1} parent=1 // pred_fallthru
      _
    // Predicated region
    $region34: #{_lambda_.1} parent=1 // pred_check
      _
    $region35: #{_lambda_.1} parent=1 // pred_check_branch
      %40 = sbr.rel (0) target = $region37
    $region36: #{_lambda_.1} parent=1 // pred_region
      _
    $region37: #{_lambda_.1} parent=1 // pred_fallthru
      _
    // Predicated region
    $region38: #{_lambda_.1} parent=1 // pred_check
      _
    $region39: #{_lambda_.1} parent=1 // pred_check_branch
      %42 = sbr.rel (0) target = $region41
    $region40: #{_lambda_.1} parent=1 // pred_region
      _
    $region41: #{_lambda_.1} parent=1 // pred_fallthru
      _
    // Predicated region
    $region42: #{_lambda_.1} parent=1 // pred_check
      _
    $region43: #{_lambda_.1} parent=1 // pred_check_branch
      %44 = sbr.rel (0) target = $region45
    $region44: #{_lambda_.1} parent=1 // pred_region
      _
    $region45: #{_lambda_.1} parent=1 // pred_fallthru
      _
    // Predicated region
    $region46: #{_lambda_.1} parent=1 // pred_check
      _
    $region47: #{_lambda_.1} parent=1 // pred_check_branch
      %46 = sbr.rel (0) target = $region49
    $region48: #{_lambda_.1} parent=1 // pred_region
      _
    $region49: #{_lambda_.1} parent=1 // pred_fallthru
      _
    // Predicated region
    $region50: #{_lambda_.1} parent=1 // pred_check
      _
    $region51: #{_lambda_.1} parent=1 // pred_check_branch
      %48 = sbr.rel (0) target = $region53
    $region52: #{_lambda_.1} parent=1 // pred_region
      _
    $region53: #{_lambda_.1} parent=1 // pred_fallthru
      _
    // Predicated region
    $region54: #{_lambda_.1} parent=1 // pred_check
      _
    $region55: #{_lambda_.1} parent=1 // pred_check_branch
      %50 = sbr.rel (0) target = $region57
    $region56: #{_lambda_.1} parent=1 // pred_region
      _
    $region57: #{_lambda_.1} parent=1 // pred_fallthru
      _
    %v51 = vld [vmem:[%s1] sm:$0xff]
    %v52 = vld [vmem:[%s1 + $0x8] sm:$0xff]
    %v53 = vld [vmem:[%s0] sm:$0xff]
    %v54 = vld [vmem:[%s0 + $0x8] sm:$0xff]
    %v55 = vld [vmem:[%s0 + $0x10] sm:$0xff]
    %v56 = vld [vmem:[%s0 + $0x18] sm:$0xff]
    %v57 = vld [vmem:[%s0 + $0x20] sm:$0xff]
    %v58 = vld [vmem:[%s0 + $0x28] sm:$0xff]
    %v59 = vld [vmem:[%s0 + $0x30] sm:$0xff]
    %v60 = vld [vmem:[%s0 + $0x38] sm:$0xff]
    %v61 = vld [vmem:[%s0 + $0x40] sm:$0xff]
    %v62 = vld [vmem:[%s0 + $0x48] sm:$0xff]
    %v63 = vld [vmem:[%s0 + $0x50] sm:$0xff]
    %v64 = vld [vmem:[%s0 + $0x58] sm:$0xff]
    %v65 = vld [vmem:[%s0 + $0x60] sm:$0xff]
    %v66 = vld [vmem:[%s0 + $0x68] sm:$0xff]
    %v67 = vld [vmem:[%s0 + $0x70] sm:$0xff]
    %v68 = vld [vmem:[%s0 + $0x78] sm:$0xff]
    %v69 = vld [vmem:[%s0 + $0x80] sm:$0xff]
    %v70 = vld [vmem:[%s0 + $0x88] sm:$0xff]
    %v71 = vld [vmem:[%s0 + $0x90] sm:$0xff]
    %v72 = vld [vmem:[%s0 + $0x98] sm:$0xff]
    %v73 = vld [vmem:[%s0 + $0xa0] sm:$0xff]
    %v74 = vld [vmem:[%s0 + $0xa8] sm:$0xff]
    %v75 = vld [vmem:[%s0 + $0xb0] sm:$0xff]
    %v76 = vld [vmem:[%s0 + $0xb8] sm:$0xff]
    %v77 = vld [vmem:[%s0 + $0xc0] sm:$0xff]
    %v78 = vld [vmem:[%s0 + $0xc8] sm:$0xff]
    %v79 = vld [vmem:[%s0 + $0xd0] sm:$0xff]
    %v80 = vld [vmem:[%s0 + $0xd8] sm:$0xff]
    %v81 = vld [vmem:[%s0 + $0xe0] sm:$0xff]
    %v82 = vld [vmem:[%s0 + $0xe8] sm:$0xff]
    %v83 = vld [vmem:[%s0 + $0xf0] sm:$0xff]
    %v84 = vld [vmem:[%s0 + $0xf8] sm:$0xff]
    %v85 = vld [vmem:[%s0 + $0x100] sm:$0xff]
    %v86 = vld [vmem:[%s0 + $0x108] sm:$0xff]
    %v87 = vld [vmem:[%s0 + $0x110] sm:$0xff]
    %v88 = vld [vmem:[%s0 + $0x118] sm:$0xff]
    %v89 = vld [vmem:[%s0 + $0x120] sm:$0xff]
    %v90 = vld [vmem:[%s0 + $0x128] sm:$0xff]
    %v91 = vld [vmem:[%s0 + $0x130] sm:$0xff]
    %v92 = vld [vmem:[%s0 + $0x138] sm:$0xff]
    %v93 = vld [vmem:[%s0 + $0x140] sm:$0xff]
    %v94 = vld [vmem:[%s0 + $0x148] sm:$0xff]
    %v95 = vld [vmem:[%s0 + $0x150] sm:$0xff]
    %v96 = vld [vmem:[%s0 + $0x158] sm:$0xff]
    %v97 = vld [vmem:[%s0 + $0x160] sm:$0xff]
    %v98 = vld [vmem:[%s0 + $0x168] sm:$0xff]
    %v99 = vld [vmem:[%s0 + $0x170] sm:$0xff]
    %v100 = vld [vmem:[%s0 + $0x178] sm:$0xff]
    %v101 = vld [vmem:[%s0 + $0x180] sm:$0xff]
    %v102 = vld [vmem:[%s0 + $0x188] sm:$0xff]
    %v103 = vld [vmem:[%s0 + $0x190] sm:$0xff]
    %v104 = vld [vmem:[%s0 + $0x198] sm:$0xff]
    %v105 = vld [vmem:[%s0 + $0x1a0] sm:$0xff]
    %v106 = vld [vmem:[%s0 + $0x1a8] sm:$0xff]
    %v107 = vld [vmem:[%s0 + $0x1b0] sm:$0xff]
    %v108 = vld [vmem:[%s0 + $0x1b8] sm:$0xff]
    %v109 = vld [vmem:[%s0 + $0x1c0] sm:$0xff]
    %v110 = vld [vmem:[%s0 + $0x1c8] sm:$0xff]
    %v111 = vld [vmem:[%s0 + $0x1d0] sm:$0xff]
    %v112 = vld [vmem:[%s0 + $0x1d8] sm:$0xff]
    %v113 = vld [vmem:[%s0 + $0x1e0] sm:$0xff]
    %v114 = vld [vmem:[%s0 + $0x1e8] sm:$0xff]
    %v115 = vld [vmem:[%s0 + $0x1f0] sm:$0xff]
    %v116 = vld [vmem:[%s0 + $0x1f8] sm:$0xff]
    %v117 = vld [vmem:[%s0 + $0x200] sm:$0xff]
    %v118 = vld [vmem:[%s0 + $0x208] sm:$0xff]
    %v119 = vld [vmem:[%s0 + $0x210] sm:$0xff]
    %v120 = vld [vmem:[%s0 + $0x218] sm:$0xff]
    %v121 = vld [vmem:[%s0 + $0x220] sm:$0xff]
    %v122 = vld [vmem:[%s0 + $0x228] sm:$0xff]
    %v123 = vld [vmem:[%s0 + $0x230] sm:$0xff]
    %v124 = vld [vmem:[%s0 + $0x238] sm:$0xff]
    %v125 = vld [vmem:[%s0 + $0x240] sm:$0xff]
    %v126 = vld [vmem:[%s0 + $0x248] sm:$0xff]
    %v127 = vld [vmem:[%s0 + $0x250] sm:$0xff]
    %v128 = vld [vmem:[%s0 + $0x258] sm:$0xff]
    %v129 = vld [vmem:[%s0 + $0x260] sm:$0xff]
    %v130 = vld [vmem:[%s0 + $0x268] sm:$0xff]
    %v131 = vld [vmem:[%s0 + $0x270] sm:$0xff]
    %v132 = vld [vmem:[%s0 + $0x278] sm:$0xff]
    %v133 = vld [vmem:[%s0 + $0x280] sm:$0xff]
    %v134 = vld [vmem:[%s0 + $0x288] sm:$0xff]
    %v135 = vld [vmem:[%s0 + $0x290] sm:$0xff]
    %v136 = vld [vmem:[%s0 + $0x298] sm:$0xff]
    %v137 = vld [vmem:[%s0 + $0x2a0] sm:$0xff]
    %v138 = vld [vmem:[%s0 + $0x2a8] sm:$0xff]
    %v139 = vld [vmem:[%s0 + $0x2b0] sm:$0xff]
    %v140 = vld [vmem:[%s0 + $0x2b8] sm:$0xff]
    %v141 = vld [vmem:[%s0 + $0x2c0] sm:$0xff]
    %v142 = vld [vmem:[%s0 + $0x2c8] sm:$0xff]
    %v143 = vld [vmem:[%s0 + $0x2d0] sm:$0xff]
    %v144 = vld [vmem:[%s0 + $0x2d8] sm:$0xff]
    %v145 = vld [vmem:[%s0 + $0x2e0] sm:$0xff]
    %v146 = vld [vmem:[%s0 + $0x2e8] sm:$0xff]
    %v147 = vld [vmem:[%s0 + $0x2f0] sm:$0xff]
    %v148 = vld [vmem:[%s0 + $0x2f8] sm:$0xff]
    %v149 = vld [vmem:[%s0 + $0x300] sm:$0xff]
    %v150 = vld [vmem:[%s0 + $0x308] sm:$0xff]
    %v151 = vld [vmem:[%s0 + $0x310] sm:$0xff]
    %v152 = vld [vmem:[%s0 + $0x318] sm:$0xff]
    %v153 = vld [vmem:[%s0 + $0x320] sm:$0xff]
    %v154 = vld [vmem:[%s0 + $0x328] sm:$0xff]
    %v155 = vld [vmem:[%s0 + $0x330] sm:$0xff]
    %v156 = vld [vmem:[%s0 + $0x338] sm:$0xff]
    %v157 = vld [vmem:[%s0 + $0x340] sm:$0xff]
    %v158 = vld [vmem:[%s0 + $0x348] sm:$0xff]
    %v159 = vld [vmem:[%s0 + $0x350] sm:$0xff]
    %v160 = vld [vmem:[%s0 + $0x358] sm:$0xff]
    %v161 = vld [vmem:[%s0 + $0x360] sm:$0xff]
    %v162 = vld [vmem:[%s0 + $0x368] sm:$0xff]
    %v163 = vld [vmem:[%s0 + $0x370] sm:$0xff]
    %v164 = vld [vmem:[%s0 + $0x378] sm:$0xff]
    %v165 = vld [vmem:[%s0 + $0x380] sm:$0xff]
    %v166 = vld [vmem:[%s0 + $0x388] sm:$0xff]
    %v167 = vld [vmem:[%s0 + $0x390] sm:$0xff]
    %v168 = vld [vmem:[%s0 + $0x398] sm:$0xff]
    %v169 = vld [vmem:[%s0 + $0x3a0] sm:$0xff]
    %v170 = vld [vmem:[%s0 + $0x3a8] sm:$0xff]
    %v171 = vld [vmem:[%s0 + $0x3b0] sm:$0xff]
    %v172 = vld [vmem:[%s0 + $0x3b8] sm:$0xff]
    %v173 = vld [vmem:[%s0 + $0x3c0] sm:$0xff]
    %v174 = vld [vmem:[%s0 + $0x3c8] sm:$0xff]
    %v175 = vld [vmem:[%s0 + $0x3d0] sm:$0xff]
    %v176 = vld [vmem:[%s0 + $0x3d8] sm:$0xff]
    %v177 = vld [vmem:[%s0 + $0x3e0] sm:$0xff]
    %v178 = vld [vmem:[%s0 + $0x3e8] sm:$0xff]
    %v179 = vld [vmem:[%s0 + $0x3f0] sm:$0xff]
    %v180 = vld [vmem:[%s0 + $0x3f8] sm:$0xff]
    %v181 = vld [vmem:[%s0 + $0x400] sm:$0xf]
    %v182 = vld [vmem:[%s0 + $0x408] sm:$0xf]
    %v183 = vld [vmem:[%s0 + $0x410] sm:$0xf]
    %v184 = vld [vmem:[%s0 + $0x418] sm:$0xf]
    %v185 = vld [vmem:[%s0 + $0x420] sm:$0xf]
    %v186 = vld [vmem:[%s0 + $0x428] sm:$0xf]
    %v187 = vld [vmem:[%s0 + $0x430] sm:$0xf]
    %v188 = vld [vmem:[%s0 + $0x438] sm:$0xf]
    %v189 = vld [vmem:[%s0 + $0x440] sm:$0xf]
    %v190 = vld [vmem:[%s0 + $0x448] sm:$0xf]
    %v191 = vld [vmem:[%s0 + $0x450] sm:$0xf]
    %v192 = vld [vmem:[%s0 + $0x458] sm:$0xf]
    %v193 = vld [vmem:[%s0 + $0x460] sm:$0xf]
    %v194 = vld [vmem:[%s0 + $0x468] sm:$0xf]
    %v195 = vld [vmem:[%s0 + $0x470] sm:$0xf]
    %v196 = vld [vmem:[%s0 + $0x478] sm:$0xf]
    %v197 = vld [vmem:[%s0 + $0x480] sm:$0xf]
    %v198 = vld [vmem:[%s0 + $0x488] sm:$0xf]
    %v199 = vld [vmem:[%s0 + $0x490] sm:$0xf]
    %v200 = vld [vmem:[%s0 + $0x498] sm:$0xf]
    %v201 = vld [vmem:[%s0 + $0x4a0] sm:$0xf]
    %v202 = vld [vmem:[%s0 + $0x4a8] sm:$0xf]
    %v203 = vld [vmem:[%s0 + $0x4b0] sm:$0xf]
    %v204 = vld [vmem:[%s0 + $0x4b8] sm:$0xf]
    %v205 = vld [vmem:[%s0 + $0x4c0] sm:$0xf]
    %v206 = vld [vmem:[%s0 + $0x4c8] sm:$0xf]
    %v207 = vld [vmem:[%s0 + $0x4d0] sm:$0xf]
    %v208 = vld [vmem:[%s0 + $0x4d8] sm:$0xf]
    %v209 = vld [vmem:[%s0 + $0x4e0] sm:$0xf]
    %v210 = vld [vmem:[%s0 + $0x4e8] sm:$0xf]
    %v211 = vld [vmem:[%s0 + $0x4f0] sm:$0xf]
    %v212 = vld [vmem:[%s0 + $0x4f8] sm:$0xf]
    %v213 = vld [vmem:[%s2] sm:$0xff]
    %v214 = vld [vmem:[%s2 + $0x8] sm:$0xff]
    %216 = vset.pattern.permute.xlu0 0
    %217 = vperm.xlu0 %216, %v213
    %v218 = vpop.permute.xlu0 %217
    %221 = vset.pattern.permute.xlu0 0
    %222 = vperm.xlu0 %221, %v214
    %v223 = vpop.permute.xlu0 %222
    %vm225 = vcmask 293888
    %v227 = vsel %vm225, %v51, 0
    %v230 = vsel %vm225, %v52, 0
    %vm232 = vcmask 1043456
    %v234 = vsel %vm232, %v181, 0
    %v237 = vsel %vm232, %v182, 0
    %v240 = vsel %vm232, %v183, 0
    %v243 = vsel %vm232, %v184, 0
    %v246 = vsel %vm232, %v185, 0
    %v249 = vsel %vm232, %v186, 0
    %v252 = vsel %vm232, %v187, 0
    %v255 = vsel %vm232, %v188, 0
    %v258 = vsel %vm232, %v189, 0
    %v261 = vsel %vm232, %v190, 0
    %v264 = vsel %vm232, %v191, 0
    %v267 = vsel %vm232, %v192, 0
    %v270 = vsel %vm232, %v193, 0
    %v273 = vsel %vm232, %v194, 0
    %v276 = vsel %vm232, %v195, 0
    %v279 = vsel %vm232, %v196, 0
    %v282 = vsel %vm232, %v197, 0
    %v285 = vsel %vm232, %v198, 0
    %v288 = vsel %vm232, %v199, 0
    %v291 = vsel %vm232, %v200, 0
    %v294 = vsel %vm232, %v201, 0
    %v297 = vsel %vm232, %v202, 0
    %v300 = vsel %vm232, %v203, 0
    %v303 = vsel %vm232, %v204, 0
    %v306 = vsel %vm232, %v205, 0
    %v309 = vsel %vm232, %v206, 0
    %v312 = vsel %vm232, %v207, 0
    %v315 = vsel %vm232, %v208, 0
    %v318 = vsel %vm232, %v209, 0
    %v321 = vsel %vm232, %v210, 0
    %v324 = vsel %vm232, %v211, 0
    %v327 = vsel %vm232, %v212, 0
    %329 = vmatprep.subr.mxu0 0.0
    %330 = vmatpush1.msra.mxu0 0.0
    %331 = vmatprep.subr.mxu0 0.0
    %332 = vmatpush1.msra.mxu0 0.0
    %333 = vmatprep.subr.mxu0 0.0
    %334 = vmatpush1.msra.mxu0 0.0
    %335 = vmatprep.subr.mxu0 0.0
    %336 = vmatpush1.msra.mxu0 0.0
    %337 = vmatprep.subr.mxu0 0.0
    %338 = vmatpush1.msra.mxu0 0.0
    %339 = vmatprep.subr.mxu0 0.0
    %340 = vmatpush1.msra.mxu0 0.0
    %341 = vmatprep.subr.mxu0 0.0
    %342 = vmatpush1.msra.mxu0 0.0
    %343 = vmatprep.subr.mxu0 0.0
    %344 = vmatpush1.msra.mxu0 0.0
    %345 = vmatprep.subr.mxu0 0.0
    %346 = vmatpush1.msra.mxu0 0.0
    %347 = vmatprep.subr.mxu0 0.0
    %348 = vmatpush1.msra.mxu0 0.0
    %349 = vmatprep.subr.mxu0 0.0
    %350 = vmatpush1.msra.mxu0 0.0
    %351 = vmatprep.subr.mxu0 %v237
    %352 = vmatpush1.msra.mxu0 %v234
    %353 = vmatprep.subr.mxu0 %v150
    %354 = vmatpush1.msra.mxu0 %v149
    %355 = vmatprep.subr.mxu0 %v118
    %356 = vmatpush1.msra.mxu0 %v117
    %357 = vmatprep.subr.mxu0 %v86
    %358 = vmatpush1.msra.mxu0 %v85
    %359 = vmatprep.subr.mxu0 %v54
    %360 = vmatpush1.msra.mxu0 %v53
    %361 = vmatprep.subr.mxu0 0.0
    %362 = vmatpush2.msra.mxu0 0.0
    %363 = vmatprep.subr.mxu0 0.0
    %364 = vmatpush2.msra.mxu0 0.0
    %365 = vmatprep.subr.mxu0 0.0
    %366 = vmatpush2.msra.mxu0 0.0
    %367 = vmatprep.subr.mxu0 0.0
    %368 = vmatpush2.msra.mxu0 0.0
    %369 = vmatprep.subr.mxu0 0.0
    %370 = vmatpush2.msra.mxu0 0.0
    %371 = vmatprep.subr.mxu0 0.0
    %372 = vmatpush2.msra.mxu0 0.0
    %373 = vmatprep.subr.mxu0 0.0
    %374 = vmatpush2.msra.mxu0 0.0
    %375 = vmatprep.subr.mxu0 0.0
    %376 = vmatpush2.msra.mxu0 0.0
    %377 = vmatprep.subr.mxu0 0.0
    %378 = vmatpush2.msra.mxu0 0.0
    %379 = vmatprep.subr.mxu0 0.0
    %380 = vmatpush2.msra.mxu0 0.0
    %381 = vmatprep.subr.mxu0 0.0
    %382 = vmatpush2.msra.mxu0 0.0
    %383 = vmatprep.subr.mxu0 0.0
    %384 = vmatpush2.msra.mxu0 0.0
    %385 = vmatprep.subr.mxu0 0.0
    %386 = vmatpush2.msra.mxu0 0.0
    %387 = vmatprep.subr.mxu0 0.0
    %388 = vmatpush2.msra.mxu0 0.0
    %389 = vmatprep.subr.mxu0 0.0
    %390 = vmatpush2.msra.mxu0 0.0
    %391 = vmatprep.subr.mxu0 0.0
    %392 = vmatpush2.msra.mxu0 0.0
    %393 = vmatprep.mubr.f32.mxu0 0.0
    %394 = vmatmul.mubr.f32.gmra.mxu0 %v227
    %v395 = vpop.f32.mrf.mxu0
    %v396 = vadd.f32 %v218, %v395
    %v397 = vpop.f32.mrf.mxu0
    %v398 = vadd.f32 %v218, %v397
    %399 = vmatprep.mubr.f32.mxu0 0.0
    %400 = vmatmul.mubr.f32.gmra.mxu0 %v230
    %v401 = vpop.f32.mrf.mxu0
    %v402 = vadd.f32 %v223, %v401
    %v403 = vpop.f32.mrf.mxu0
    %v404 = vadd.f32 %v223, %v403
    %405 = vdwg.mxu0
    %406 = vmatprep.subr.mxu0 0.0
    %407 = vmatpush1.msra.mxu0 0.0
    %408 = vmatprep.subr.mxu0 0.0
    %409 = vmatpush1.msra.mxu0 0.0
    %410 = vmatprep.subr.mxu0 0.0
    %411 = vmatpush1.msra.mxu0 0.0
    %412 = vmatprep.subr.mxu0 0.0
    %413 = vmatpush1.msra.mxu0 0.0
    %414 = vmatprep.subr.mxu0 0.0
    %415 = vmatpush1.msra.mxu0 0.0
    %416 = vmatprep.subr.mxu0 0.0
    %417 = vmatpush1.msra.mxu0 0.0
    %418 = vmatprep.subr.mxu0 0.0
    %419 = vmatpush1.msra.mxu0 0.0
    %420 = vmatprep.subr.mxu0 0.0
    %421 = vmatpush1.msra.mxu0 0.0
    %422 = vmatprep.subr.mxu0 0.0
    %423 = vmatpush1.msra.mxu0 0.0
    %424 = vmatprep.subr.mxu0 0.0
    %425 = vmatpush1.msra.mxu0 0.0
    %426 = vmatprep.subr.mxu0 0.0
    %427 = vmatpush1.msra.mxu0 0.0
    %428 = vmatprep.subr.mxu0 %v243
    %429 = vmatpush1.msra.mxu0 %v240
    %430 = vmatprep.subr.mxu0 %v152
    %431 = vmatpush1.msra.mxu0 %v151
    %432 = vmatprep.subr.mxu0 %v120
    %433 = vmatpush1.msra.mxu0 %v119
    %434 = vmatprep.subr.mxu0 %v88
    %435 = vmatpush1.msra.mxu0 %v87
    %436 = vmatprep.subr.mxu0 %v56
    %437 = vmatpush1.msra.mxu0 %v55
    %438 = vmatprep.subr.mxu0 0.0
    %439 = vmatpush2.msra.mxu0 0.0
    %440 = vmatprep.subr.mxu0 0.0
    %441 = vmatpush2.msra.mxu0 0.0
    %442 = vmatprep.subr.mxu0 0.0
    %443 = vmatpush2.msra.mxu0 0.0
    %444 = vmatprep.subr.mxu0 0.0
    %445 = vmatpush2.msra.mxu0 0.0
    %446 = vmatprep.subr.mxu0 0.0
    %447 = vmatpush2.msra.mxu0 0.0
    %448 = vmatprep.subr.mxu0 0.0
    %449 = vmatpush2.msra.mxu0 0.0
    %450 = vmatprep.subr.mxu0 0.0
    %451 = vmatpush2.msra.mxu0 0.0
    %452 = vmatprep.subr.mxu0 0.0
    %453 = vmatpush2.msra.mxu0 0.0
    %454 = vmatprep.subr.mxu0 0.0
    %455 = vmatpush2.msra.mxu0 0.0
    %456 = vmatprep.subr.mxu0 0.0
    %457 = vmatpush2.msra.mxu0 0.0
    %458 = vmatprep.subr.mxu0 0.0
    %459 = vmatpush2.msra.mxu0 0.0
    %460 = vmatprep.subr.mxu0 0.0
    %461 = vmatpush2.msra.mxu0 0.0
    %462 = vmatprep.subr.mxu0 0.0
    %463 = vmatpush2.msra.mxu0 0.0
    %464 = vmatprep.subr.mxu0 0.0
    %465 = vmatpush2.msra.mxu0 0.0
    %466 = vmatprep.subr.mxu0 0.0
    %467 = vmatpush2.msra.mxu0 0.0
    %468 = vmatprep.subr.mxu0 0.0
    %469 = vmatpush2.msra.mxu0 0.0
    %470 = vmatprep.mubr.f32.mxu0 0.0
    %471 = vmatmul.mubr.f32.gmra.mxu0 %v227
    %v472 = vpop.f32.mrf.mxu0
    %v473 = vadd.f32 %v218, %v472
    %v474 = vpop.f32.mrf.mxu0
    %v475 = vadd.f32 %v218, %v474
    %476 = vmatprep.mubr.f32.mxu0 0.0
    %477 = vmatmul.mubr.f32.gmra.mxu0 %v230
    %v478 = vpop.f32.mrf.mxu0
    %v479 = vadd.f32 %v223, %v478
    %v480 = vpop.f32.mrf.mxu0
    %v481 = vadd.f32 %v223, %v480
    %482 = vdwg.mxu0
    %483 = vmatprep.subr.mxu0 0.0
    %484 = vmatpush1.msra.mxu0 0.0
    %485 = vmatprep.subr.mxu0 0.0
    %486 = vmatpush1.msra.mxu0 0.0
    %487 = vmatprep.subr.mxu0 0.0
    %488 = vmatpush1.msra.mxu0 0.0
    %489 = vmatprep.subr.mxu0 0.0
    %490 = vmatpush1.msra.mxu0 0.0
    %491 = vmatprep.subr.mxu0 0.0
    %492 = vmatpush1.msra.mxu0 0.0
    %493 = vmatprep.subr.mxu0 0.0
    %494 = vmatpush1.msra.mxu0 0.0
    %495 = vmatprep.subr.mxu0 0.0
    %496 = vmatpush1.msra.mxu0 0.0
    %497 = vmatprep.subr.mxu0 0.0
    %498 = vmatpush1.msra.mxu0 0.0
    %499 = vmatprep.subr.mxu0 0.0
    %500 = vmatpush1.msra.mxu0 0.0
    %501 = vmatprep.subr.mxu0 0.0
    %502 = vmatpush1.msra.mxu0 0.0
    %503 = vmatprep.subr.mxu0 0.0
    %504 = vmatpush1.msra.mxu0 0.0
    %505 = vmatprep.subr.mxu0 %v249
    %506 = vmatpush1.msra.mxu0 %v246
    %507 = vmatprep.subr.mxu0 %v154
    %508 = vmatpush1.msra.mxu0 %v153
    %509 = vmatprep.subr.mxu0 %v122
    %510 = vmatpush1.msra.mxu0 %v121
    %511 = vmatprep.subr.mxu0 %v90
    %512 = vmatpush1.msra.mxu0 %v89
    %513 = vmatprep.subr.mxu0 %v58
    %514 = vmatpush1.msra.mxu0 %v57
    %515 = vmatprep.subr.mxu0 0.0
    %516 = vmatpush2.msra.mxu0 0.0
    %517 = vmatprep.subr.mxu0 0.0
    %518 = vmatpush2.msra.mxu0 0.0
    %519 = vmatprep.subr.mxu0 0.0
    %520 = vmatpush2.msra.mxu0 0.0
    %521 = vmatprep.subr.mxu0 0.0
    %522 = vmatpush2.msra.mxu0 0.0
    %523 = vmatprep.subr.mxu0 0.0
    %524 = vmatpush2.msra.mxu0 0.0
    %525 = vmatprep.subr.mxu0 0.0
    %526 = vmatpush2.msra.mxu0 0.0
    %527 = vmatprep.subr.mxu0 0.0
    %528 = vmatpush2.msra.mxu0 0.0
    %529 = vmatprep.subr.mxu0 0.0
    %530 = vmatpush2.msra.mxu0 0.0
    %531 = vmatprep.subr.mxu0 0.0
    %532 = vmatpush2.msra.mxu0 0.0
    %533 = vmatprep.subr.mxu0 0.0
    %534 = vmatpush2.msra.mxu0 0.0
    %535 = vmatprep.subr.mxu0 0.0
    %536 = vmatpush2.msra.mxu0 0.0
    %537 = vmatprep.subr.mxu0 0.0
    %538 = vmatpush2.msra.mxu0 0.0
    %539 = vmatprep.subr.mxu0 0.0
    %540 = vmatpush2.msra.mxu0 0.0
    %541 = vmatprep.subr.mxu0 0.0
    %542 = vmatpush2.msra.mxu0 0.0
    %543 = vmatprep.subr.mxu0 0.0
    %544 = vmatpush2.msra.mxu0 0.0
    %545 = vmatprep.subr.mxu0 0.0
    %546 = vmatpush2.msra.mxu0 0.0
    %547 = vmatprep.mubr.f32.mxu0 0.0
    %548 = vmatmul.mubr.f32.gmra.mxu0 %v227
    %v549 = vpop.f32.mrf.mxu0
    %v550 = vadd.f32 %v218, %v549
    %v551 = vpop.f32.mrf.mxu0
    %v552 = vadd.f32 %v218, %v551
    %553 = vmatprep.mubr.f32.mxu0 0.0
    %554 = vmatmul.mubr.f32.gmra.mxu0 %v230
    %v555 = vpop.f32.mrf.mxu0
    %v556 = vadd.f32 %v223, %v555
    %v557 = vpop.f32.mrf.mxu0
    %v558 = vadd.f32 %v223, %v557
    %559 = vdwg.mxu0
    %560 = vmatprep.subr.mxu0 0.0
    %561 = vmatpush1.msra.mxu0 0.0
    %562 = vmatprep.subr.mxu0 0.0
    %563 = vmatpush1.msra.mxu0 0.0
    %564 = vmatprep.subr.mxu0 0.0
    %565 = vmatpush1.msra.mxu0 0.0
    %566 = vmatprep.subr.mxu0 0.0
    %567 = vmatpush1.msra.mxu0 0.0
    %568 = vmatprep.subr.mxu0 0.0
    %569 = vmatpush1.msra.mxu0 0.0
    %570 = vmatprep.subr.mxu0 0.0
    %571 = vmatpush1.msra.mxu0 0.0
    %572 = vmatprep.subr.mxu0 0.0
    %573 = vmatpush1.msra.mxu0 0.0
    %574 = vmatprep.subr.mxu0 0.0
    %575 = vmatpush1.msra.mxu0 0.0
    %576 = vmatprep.subr.mxu0 0.0
    %577 = vmatpush1.msra.mxu0 0.0
    %578 = vmatprep.subr.mxu0 0.0
    %579 = vmatpush1.msra.mxu0 0.0
    %580 = vmatprep.subr.mxu0 0.0
    %581 = vmatpush1.msra.mxu0 0.0
    %582 = vmatprep.subr.mxu0 %v255
    %583 = vmatpush1.msra.mxu0 %v252
    %584 = vmatprep.subr.mxu0 %v156
    %585 = vmatpush1.msra.mxu0 %v155
    %586 = vmatprep.subr.mxu0 %v124
    %587 = vmatpush1.msra.mxu0 %v123
    %588 = vmatprep.subr.mxu0 %v92
    %589 = vmatpush1.msra.mxu0 %v91
    %590 = vmatprep.subr.mxu0 %v60
    %591 = vmatpush1.msra.mxu0 %v59
    %592 = vmatprep.subr.mxu0 0.0
    %593 = vmatpush2.msra.mxu0 0.0
    %594 = vmatprep.subr.mxu0 0.0
    %595 = vmatpush2.msra.mxu0 0.0
    %596 = vmatprep.subr.mxu0 0.0
    %597 = vmatpush2.msra.mxu0 0.0
    %598 = vmatprep.subr.mxu0 0.0
    %599 = vmatpush2.msra.mxu0 0.0
    %600 = vmatprep.subr.mxu0 0.0
    %601 = vmatpush2.msra.mxu0 0.0
    %602 = vmatprep.subr.mxu0 0.0
    %603 = vmatpush2.msra.mxu0 0.0
    %604 = vmatprep.subr.mxu0 0.0
    %605 = vmatpush2.msra.mxu0 0.0
    %606 = vmatprep.subr.mxu0 0.0
    %607 = vmatpush2.msra.mxu0 0.0
    %608 = vmatprep.subr.mxu0 0.0
    %609 = vmatpush2.msra.mxu0 0.0
    %610 = vmatprep.subr.mxu0 0.0
    %611 = vmatpush2.msra.mxu0 0.0
    %612 = vmatprep.subr.mxu0 0.0
    %613 = vmatpush2.msra.mxu0 0.0
    %614 = vmatprep.subr.mxu0 0.0
    %615 = vmatpush2.msra.mxu0 0.0
    %616 = vmatprep.subr.mxu0 0.0
    %617 = vmatpush2.msra.mxu0 0.0
    %618 = vmatprep.subr.mxu0 0.0
    %619 = vmatpush2.msra.mxu0 0.0
    %620 = vmatprep.subr.mxu0 0.0
    %621 = vmatpush2.msra.mxu0 0.0
    %622 = vmatprep.subr.mxu0 0.0
    %623 = vmatpush2.msra.mxu0 0.0
    %624 = vmatprep.mubr.f32.mxu0 0.0
    %625 = vmatmul.mubr.f32.gmra.mxu0 %v227
    %v626 = vpop.f32.mrf.mxu0
    %v627 = vadd.f32 %v218, %v626
    %v628 = vpop.f32.mrf.mxu0
    %v629 = vadd.f32 %v218, %v628
    %630 = vmatprep.mubr.f32.mxu0 0.0
    %631 = vmatmul.mubr.f32.gmra.mxu0 %v230
    %v632 = vpop.f32.mrf.mxu0
    %v633 = vadd.f32 %v223, %v632
    %v634 = vpop.f32.mrf.mxu0
    %v635 = vadd.f32 %v223, %v634
    %636 = vdwg.mxu0
    %637 = vmatprep.subr.mxu0 0.0
    %638 = vmatpush1.msra.mxu0 0.0
    %639 = vmatprep.subr.mxu0 0.0
    %640 = vmatpush1.msra.mxu0 0.0
    %641 = vmatprep.subr.mxu0 0.0
    %642 = vmatpush1.msra.mxu0 0.0
    %643 = vmatprep.subr.mxu0 0.0
    %644 = vmatpush1.msra.mxu0 0.0
    %645 = vmatprep.subr.mxu0 0.0
    %646 = vmatpush1.msra.mxu0 0.0
    %647 = vmatprep.subr.mxu0 0.0
    %648 = vmatpush1.msra.mxu0 0.0
    %649 = vmatprep.subr.mxu0 0.0
    %650 = vmatpush1.msra.mxu0 0.0
    %651 = vmatprep.subr.mxu0 0.0
    %652 = vmatpush1.msra.mxu0 0.0
    %653 = vmatprep.subr.mxu0 0.0
    %654 = vmatpush1.msra.mxu0 0.0
    %655 = vmatprep.subr.mxu0 0.0
    %656 = vmatpush1.msra.mxu0 0.0
    %657 = vmatprep.subr.mxu0 0.0
    %658 = vmatpush1.msra.mxu0 0.0
    %659 = vmatprep.subr.mxu0 %v261
    %660 = vmatpush1.msra.mxu0 %v258
    %661 = vmatprep.subr.mxu0 %v158
    %662 = vmatpush1.msra.mxu0 %v157
    %663 = vmatprep.subr.mxu0 %v126
    %664 = vmatpush1.msra.mxu0 %v125
    %665 = vmatprep.subr.mxu0 %v94
    %666 = vmatpush1.msra.mxu0 %v93
    %667 = vmatprep.subr.mxu0 %v62
    %668 = vmatpush1.msra.mxu0 %v61
    %669 = vmatprep.subr.mxu0 0.0
    %670 = vmatpush2.msra.mxu0 0.0
    %671 = vmatprep.subr.mxu0 0.0
    %672 = vmatpush2.msra.mxu0 0.0
    %673 = vmatprep.subr.mxu0 0.0
    %674 = vmatpush2.msra.mxu0 0.0
    %675 = vmatprep.subr.mxu0 0.0
    %676 = vmatpush2.msra.mxu0 0.0
    %677 = vmatprep.subr.mxu0 0.0
    %678 = vmatpush2.msra.mxu0 0.0
    %679 = vmatprep.subr.mxu0 0.0
    %680 = vmatpush2.msra.mxu0 0.0
    %681 = vmatprep.subr.mxu0 0.0
    %682 = vmatpush2.msra.mxu0 0.0
    %683 = vmatprep.subr.mxu0 0.0
    %684 = vmatpush2.msra.mxu0 0.0
    %685 = vmatprep.subr.mxu0 0.0
    %686 = vmatpush2.msra.mxu0 0.0
    %687 = vmatprep.subr.mxu0 0.0
    %688 = vmatpush2.msra.mxu0 0.0
    %689 = vmatprep.subr.mxu0 0.0
    %690 = vmatpush2.msra.mxu0 0.0
    %691 = vmatprep.subr.mxu0 0.0
    %692 = vmatpush2.msra.mxu0 0.0
    %693 = vmatprep.subr.mxu0 0.0
    %694 = vmatpush2.msra.mxu0 0.0
    %695 = vmatprep.subr.mxu0 0.0
    %696 = vmatpush2.msra.mxu0 0.0
    %697 = vmatprep.subr.mxu0 0.0
    %698 = vmatpush2.msra.mxu0 0.0
    %699 = vmatprep.subr.mxu0 0.0
    %700 = vmatpush2.msra.mxu0 0.0
    %701 = vmatprep.mubr.f32.mxu0 0.0
    %702 = vmatmul.mubr.f32.gmra.mxu0 %v227
    %v703 = vpop.f32.mrf.mxu0
    %v704 = vadd.f32 %v218, %v703
    %v705 = vpop.f32.mrf.mxu0
    %v706 = vadd.f32 %v218, %v705
    %707 = vmatprep.mubr.f32.mxu0 0.0
    %708 = vmatmul.mubr.f32.gmra.mxu0 %v230
    %v709 = vpop.f32.mrf.mxu0
    %v710 = vadd.f32 %v223, %v709
    %v711 = vpop.f32.mrf.mxu0
    %v712 = vadd.f32 %v223, %v711
    %713 = vdwg.mxu0
    %714 = vmatprep.subr.mxu0 0.0
    %715 = vmatpush1.msra.mxu0 0.0
    %716 = vmatprep.subr.mxu0 0.0
    %717 = vmatpush1.msra.mxu0 0.0
    %718 = vmatprep.subr.mxu0 0.0
    %719 = vmatpush1.msra.mxu0 0.0
    %720 = vmatprep.subr.mxu0 0.0
    %721 = vmatpush1.msra.mxu0 0.0
    %722 = vmatprep.subr.mxu0 0.0
    %723 = vmatpush1.msra.mxu0 0.0
    %724 = vmatprep.subr.mxu0 0.0
    %725 = vmatpush1.msra.mxu0 0.0
    %726 = vmatprep.subr.mxu0 0.0
    %727 = vmatpush1.msra.mxu0 0.0
    %728 = vmatprep.subr.mxu0 0.0
    %729 = vmatpush1.msra.mxu0 0.0
    %730 = vmatprep.subr.mxu0 0.0
    %731 = vmatpush1.msra.mxu0 0.0
    %732 = vmatprep.subr.mxu0 0.0
    %733 = vmatpush1.msra.mxu0 0.0
    %734 = vmatprep.subr.mxu0 0.0
    %735 = vmatpush1.msra.mxu0 0.0
    %736 = vmatprep.subr.mxu0 %v267
    %737 = vmatpush1.msra.mxu0 %v264
    %738 = vmatprep.subr.mxu0 %v160
    %739 = vmatpush1.msra.mxu0 %v159
    %740 = vmatprep.subr.mxu0 %v128
    %741 = vmatpush1.msra.mxu0 %v127
    %742 = vmatprep.subr.mxu0 %v96
    %743 = vmatpush1.msra.mxu0 %v95
    %744 = vmatprep.subr.mxu0 %v64
    %745 = vmatpush1.msra.mxu0 %v63
    %746 = vmatprep.subr.mxu0 0.0
    %747 = vmatpush2.msra.mxu0 0.0
    %748 = vmatprep.subr.mxu0 0.0
    %749 = vmatpush2.msra.mxu0 0.0
    %750 = vmatprep.subr.mxu0 0.0
    %751 = vmatpush2.msra.mxu0 0.0
    %752 = vmatprep.subr.mxu0 0.0
    %753 = vmatpush2.msra.mxu0 0.0
    %754 = vmatprep.subr.mxu0 0.0
    %755 = vmatpush2.msra.mxu0 0.0
    %756 = vmatprep.subr.mxu0 0.0
    %757 = vmatpush2.msra.mxu0 0.0
    %758 = vmatprep.subr.mxu0 0.0
    %759 = vmatpush2.msra.mxu0 0.0
    %760 = vmatprep.subr.mxu0 0.0
    %761 = vmatpush2.msra.mxu0 0.0
    %762 = vmatprep.subr.mxu0 0.0
    %763 = vmatpush2.msra.mxu0 0.0
    %764 = vmatprep.subr.mxu0 0.0
    %765 = vmatpush2.msra.mxu0 0.0
    %766 = vmatprep.subr.mxu0 0.0
    %767 = vmatpush2.msra.mxu0 0.0
    %768 = vmatprep.subr.mxu0 0.0
    %769 = vmatpush2.msra.mxu0 0.0
    %770 = vmatprep.subr.mxu0 0.0
    %771 = vmatpush2.msra.mxu0 0.0
    %772 = vmatprep.subr.mxu0 0.0
    %773 = vmatpush2.msra.mxu0 0.0
    %774 = vmatprep.subr.mxu0 0.0
    %775 = vmatpush2.msra.mxu0 0.0
    %776 = vmatprep.subr.mxu0 0.0
    %777 = vmatpush2.msra.mxu0 0.0
    %778 = vmatprep.mubr.f32.mxu0 0.0
    %779 = vmatmul.mubr.f32.gmra.mxu0 %v227
    %v780 = vpop.f32.mrf.mxu0
    %v781 = vadd.f32 %v218, %v780
    %v782 = vpop.f32.mrf.mxu0
    %v783 = vadd.f32 %v218, %v782
    %784 = vmatprep.mubr.f32.mxu0 0.0
    %785 = vmatmul.mubr.f32.gmra.mxu0 %v230
    %v786 = vpop.f32.mrf.mxu0
    %v787 = vadd.f32 %v223, %v786
    %v788 = vpop.f32.mrf.mxu0
    %v789 = vadd.f32 %v223, %v788
    %790 = vdwg.mxu0
    %791 = vmatprep.subr.mxu0 0.0
    %792 = vmatpush1.msra.mxu0 0.0
    %793 = vmatprep.subr.mxu0 0.0
    %794 = vmatpush1.msra.mxu0 0.0
    %795 = vmatprep.subr.mxu0 0.0
    %796 = vmatpush1.msra.mxu0 0.0
    %797 = vmatprep.subr.mxu0 0.0
    %798 = vmatpush1.msra.mxu0 0.0
    %799 = vmatprep.subr.mxu0 0.0
    %800 = vmatpush1.msra.mxu0 0.0
    %801 = vmatprep.subr.mxu0 0.0
    %802 = vmatpush1.msra.mxu0 0.0
    %803 = vmatprep.subr.mxu0 0.0
    %804 = vmatpush1.msra.mxu0 0.0
    %805 = vmatprep.subr.mxu0 0.0
    %806 = vmatpush1.msra.mxu0 0.0
    %807 = vmatprep.subr.mxu0 0.0
    %808 = vmatpush1.msra.mxu0 0.0
    %809 = vmatprep.subr.mxu0 0.0
    %810 = vmatpush1.msra.mxu0 0.0
    %811 = vmatprep.subr.mxu0 0.0
    %812 = vmatpush1.msra.mxu0 0.0
    %813 = vmatprep.subr.mxu0 %v273
    %814 = vmatpush1.msra.mxu0 %v270
    %815 = vmatprep.subr.mxu0 %v162
    %816 = vmatpush1.msra.mxu0 %v161
    %817 = vmatprep.subr.mxu0 %v130
    %818 = vmatpush1.msra.mxu0 %v129
    %819 = vmatprep.subr.mxu0 %v98
    %820 = vmatpush1.msra.mxu0 %v97
    %821 = vmatprep.subr.mxu0 %v66
    %822 = vmatpush1.msra.mxu0 %v65
    %823 = vmatprep.subr.mxu0 0.0
    %824 = vmatpush2.msra.mxu0 0.0
    %825 = vmatprep.subr.mxu0 0.0
    %826 = vmatpush2.msra.mxu0 0.0
    %827 = vmatprep.subr.mxu0 0.0
    %828 = vmatpush2.msra.mxu0 0.0
    %829 = vmatprep.subr.mxu0 0.0
    %830 = vmatpush2.msra.mxu0 0.0
    %831 = vmatprep.subr.mxu0 0.0
    %832 = vmatpush2.msra.mxu0 0.0
    %833 = vmatprep.subr.mxu0 0.0
    %834 = vmatpush2.msra.mxu0 0.0
    %835 = vmatprep.subr.mxu0 0.0
    %836 = vmatpush2.msra.mxu0 0.0
    %837 = vmatprep.subr.mxu0 0.0
    %838 = vmatpush2.msra.mxu0 0.0
    %839 = vmatprep.subr.mxu0 0.0
    %840 = vmatpush2.msra.mxu0 0.0
    %841 = vmatprep.subr.mxu0 0.0
    %842 = vmatpush2.msra.mxu0 0.0
    %843 = vmatprep.subr.mxu0 0.0
    %844 = vmatpush2.msra.mxu0 0.0
    %845 = vmatprep.subr.mxu0 0.0
    %846 = vmatpush2.msra.mxu0 0.0
    %847 = vmatprep.subr.mxu0 0.0
    %848 = vmatpush2.msra.mxu0 0.0
    %849 = vmatprep.subr.mxu0 0.0
    %850 = vmatpush2.msra.mxu0 0.0
    %851 = vmatprep.subr.mxu0 0.0
    %852 = vmatpush2.msra.mxu0 0.0
    %853 = vmatprep.subr.mxu0 0.0
    %854 = vmatpush2.msra.mxu0 0.0
    %855 = vmatprep.mubr.f32.mxu0 0.0
    %856 = vmatmul.mubr.f32.gmra.mxu0 %v227
    %v857 = vpop.f32.mrf.mxu0
    %v858 = vadd.f32 %v218, %v857
    %v859 = vpop.f32.mrf.mxu0
    %v860 = vadd.f32 %v218, %v859
    %861 = vmatprep.mubr.f32.mxu0 0.0
    %862 = vmatmul.mubr.f32.gmra.mxu0 %v230
    %v863 = vpop.f32.mrf.mxu0
    %v864 = vadd.f32 %v223, %v863
    %v865 = vpop.f32.mrf.mxu0
    %v866 = vadd.f32 %v223, %v865
    %867 = vdwg.mxu0
    %868 = vmatprep.subr.mxu0 0.0
    %869 = vmatpush1.msra.mxu0 0.0
    %870 = vmatprep.subr.mxu0 0.0
    %871 = vmatpush1.msra.mxu0 0.0
    %872 = vmatprep.subr.mxu0 0.0
    %873 = vmatpush1.msra.mxu0 0.0
    %874 = vmatprep.subr.mxu0 0.0
    %875 = vmatpush1.msra.mxu0 0.0
    %876 = vmatprep.subr.mxu0 0.0
    %877 = vmatpush1.msra.mxu0 0.0
    %878 = vmatprep.subr.mxu0 0.0
    %879 = vmatpush1.msra.mxu0 0.0
    %880 = vmatprep.subr.mxu0 0.0
    %881 = vmatpush1.msra.mxu0 0.0
    %882 = vmatprep.subr.mxu0 0.0
    %883 = vmatpush1.msra.mxu0 0.0
    %884 = vmatprep.subr.mxu0 0.0
    %885 = vmatpush1.msra.mxu0 0.0
    %886 = vmatprep.subr.mxu0 0.0
    %887 = vmatpush1.msra.mxu0 0.0
    %888 = vmatprep.subr.mxu0 0.0
    %889 = vmatpush1.msra.mxu0 0.0
    %890 = vmatprep.subr.mxu0 %v279
    %891 = vmatpush1.msra.mxu0 %v276
    %892 = vmatprep.subr.mxu0 %v164
    %893 = vmatpush1.msra.mxu0 %v163
    %894 = vmatprep.subr.mxu0 %v132
    %895 = vmatpush1.msra.mxu0 %v131
    %896 = vmatprep.subr.mxu0 %v100
    %897 = vmatpush1.msra.mxu0 %v99
    %898 = vmatprep.subr.mxu0 %v68
    %899 = vmatpush1.msra.mxu0 %v67
    %900 = vmatprep.subr.mxu0 0.0
    %901 = vmatpush2.msra.mxu0 0.0
    %902 = vmatprep.subr.mxu0 0.0
    %903 = vmatpush2.msra.mxu0 0.0
    %904 = vmatprep.subr.mxu0 0.0
    %905 = vmatpush2.msra.mxu0 0.0
    %906 = vmatprep.subr.mxu0 0.0
    %907 = vmatpush2.msra.mxu0 0.0
    %908 = vmatprep.subr.mxu0 0.0
    %909 = vmatpush2.msra.mxu0 0.0
    %910 = vmatprep.subr.mxu0 0.0
    %911 = vmatpush2.msra.mxu0 0.0
    %912 = vmatprep.subr.mxu0 0.0
    %913 = vmatpush2.msra.mxu0 0.0
    %914 = vmatprep.subr.mxu0 0.0
    %915 = vmatpush2.msra.mxu0 0.0
    %916 = vmatprep.subr.mxu0 0.0
    %917 = vmatpush2.msra.mxu0 0.0
    %918 = vmatprep.subr.mxu0 0.0
    %919 = vmatpush2.msra.mxu0 0.0
    %920 = vmatprep.subr.mxu0 0.0
    %921 = vmatpush2.msra.mxu0 0.0
    %922 = vmatprep.subr.mxu0 0.0
    %923 = vmatpush2.msra.mxu0 0.0
    %924 = vmatprep.subr.mxu0 0.0
    %925 = vmatpush2.msra.mxu0 0.0
    %926 = vmatprep.subr.mxu0 0.0
    %927 = vmatpush2.msra.mxu0 0.0
    %928 = vmatprep.subr.mxu0 0.0
    %929 = vmatpush2.msra.mxu0 0.0
    %930 = vmatprep.subr.mxu0 0.0
    %931 = vmatpush2.msra.mxu0 0.0
    %932 = vmatprep.mubr.f32.mxu0 0.0
    %933 = vmatmul.mubr.f32.gmra.mxu0 %v227
    %v934 = vpop.f32.mrf.mxu0
    %v935 = vadd.f32 %v218, %v934
    %v936 = vpop.f32.mrf.mxu0
    %v937 = vadd.f32 %v218, %v936
    %938 = vmatprep.mubr.f32.mxu0 0.0
    %939 = vmatmul.mubr.f32.gmra.mxu0 %v230
    %v940 = vpop.f32.mrf.mxu0
    %v941 = vadd.f32 %v223, %v940
    %v942 = vpop.f32.mrf.mxu0
    %v943 = vadd.f32 %v223, %v942
    %944 = vdwg.mxu0
    %945 = vmatprep.subr.mxu0 0.0
    %946 = vmatpush1.msra.mxu0 0.0
    %947 = vmatprep.subr.mxu0 0.0
    %948 = vmatpush1.msra.mxu0 0.0
    %949 = vmatprep.subr.mxu0 0.0
    %950 = vmatpush1.msra.mxu0 0.0
    %951 = vmatprep.subr.mxu0 0.0
    %952 = vmatpush1.msra.mxu0 0.0
    %953 = vmatprep.subr.mxu0 0.0
    %954 = vmatpush1.msra.mxu0 0.0
    %955 = vmatprep.subr.mxu0 0.0
    %956 = vmatpush1.msra.mxu0 0.0
    %957 = vmatprep.subr.mxu0 0.0
    %958 = vmatpush1.msra.mxu0 0.0
    %959 = vmatprep.subr.mxu0 0.0
    %960 = vmatpush1.msra.mxu0 0.0
    %961 = vmatprep.subr.mxu0 0.0
    %962 = vmatpush1.msra.mxu0 0.0
    %963 = vmatprep.subr.mxu0 0.0
    %964 = vmatpush1.msra.mxu0 0.0
    %965 = vmatprep.subr.mxu0 0.0
    %966 = vmatpush1.msra.mxu0 0.0
    %967 = vmatprep.subr.mxu0 %v285
    %968 = vmatpush1.msra.mxu0 %v282
    %969 = vmatprep.subr.mxu0 %v166
    %970 = vmatpush1.msra.mxu0 %v165
    %971 = vmatprep.subr.mxu0 %v134
    %972 = vmatpush1.msra.mxu0 %v133
    %973 = vmatprep.subr.mxu0 %v102
    %974 = vmatpush1.msra.mxu0 %v101
    %975 = vmatprep.subr.mxu0 %v70
    %976 = vmatpush1.msra.mxu0 %v69
    %977 = vmatprep.subr.mxu0 0.0
    %978 = vmatpush2.msra.mxu0 0.0
    %979 = vmatprep.subr.mxu0 0.0
    %980 = vmatpush2.msra.mxu0 0.0
    %981 = vmatprep.subr.mxu0 0.0
    %982 = vmatpush2.msra.mxu0 0.0
    %983 = vmatprep.subr.mxu0 0.0
    %984 = vmatpush2.msra.mxu0 0.0
    %985 = vmatprep.subr.mxu0 0.0
    %986 = vmatpush2.msra.mxu0 0.0
    %987 = vmatprep.subr.mxu0 0.0
    %988 = vmatpush2.msra.mxu0 0.0
    %989 = vmatprep.subr.mxu0 0.0
    %990 = vmatpush2.msra.mxu0 0.0
    %991 = vmatprep.subr.mxu0 0.0
    %992 = vmatpush2.msra.mxu0 0.0
    %993 = vmatprep.subr.mxu0 0.0
    %994 = vmatpush2.msra.mxu0 0.0
    %995 = vmatprep.subr.mxu0 0.0
    %996 = vmatpush2.msra.mxu0 0.0
    %997 = vmatprep.subr.mxu0 0.0
    %998 = vmatpush2.msra.mxu0 0.0
    %999 = vmatprep.subr.mxu0 0.0
    %1000 = vmatpush2.msra.mxu0 0.0
    %1001 = vmatprep.subr.mxu0 0.0
    %1002 = vmatpush2.msra.mxu0 0.0
    %1003 = vmatprep.subr.mxu0 0.0
    %1004 = vmatpush2.msra.mxu0 0.0
    %1005 = vmatprep.subr.mxu0 0.0
    %1006 = vmatpush2.msra.mxu0 0.0
    %1007 = vmatprep.subr.mxu0 0.0
    %1008 = vmatpush2.msra.mxu0 0.0
    %1009 = vmatprep.mubr.f32.mxu0 0.0
    %1010 = vmatmul.mubr.f32.gmra.mxu0 %v227
    %v1011 = vpop.f32.mrf.mxu0
    %v1012 = vadd.f32 %v218, %v1011
    %v1013 = vpop.f32.mrf.mxu0
    %v1014 = vadd.f32 %v218, %v1013
    %1015 = vmatprep.mubr.f32.mxu0 0.0
    %1016 = vmatmul.mubr.f32.gmra.mxu0 %v230
    %v1017 = vpop.f32.mrf.mxu0
    %v1018 = vadd.f32 %v223, %v1017
    %v1019 = vpop.f32.mrf.mxu0
    %v1020 = vadd.f32 %v223, %v1019
    %1021 = vdwg.mxu0
    %1022 = vmatprep.subr.mxu0 0.0
    %1023 = vmatpush1.msra.mxu0 0.0
    %1024 = vmatprep.subr.mxu0 0.0
    %1025 = vmatpush1.msra.mxu0 0.0
    %1026 = vmatprep.subr.mxu0 0.0
    %1027 = vmatpush1.msra.mxu0 0.0
    %1028 = vmatprep.subr.mxu0 0.0
    %1029 = vmatpush1.msra.mxu0 0.0
    %1030 = vmatprep.subr.mxu0 0.0
    %1031 = vmatpush1.msra.mxu0 0.0
    %1032 = vmatprep.subr.mxu0 0.0
    %1033 = vmatpush1.msra.mxu0 0.0
    %1034 = vmatprep.subr.mxu0 0.0
    %1035 = vmatpush1.msra.mxu0 0.0
    %1036 = vmatprep.subr.mxu0 0.0
    %1037 = vmatpush1.msra.mxu0 0.0
    %1038 = vmatprep.subr.mxu0 0.0
    %1039 = vmatpush1.msra.mxu0 0.0
    %1040 = vmatprep.subr.mxu0 0.0
    %1041 = vmatpush1.msra.mxu0 0.0
    %1042 = vmatprep.subr.mxu0 0.0
    %1043 = vmatpush1.msra.mxu0 0.0
    %1044 = vmatprep.subr.mxu0 %v291
    %1045 = vmatpush1.msra.mxu0 %v288
    %1046 = vmatprep.subr.mxu0 %v168
    %1047 = vmatpush1.msra.mxu0 %v167
    %1048 = vmatprep.subr.mxu0 %v136
    %1049 = vmatpush1.msra.mxu0 %v135
    %1050 = vmatprep.subr.mxu0 %v104
    %1051 = vmatpush1.msra.mxu0 %v103
    %1052 = vmatprep.subr.mxu0 %v72
    %1053 = vmatpush1.msra.mxu0 %v71
    %1054 = vmatprep.subr.mxu0 0.0
    %1055 = vmatpush2.msra.mxu0 0.0
    %1056 = vmatprep.subr.mxu0 0.0
    %1057 = vmatpush2.msra.mxu0 0.0
    %1058 = vmatprep.subr.mxu0 0.0
    %1059 = vmatpush2.msra.mxu0 0.0
    %1060 = vmatprep.subr.mxu0 0.0
    %1061 = vmatpush2.msra.mxu0 0.0
    %1062 = vmatprep.subr.mxu0 0.0
    %1063 = vmatpush2.msra.mxu0 0.0
    %1064 = vmatprep.subr.mxu0 0.0
    %1065 = vmatpush2.msra.mxu0 0.0
    %1066 = vmatprep.subr.mxu0 0.0
    %1067 = vmatpush2.msra.mxu0 0.0
    %1068 = vmatprep.subr.mxu0 0.0
    %1069 = vmatpush2.msra.mxu0 0.0
    %1070 = vmatprep.subr.mxu0 0.0
    %1071 = vmatpush2.msra.mxu0 0.0
    %1072 = vmatprep.subr.mxu0 0.0
    %1073 = vmatpush2.msra.mxu0 0.0
    %1074 = vmatprep.subr.mxu0 0.0
    %1075 = vmatpush2.msra.mxu0 0.0
    %1076 = vmatprep.subr.mxu0 0.0
    %1077 = vmatpush2.msra.mxu0 0.0
    %1078 = vmatprep.subr.mxu0 0.0
    %1079 = vmatpush2.msra.mxu0 0.0
    %1080 = vmatprep.subr.mxu0 0.0
    %1081 = vmatpush2.msra.mxu0 0.0
    %1082 = vmatprep.subr.mxu0 0.0
    %1083 = vmatpush2.msra.mxu0 0.0
    %1084 = vmatprep.subr.mxu0 0.0
    %1085 = vmatpush2.msra.mxu0 0.0
    %1086 = vmatprep.mubr.f32.mxu0 0.0
    %1087 = vmatmul.mubr.f32.gmra.mxu0 %v227
    %v1088 = vpop.f32.mrf.mxu0
    %v1089 = vadd.f32 %v218, %v1088
    %v1090 = vpop.f32.mrf.mxu0
    %v1091 = vadd.f32 %v218, %v1090
    %1092 = vmatprep.mubr.f32.mxu0 0.0
    %1093 = vmatmul.mubr.f32.gmra.mxu0 %v230
    %v1094 = vpop.f32.mrf.mxu0
    %v1095 = vadd.f32 %v223, %v1094
    %v1096 = vpop.f32.mrf.mxu0
    %v1097 = vadd.f32 %v223, %v1096
    %1098 = vdwg.mxu0
    %1099 = vmatprep.subr.mxu0 0.0
    %1100 = vmatpush1.msra.mxu0 0.0
    %1101 = vmatprep.subr.mxu0 0.0
    %1102 = vmatpush1.msra.mxu0 0.0
    %1103 = vmatprep.subr.mxu0 0.0
    %1104 = vmatpush1.msra.mxu0 0.0
    %1105 = vmatprep.subr.mxu0 0.0
    %1106 = vmatpush1.msra.mxu0 0.0
    %1107 = vmatprep.subr.mxu0 0.0
    %1108 = vmatpush1.msra.mxu0 0.0
    %1109 = vmatprep.subr.mxu0 0.0
    %1110 = vmatpush1.msra.mxu0 0.0
    %1111 = vmatprep.subr.mxu0 0.0
    %1112 = vmatpush1.msra.mxu0 0.0
    %1113 = vmatprep.subr.mxu0 0.0
    %1114 = vmatpush1.msra.mxu0 0.0
    %1115 = vmatprep.subr.mxu0 0.0
    %1116 = vmatpush1.msra.mxu0 0.0
    %1117 = vmatprep.subr.mxu0 0.0
    %1118 = vmatpush1.msra.mxu0 0.0
    %1119 = vmatprep.subr.mxu0 0.0
    %1120 = vmatpush1.msra.mxu0 0.0
    %1121 = vmatprep.subr.mxu0 %v297
    %1122 = vmatpush1.msra.mxu0 %v294
    %1123 = vmatprep.subr.mxu0 %v170
    %1124 = vmatpush1.msra.mxu0 %v169
    %1125 = vmatprep.subr.mxu0 %v138
    %1126 = vmatpush1.msra.mxu0 %v137
    %1127 = vmatprep.subr.mxu0 %v106
    %1128 = vmatpush1.msra.mxu0 %v105
    %1129 = vmatprep.subr.mxu0 %v74
    %1130 = vmatpush1.msra.mxu0 %v73
    %1131 = vmatprep.subr.mxu0 0.0
    %1132 = vmatpush2.msra.mxu0 0.0
    %1133 = vmatprep.subr.mxu0 0.0
    %1134 = vmatpush2.msra.mxu0 0.0
    %1135 = vmatprep.subr.mxu0 0.0
    %1136 = vmatpush2.msra.mxu0 0.0
    %1137 = vmatprep.subr.mxu0 0.0
    %1138 = vmatpush2.msra.mxu0 0.0
    %1139 = vmatprep.subr.mxu0 0.0
    %1140 = vmatpush2.msra.mxu0 0.0
    %1141 = vmatprep.subr.mxu0 0.0
    %1142 = vmatpush2.msra.mxu0 0.0
    %1143 = vmatprep.subr.mxu0 0.0
    %1144 = vmatpush2.msra.mxu0 0.0
    %1145 = vmatprep.subr.mxu0 0.0
    %1146 = vmatpush2.msra.mxu0 0.0
    %1147 = vmatprep.subr.mxu0 0.0
    %1148 = vmatpush2.msra.mxu0 0.0
    %1149 = vmatprep.subr.mxu0 0.0
    %1150 = vmatpush2.msra.mxu0 0.0
    %1151 = vmatprep.subr.mxu0 0.0
    %1152 = vmatpush2.msra.mxu0 0.0
    %1153 = vmatprep.subr.mxu0 0.0
    %1154 = vmatpush2.msra.mxu0 0.0
    %1155 = vmatprep.subr.mxu0 0.0
    %1156 = vmatpush2.msra.mxu0 0.0
    %1157 = vmatprep.subr.mxu0 0.0
    %1158 = vmatpush2.msra.mxu0 0.0
    %1159 = vmatprep.subr.mxu0 0.0
    %1160 = vmatpush2.msra.mxu0 0.0
    %1161 = vmatprep.subr.mxu0 0.0
    %1162 = vmatpush2.msra.mxu0 0.0
    %1163 = vmatprep.mubr.f32.mxu0 0.0
    %1164 = vmatmul.mubr.f32.gmra.mxu0 %v227
    %v1165 = vpop.f32.mrf.mxu0
    %v1166 = vadd.f32 %v218, %v1165
    %v1167 = vpop.f32.mrf.mxu0
    %v1168 = vadd.f32 %v218, %v1167
    %1169 = vmatprep.mubr.f32.mxu0 0.0
    %1170 = vmatmul.mubr.f32.gmra.mxu0 %v230
    %v1171 = vpop.f32.mrf.mxu0
    %v1172 = vadd.f32 %v223, %v1171
    %v1173 = vpop.f32.mrf.mxu0
    %v1174 = vadd.f32 %v223, %v1173
    %1175 = vdwg.mxu0
    %1176 = vmatprep.subr.mxu0 0.0
    %1177 = vmatpush1.msra.mxu0 0.0
    %1178 = vmatprep.subr.mxu0 0.0
    %1179 = vmatpush1.msra.mxu0 0.0
    %1180 = vmatprep.subr.mxu0 0.0
    %1181 = vmatpush1.msra.mxu0 0.0
    %1182 = vmatprep.subr.mxu0 0.0
    %1183 = vmatpush1.msra.mxu0 0.0
    %1184 = vmatprep.subr.mxu0 0.0
    %1185 = vmatpush1.msra.mxu0 0.0
    %1186 = vmatprep.subr.mxu0 0.0
    %1187 = vmatpush1.msra.mxu0 0.0
    %1188 = vmatprep.subr.mxu0 0.0
    %1189 = vmatpush1.msra.mxu0 0.0
    %1190 = vmatprep.subr.mxu0 0.0
    %1191 = vmatpush1.msra.mxu0 0.0
    %1192 = vmatprep.subr.mxu0 0.0
    %1193 = vmatpush1.msra.mxu0 0.0
    %1194 = vmatprep.subr.mxu0 0.0
    %1195 = vmatpush1.msra.mxu0 0.0
    %1196 = vmatprep.subr.mxu0 0.0
    %1197 = vmatpush1.msra.mxu0 0.0
    %1198 = vmatprep.subr.mxu0 %v303
    %1199 = vmatpush1.msra.mxu0 %v300
    %1200 = vmatprep.subr.mxu0 %v172
    %1201 = vmatpush1.msra.mxu0 %v171
    %1202 = vmatprep.subr.mxu0 %v140
    %1203 = vmatpush1.msra.mxu0 %v139
    %1204 = vmatprep.subr.mxu0 %v108
    %1205 = vmatpush1.msra.mxu0 %v107
    %1206 = vmatprep.subr.mxu0 %v76
    %1207 = vmatpush1.msra.mxu0 %v75
    %1208 = vmatprep.subr.mxu0 0.0
    %1209 = vmatpush2.msra.mxu0 0.0
    %1210 = vmatprep.subr.mxu0 0.0
    %1211 = vmatpush2.msra.mxu0 0.0
    %1212 = vmatprep.subr.mxu0 0.0
    %1213 = vmatpush2.msra.mxu0 0.0
    %1214 = vmatprep.subr.mxu0 0.0
    %1215 = vmatpush2.msra.mxu0 0.0
    %1216 = vmatprep.subr.mxu0 0.0
    %1217 = vmatpush2.msra.mxu0 0.0
    %1218 = vmatprep.subr.mxu0 0.0
    %1219 = vmatpush2.msra.mxu0 0.0
    %1220 = vmatprep.subr.mxu0 0.0
    %1221 = vmatpush2.msra.mxu0 0.0
    %1222 = vmatprep.subr.mxu0 0.0
    %1223 = vmatpush2.msra.mxu0 0.0
    %1224 = vmatprep.subr.mxu0 0.0
    %1225 = vmatpush2.msra.mxu0 0.0
    %1226 = vmatprep.subr.mxu0 0.0
    %1227 = vmatpush2.msra.mxu0 0.0
    %1228 = vmatprep.subr.mxu0 0.0
    %1229 = vmatpush2.msra.mxu0 0.0
    %1230 = vmatprep.subr.mxu0 0.0
    %1231 = vmatpush2.msra.mxu0 0.0
    %1232 = vmatprep.subr.mxu0 0.0
    %1233 = vmatpush2.msra.mxu0 0.0
    %1234 = vmatprep.subr.mxu0 0.0
    %1235 = vmatpush2.msra.mxu0 0.0
    %1236 = vmatprep.subr.mxu0 0.0
    %1237 = vmatpush2.msra.mxu0 0.0
    %1238 = vmatprep.subr.mxu0 0.0
    %1239 = vmatpush2.msra.mxu0 0.0
    %1240 = vmatprep.mubr.f32.mxu0 0.0
    %1241 = vmatmul.mubr.f32.gmra.mxu0 %v227
    %v1242 = vpop.f32.mrf.mxu0
    %v1243 = vadd.f32 %v218, %v1242
    %v1244 = vpop.f32.mrf.mxu0
    %v1245 = vadd.f32 %v218, %v1244
    %1246 = vmatprep.mubr.f32.mxu0 0.0
    %1247 = vmatmul.mubr.f32.gmra.mxu0 %v230
    %v1248 = vpop.f32.mrf.mxu0
    %v1249 = vadd.f32 %v223, %v1248
    %v1250 = vpop.f32.mrf.mxu0
    %v1251 = vadd.f32 %v223, %v1250
    %1252 = vdwg.mxu0
    %1253 = vmatprep.subr.mxu0 0.0
    %1254 = vmatpush1.msra.mxu0 0.0
    %1255 = vmatprep.subr.mxu0 0.0
    %1256 = vmatpush1.msra.mxu0 0.0
    %1257 = vmatprep.subr.mxu0 0.0
    %1258 = vmatpush1.msra.mxu0 0.0
    %1259 = vmatprep.subr.mxu0 0.0
    %1260 = vmatpush1.msra.mxu0 0.0
    %1261 = vmatprep.subr.mxu0 0.0
    %1262 = vmatpush1.msra.mxu0 0.0
    %1263 = vmatprep.subr.mxu0 0.0
    %1264 = vmatpush1.msra.mxu0 0.0
    %1265 = vmatprep.subr.mxu0 0.0
    %1266 = vmatpush1.msra.mxu0 0.0
    %1267 = vmatprep.subr.mxu0 0.0
    %1268 = vmatpush1.msra.mxu0 0.0
    %1269 = vmatprep.subr.mxu0 0.0
    %1270 = vmatpush1.msra.mxu0 0.0
    %1271 = vmatprep.subr.mxu0 0.0
    %1272 = vmatpush1.msra.mxu0 0.0
    %1273 = vmatprep.subr.mxu0 0.0
    %1274 = vmatpush1.msra.mxu0 0.0
    %1275 = vmatprep.subr.mxu0 %v309
    %1276 = vmatpush1.msra.mxu0 %v306
    %1277 = vmatprep.subr.mxu0 %v174
    %1278 = vmatpush1.msra.mxu0 %v173
    %1279 = vmatprep.subr.mxu0 %v142
    %1280 = vmatpush1.msra.mxu0 %v141
    %1281 = vmatprep.subr.mxu0 %v110
    %1282 = vmatpush1.msra.mxu0 %v109
    %1283 = vmatprep.subr.mxu0 %v78
    %1284 = vmatpush1.msra.mxu0 %v77
    %1285 = vmatprep.subr.mxu0 0.0
    %1286 = vmatpush2.msra.mxu0 0.0
    %1287 = vmatprep.subr.mxu0 0.0
    %1288 = vmatpush2.msra.mxu0 0.0
    %1289 = vmatprep.subr.mxu0 0.0
    %1290 = vmatpush2.msra.mxu0 0.0
    %1291 = vmatprep.subr.mxu0 0.0
    %1292 = vmatpush2.msra.mxu0 0.0
    %1293 = vmatprep.subr.mxu0 0.0
    %1294 = vmatpush2.msra.mxu0 0.0
    %1295 = vmatprep.subr.mxu0 0.0
    %1296 = vmatpush2.msra.mxu0 0.0
    %1297 = vmatprep.subr.mxu0 0.0
    %1298 = vmatpush2.msra.mxu0 0.0
    %1299 = vmatprep.subr.mxu0 0.0
    %1300 = vmatpush2.msra.mxu0 0.0
    %1301 = vmatprep.subr.mxu0 0.0
    %1302 = vmatpush2.msra.mxu0 0.0
    %1303 = vmatprep.subr.mxu0 0.0
    %1304 = vmatpush2.msra.mxu0 0.0
    %1305 = vmatprep.subr.mxu0 0.0
    %1306 = vmatpush2.msra.mxu0 0.0
    %1307 = vmatprep.subr.mxu0 0.0
    %1308 = vmatpush2.msra.mxu0 0.0
    %1309 = vmatprep.subr.mxu0 0.0
    %1310 = vmatpush2.msra.mxu0 0.0
    %1311 = vmatprep.subr.mxu0 0.0
    %1312 = vmatpush2.msra.mxu0 0.0
    %1313 = vmatprep.subr.mxu0 0.0
    %1314 = vmatpush2.msra.mxu0 0.0
    %1315 = vmatprep.subr.mxu0 0.0
    %1316 = vmatpush2.msra.mxu0 0.0
    %1317 = vmatprep.mubr.f32.mxu0 0.0
    %1318 = vmatmul.mubr.f32.gmra.mxu0 %v227
    %v1319 = vpop.f32.mrf.mxu0
    %v1320 = vadd.f32 %v218, %v1319
    %v1321 = vpop.f32.mrf.mxu0
    %v1322 = vadd.f32 %v218, %v1321
    %1323 = vmatprep.mubr.f32.mxu0 0.0
    %1324 = vmatmul.mubr.f32.gmra.mxu0 %v230
    %v1325 = vpop.f32.mrf.mxu0
    %v1326 = vadd.f32 %v223, %v1325
    %v1327 = vpop.f32.mrf.mxu0
    %v1328 = vadd.f32 %v223, %v1327
    %1329 = vdwg.mxu0
    %1330 = vmatprep.subr.mxu0 0.0
    %1331 = vmatpush1.msra.mxu0 0.0
    %1332 = vmatprep.subr.mxu0 0.0
    %1333 = vmatpush1.msra.mxu0 0.0
    %1334 = vmatprep.subr.mxu0 0.0
    %1335 = vmatpush1.msra.mxu0 0.0
    %1336 = vmatprep.subr.mxu0 0.0
    %1337 = vmatpush1.msra.mxu0 0.0
    %1338 = vmatprep.subr.mxu0 0.0
    %1339 = vmatpush1.msra.mxu0 0.0
    %1340 = vmatprep.subr.mxu0 0.0
    %1341 = vmatpush1.msra.mxu0 0.0
    %1342 = vmatprep.subr.mxu0 0.0
    %1343 = vmatpush1.msra.mxu0 0.0
    %1344 = vmatprep.subr.mxu0 0.0
    %1345 = vmatpush1.msra.mxu0 0.0
    %1346 = vmatprep.subr.mxu0 0.0
    %1347 = vmatpush1.msra.mxu0 0.0
    %1348 = vmatprep.subr.mxu0 0.0
    %1349 = vmatpush1.msra.mxu0 0.0
    %1350 = vmatprep.subr.mxu0 0.0
    %1351 = vmatpush1.msra.mxu0 0.0
    %1352 = vmatprep.subr.mxu0 %v315
    %1353 = vmatpush1.msra.mxu0 %v312
    %1354 = vmatprep.subr.mxu0 %v176
    %1355 = vmatpush1.msra.mxu0 %v175
    %1356 = vmatprep.subr.mxu0 %v144
    %1357 = vmatpush1.msra.mxu0 %v143
    %1358 = vmatprep.subr.mxu0 %v112
    %1359 = vmatpush1.msra.mxu0 %v111
    %1360 = vmatprep.subr.mxu0 %v80
    %1361 = vmatpush1.msra.mxu0 %v79
    %1362 = vmatprep.subr.mxu0 0.0
    %1363 = vmatpush2.msra.mxu0 0.0
    %1364 = vmatprep.subr.mxu0 0.0
    %1365 = vmatpush2.msra.mxu0 0.0
    %1366 = vmatprep.subr.mxu0 0.0
    %1367 = vmatpush2.msra.mxu0 0.0
    %1368 = vmatprep.subr.mxu0 0.0
    %1369 = vmatpush2.msra.mxu0 0.0
    %1370 = vmatprep.subr.mxu0 0.0
    %1371 = vmatpush2.msra.mxu0 0.0
    %1372 = vmatprep.subr.mxu0 0.0
    %1373 = vmatpush2.msra.mxu0 0.0
    %1374 = vmatprep.subr.mxu0 0.0
    %1375 = vmatpush2.msra.mxu0 0.0
    %1376 = vmatprep.subr.mxu0 0.0
    %1377 = vmatpush2.msra.mxu0 0.0
    %1378 = vmatprep.subr.mxu0 0.0
    %1379 = vmatpush2.msra.mxu0 0.0
    %1380 = vmatprep.subr.mxu0 0.0
    %1381 = vmatpush2.msra.mxu0 0.0
    %1382 = vmatprep.subr.mxu0 0.0
    %1383 = vmatpush2.msra.mxu0 0.0
    %1384 = vmatprep.subr.mxu0 0.0
    %1385 = vmatpush2.msra.mxu0 0.0
    %1386 = vmatprep.subr.mxu0 0.0
    %1387 = vmatpush2.msra.mxu0 0.0
    %1388 = vmatprep.subr.mxu0 0.0
    %1389 = vmatpush2.msra.mxu0 0.0
    %1390 = vmatprep.subr.mxu0 0.0
    %1391 = vmatpush2.msra.mxu0 0.0
    %1392 = vmatprep.subr.mxu0 0.0
    %1393 = vmatpush2.msra.mxu0 0.0
    %1394 = vmatprep.mubr.f32.mxu0 0.0
    %1395 = vmatmul.mubr.f32.gmra.mxu0 %v227
    %v1396 = vpop.f32.mrf.mxu0
    %v1397 = vadd.f32 %v218, %v1396
    %v1398 = vpop.f32.mrf.mxu0
    %v1399 = vadd.f32 %v218, %v1398
    %1400 = vmatprep.mubr.f32.mxu0 0.0
    %1401 = vmatmul.mubr.f32.gmra.mxu0 %v230
    %v1402 = vpop.f32.mrf.mxu0
    %v1403 = vadd.f32 %v223, %v1402
    %v1404 = vpop.f32.mrf.mxu0
    %v1405 = vadd.f32 %v223, %v1404
    %1406 = vdwg.mxu0
    %1407 = vmatprep.subr.mxu0 0.0
    %1408 = vmatpush1.msra.mxu0 0.0
    %1409 = vmatprep.subr.mxu0 0.0
    %1410 = vmatpush1.msra.mxu0 0.0
    %1411 = vmatprep.subr.mxu0 0.0
    %1412 = vmatpush1.msra.mxu0 0.0
    %1413 = vmatprep.subr.mxu0 0.0
    %1414 = vmatpush1.msra.mxu0 0.0
    %1415 = vmatprep.subr.mxu0 0.0
    %1416 = vmatpush1.msra.mxu0 0.0
    %1417 = vmatprep.subr.mxu0 0.0
    %1418 = vmatpush1.msra.mxu0 0.0
    %1419 = vmatprep.subr.mxu0 0.0
    %1420 = vmatpush1.msra.mxu0 0.0
    %1421 = vmatprep.subr.mxu0 0.0
    %1422 = vmatpush1.msra.mxu0 0.0
    %1423 = vmatprep.subr.mxu0 0.0
    %1424 = vmatpush1.msra.mxu0 0.0
    %1425 = vmatprep.subr.mxu0 0.0
    %1426 = vmatpush1.msra.mxu0 0.0
    %1427 = vmatprep.subr.mxu0 0.0
    %1428 = vmatpush1.msra.mxu0 0.0
    %1429 = vmatprep.subr.mxu0 %v321
    %1430 = vmatpush1.msra.mxu0 %v318
    %1431 = vmatprep.subr.mxu0 %v178
    %1432 = vmatpush1.msra.mxu0 %v177
    %1433 = vmatprep.subr.mxu0 %v146
    %1434 = vmatpush1.msra.mxu0 %v145
    %1435 = vmatprep.subr.mxu0 %v114
    %1436 = vmatpush1.msra.mxu0 %v113
    %1437 = vmatprep.subr.mxu0 %v82
    %1438 = vmatpush1.msra.mxu0 %v81
    %1439 = vmatprep.subr.mxu0 0.0
    %1440 = vmatpush2.msra.mxu0 0.0
    %1441 = vmatprep.subr.mxu0 0.0
    %1442 = vmatpush2.msra.mxu0 0.0
    %1443 = vmatprep.subr.mxu0 0.0
    %1444 = vmatpush2.msra.mxu0 0.0
    %1445 = vmatprep.subr.mxu0 0.0
    %1446 = vmatpush2.msra.mxu0 0.0
    %1447 = vmatprep.subr.mxu0 0.0
    %1448 = vmatpush2.msra.mxu0 0.0
    %1449 = vmatprep.subr.mxu0 0.0
    %1450 = vmatpush2.msra.mxu0 0.0
    %1451 = vmatprep.subr.mxu0 0.0
    %1452 = vmatpush2.msra.mxu0 0.0
    %1453 = vmatprep.subr.mxu0 0.0
    %1454 = vmatpush2.msra.mxu0 0.0
    %1455 = vmatprep.subr.mxu0 0.0
    %1456 = vmatpush2.msra.mxu0 0.0
    %1457 = vmatprep.subr.mxu0 0.0
    %1458 = vmatpush2.msra.mxu0 0.0
    %1459 = vmatprep.subr.mxu0 0.0
    %1460 = vmatpush2.msra.mxu0 0.0
    %1461 = vmatprep.subr.mxu0 0.0
    %1462 = vmatpush2.msra.mxu0 0.0
    %1463 = vmatprep.subr.mxu0 0.0
    %1464 = vmatpush2.msra.mxu0 0.0
    %1465 = vmatprep.subr.mxu0 0.0
    %1466 = vmatpush2.msra.mxu0 0.0
    %1467 = vmatprep.subr.mxu0 0.0
    %1468 = vmatpush2.msra.mxu0 0.0
    %1469 = vmatprep.subr.mxu0 0.0
    %1470 = vmatpush2.msra.mxu0 0.0
    %1471 = vmatprep.mubr.f32.mxu0 0.0
    %1472 = vmatmul.mubr.f32.gmra.mxu0 %v227
    %v1473 = vpop.f32.mrf.mxu0
    %v1474 = vadd.f32 %v218, %v1473
    %v1475 = vpop.f32.mrf.mxu0
    %v1476 = vadd.f32 %v218, %v1475
    %1477 = vmatprep.mubr.f32.mxu0 0.0
    %1478 = vmatmul.mubr.f32.gmra.mxu0 %v230
    %v1479 = vpop.f32.mrf.mxu0
    %v1480 = vadd.f32 %v223, %v1479
    %v1481 = vpop.f32.mrf.mxu0
    %v1482 = vadd.f32 %v223, %v1481
    %1483 = vdwg.mxu0
    %1484 = vmatprep.subr.mxu0 0.0
    %1485 = vmatpush1.msra.mxu0 0.0
    %1486 = vmatprep.subr.mxu0 0.0
    %1487 = vmatpush1.msra.mxu0 0.0
    %1488 = vmatprep.subr.mxu0 0.0
    %1489 = vmatpush1.msra.mxu0 0.0
    %1490 = vmatprep.subr.mxu0 0.0
    %1491 = vmatpush1.msra.mxu0 0.0
    %1492 = vmatprep.subr.mxu0 0.0
    %1493 = vmatpush1.msra.mxu0 0.0
    %1494 = vmatprep.subr.mxu0 0.0
    %1495 = vmatpush1.msra.mxu0 0.0
    %1496 = vmatprep.subr.mxu0 0.0
    %1497 = vmatpush1.msra.mxu0 0.0
    %1498 = vmatprep.subr.mxu0 0.0
    %1499 = vmatpush1.msra.mxu0 0.0
    %1500 = vmatprep.subr.mxu0 0.0
    %1501 = vmatpush1.msra.mxu0 0.0
    %1502 = vmatprep.subr.mxu0 0.0
    %1503 = vmatpush1.msra.mxu0 0.0
    %1504 = vmatprep.subr.mxu0 0.0
    %1505 = vmatpush1.msra.mxu0 0.0
    %1506 = vmatprep.subr.mxu0 %v327
    %1507 = vmatpush1.msra.mxu0 %v324
    %1508 = vmatprep.subr.mxu0 %v180
    %1509 = vmatpush1.msra.mxu0 %v179
    %1510 = vmatprep.subr.mxu0 %v148
    %1511 = vmatpush1.msra.mxu0 %v147
    %1512 = vmatprep.subr.mxu0 %v116
    %1513 = vmatpush1.msra.mxu0 %v115
    %1514 = vmatprep.subr.mxu0 %v84
    %1515 = vmatpush1.msra.mxu0 %v83
    %1516 = vmatprep.subr.mxu0 0.0
    %1517 = vmatpush2.msra.mxu0 0.0
    %1518 = vmatprep.subr.mxu0 0.0
    %1519 = vmatpush2.msra.mxu0 0.0
    %1520 = vmatprep.subr.mxu0 0.0
    %1521 = vmatpush2.msra.mxu0 0.0
    %1522 = vmatprep.subr.mxu0 0.0
    %1523 = vmatpush2.msra.mxu0 0.0
    %1524 = vmatprep.subr.mxu0 0.0
    %1525 = vmatpush2.msra.mxu0 0.0
    %1526 = vmatprep.subr.mxu0 0.0
    %1527 = vmatpush2.msra.mxu0 0.0
    %1528 = vmatprep.subr.mxu0 0.0
    %1529 = vmatpush2.msra.mxu0 0.0
    %1530 = vmatprep.subr.mxu0 0.0
    %1531 = vmatpush2.msra.mxu0 0.0
    %1532 = vmatprep.subr.mxu0 0.0
    %1533 = vmatpush2.msra.mxu0 0.0
    %1534 = vmatprep.subr.mxu0 0.0
    %1535 = vmatpush2.msra.mxu0 0.0
    %1536 = vmatprep.subr.mxu0 0.0
    %1537 = vmatpush2.msra.mxu0 0.0
    %1538 = vmatprep.subr.mxu0 0.0
    %1539 = vmatpush2.msra.mxu0 0.0
    %1540 = vmatprep.subr.mxu0 0.0
    %1541 = vmatpush2.msra.mxu0 0.0
    %1542 = vmatprep.subr.mxu0 0.0
    %1543 = vmatpush2.msra.mxu0 0.0
    %1544 = vmatprep.subr.mxu0 0.0
    %1545 = vmatpush2.msra.mxu0 0.0
    %1546 = vmatprep.subr.mxu0 0.0
    %1547 = vmatpush2.msra.mxu0 0.0
    %1548 = vmatprep.mubr.f32.mxu0 0.0
    %1549 = vmatmul.mubr.f32.gmra.mxu0 %v227
    %v1550 = vpop.f32.mrf.mxu0
    %v1551 = vadd.f32 %v218, %v1550
    %v1552 = vpop.f32.mrf.mxu0
    %v1553 = vadd.f32 %v218, %v1552
    %1554 = vmatprep.mubr.f32.mxu0 0.0
    %1555 = vmatmul.mubr.f32.gmra.mxu0 %v230
    %v1556 = vpop.f32.mrf.mxu0
    %v1557 = vadd.f32 %v223, %v1556
    %v1558 = vpop.f32.mrf.mxu0
    %v1559 = vadd.f32 %v223, %v1558
    %1560 = vdwg.mxu0
    %v1561 = vmax.f32 %v396, 0.0
    %v1562 = vmax.f32 %v398, 0.0
    %v1563 = vmax.f32 %v473, 0.0
    %v1564 = vmax.f32 %v475, 0.0
    %v1565 = vmax.f32 %v550, 0.0
    %v1566 = vmax.f32 %v552, 0.0
    %v1567 = vmax.f32 %v627, 0.0
    %v1568 = vmax.f32 %v629, 0.0
    %v1569 = vmax.f32 %v704, 0.0
    %v1570 = vmax.f32 %v706, 0.0
    %v1571 = vmax.f32 %v781, 0.0
    %v1572 = vmax.f32 %v783, 0.0
    %v1573 = vmax.f32 %v858, 0.0
    %v1574 = vmax.f32 %v860, 0.0
    %v1575 = vmax.f32 %v935, 0.0
    %v1576 = vmax.f32 %v937, 0.0
    %v1577 = vmax.f32 %v1012, 0.0
    %v1578 = vmax.f32 %v1014, 0.0
    %v1579 = vmax.f32 %v1089, 0.0
    %v1580 = vmax.f32 %v1091, 0.0
    %v1581 = vmax.f32 %v1166, 0.0
    %v1582 = vmax.f32 %v1168, 0.0
    %v1583 = vmax.f32 %v1243, 0.0
    %v1584 = vmax.f32 %v1245, 0.0
    %v1585 = vmax.f32 %v1320, 0.0
    %v1586 = vmax.f32 %v1322, 0.0
    %v1587 = vmax.f32 %v1397, 0.0
    %v1588 = vmax.f32 %v1399, 0.0
    %v1589 = vmax.f32 %v1474, 0.0
    %v1590 = vmax.f32 %v1476, 0.0
    %v1591 = vmax.f32 %v1551, 0.0
    %v1592 = vmax.f32 %v1553, 0.0
    %v1593 = vmax.f32 %v402, 0.0
    %v1594 = vmax.f32 %v404, 0.0
    %v1595 = vmax.f32 %v479, 0.0
    %v1596 = vmax.f32 %v481, 0.0
    %v1597 = vmax.f32 %v556, 0.0
    %v1598 = vmax.f32 %v558, 0.0
    %v1599 = vmax.f32 %v633, 0.0
    %v1600 = vmax.f32 %v635, 0.0
    %v1601 = vmax.f32 %v710, 0.0
    %v1602 = vmax.f32 %v712, 0.0
    %v1603 = vmax.f32 %v787, 0.0
    %v1604 = vmax.f32 %v789, 0.0
    %v1605 = vmax.f32 %v864, 0.0
    %v1606 = vmax.f32 %v866, 0.0
    %v1607 = vmax.f32 %v941, 0.0
    %v1608 = vmax.f32 %v943, 0.0
    %v1609 = vmax.f32 %v1018, 0.0
    %v1610 = vmax.f32 %v1020, 0.0
    %v1611 = vmax.f32 %v1095, 0.0
    %v1612 = vmax.f32 %v1097, 0.0
    %v1613 = vmax.f32 %v1172, 0.0
    %v1614 = vmax.f32 %v1174, 0.0
    %v1615 = vmax.f32 %v1249, 0.0
    %v1616 = vmax.f32 %v1251, 0.0
    %v1617 = vmax.f32 %v1326, 0.0
    %v1618 = vmax.f32 %v1328, 0.0
    %v1619 = vmax.f32 %v1403, 0.0
    %v1620 = vmax.f32 %v1405, 0.0
    %v1621 = vmax.f32 %v1480, 0.0
    %v1622 = vmax.f32 %v1482, 0.0
    %v1623 = vmax.f32 %v1557, 0.0
    %v1624 = vmax.f32 %v1559, 0.0
    %v1625 = vld [vmem:[%s3] sm:$0xff]
    %v1626 = vld [vmem:[%s3 + $0x8] sm:$0xff]
    %v1627 = vld [vmem:[%s3 + $0x10] sm:$0xff]
    %v1628 = vld [vmem:[%s3 + $0x18] sm:$0xff]
    %v1629 = vld [vmem:[%s3 + $0x20] sm:$0xff]
    %v1630 = vld [vmem:[%s3 + $0x28] sm:$0xff]
    %v1631 = vld [vmem:[%s3 + $0x30] sm:$0xff]
    %v1632 = vld [vmem:[%s3 + $0x38] sm:$0xff]
    %v1633 = vld [vmem:[%s3 + $0x40] sm:$0xff]
    %v1634 = vld [vmem:[%s3 + $0x48] sm:$0xff]
    %v1635 = vld [vmem:[%s3 + $0x50] sm:$0xff]
    %v1636 = vld [vmem:[%s3 + $0x58] sm:$0xff]
    %v1637 = vld [vmem:[%s3 + $0x60] sm:$0xff]
    %v1638 = vld [vmem:[%s3 + $0x68] sm:$0xff]
    %v1639 = vld [vmem:[%s3 + $0x70] sm:$0xff]
    %v1640 = vld [vmem:[%s3 + $0x78] sm:$0xff]
    %v1641 = vld [vmem:[%s3 + $0x80] sm:$0xff]
    %v1642 = vld [vmem:[%s3 + $0x88] sm:$0xff]
    %v1643 = vld [vmem:[%s3 + $0x90] sm:$0xff]
    %v1644 = vld [vmem:[%s3 + $0x98] sm:$0xff]
    %v1645 = vld [vmem:[%s3 + $0xa0] sm:$0xff]
    %v1646 = vld [vmem:[%s3 + $0xa8] sm:$0xff]
    %v1647 = vld [vmem:[%s3 + $0xb0] sm:$0xff]
    %v1648 = vld [vmem:[%s3 + $0xb8] sm:$0xff]
    %v1649 = vld [vmem:[%s3 + $0xc0] sm:$0xff]
    %v1650 = vld [vmem:[%s3 + $0xc8] sm:$0xff]
    %v1651 = vld [vmem:[%s3 + $0xd0] sm:$0xff]
    %v1652 = vld [vmem:[%s3 + $0xd8] sm:$0xff]
    %v1653 = vld [vmem:[%s3 + $0xe0] sm:$0xff]
    %v1654 = vld [vmem:[%s3 + $0xe8] sm:$0xff]
    %v1655 = vld [vmem:[%s3 + $0xf0] sm:$0xff]
    %v1656 = vld [vmem:[%s3 + $0xf8] sm:$0xff]
    %v1657 = vld [vmem:[%s3 + $0x100] sm:$0xff]
    %v1658 = vld [vmem:[%s3 + $0x108] sm:$0xff]
    %v1659 = vld [vmem:[%s3 + $0x110] sm:$0xff]
    %v1660 = vld [vmem:[%s3 + $0x118] sm:$0xff]
    %v1661 = vld [vmem:[%s3 + $0x120] sm:$0xff]
    %v1662 = vld [vmem:[%s3 + $0x128] sm:$0xff]
    %v1663 = vld [vmem:[%s3 + $0x130] sm:$0xff]
    %v1664 = vld [vmem:[%s3 + $0x138] sm:$0xff]
    %v1665 = vld [vmem:[%s3 + $0x140] sm:$0xff]
    %v1666 = vld [vmem:[%s3 + $0x148] sm:$0xff]
    %v1667 = vld [vmem:[%s3 + $0x150] sm:$0xff]
    %v1668 = vld [vmem:[%s3 + $0x158] sm:$0xff]
    %v1669 = vld [vmem:[%s3 + $0x160] sm:$0xff]
    %v1670 = vld [vmem:[%s3 + $0x168] sm:$0xff]
    %v1671 = vld [vmem:[%s3 + $0x170] sm:$0xff]
    %v1672 = vld [vmem:[%s3 + $0x178] sm:$0xff]
    %v1673 = vld [vmem:[%s3 + $0x180] sm:$0xff]
    %v1674 = vld [vmem:[%s3 + $0x188] sm:$0xff]
    %v1675 = vld [vmem:[%s3 + $0x190] sm:$0xff]
    %v1676 = vld [vmem:[%s3 + $0x198] sm:$0xff]
    %v1677 = vld [vmem:[%s3 + $0x1a0] sm:$0xff]
    %v1678 = vld [vmem:[%s3 + $0x1a8] sm:$0xff]
    %v1679 = vld [vmem:[%s3 + $0x1b0] sm:$0xff]
    %v1680 = vld [vmem:[%s3 + $0x1b8] sm:$0xff]
    %v1681 = vld [vmem:[%s3 + $0x1c0] sm:$0xff]
    %v1682 = vld [vmem:[%s3 + $0x1c8] sm:$0xff]
    %v1683 = vld [vmem:[%s3 + $0x1d0] sm:$0xff]
    %v1684 = vld [vmem:[%s3 + $0x1d8] sm:$0xff]
    %v1685 = vld [vmem:[%s3 + $0x1e0] sm:$0xff]
    %v1686 = vld [vmem:[%s3 + $0x1e8] sm:$0xff]
    %v1687 = vld [vmem:[%s3 + $0x1f0] sm:$0xff]
    %v1688 = vld [vmem:[%s3 + $0x1f8] sm:$0xff]
    %1689 = vmatprep.subr.mxu0 0.0
    %1690 = vmatpush1.xpose.msra.mxu0 0.0
    %1691 = vmatprep.subr.mxu0 0.0
    %1692 = vmatpush1.xpose.msra.mxu0 0.0
    %1693 = vmatprep.subr.mxu0 0.0
    %1694 = vmatpush1.xpose.msra.mxu0 0.0
    %1695 = vmatprep.subr.mxu0 0.0
    %1696 = vmatpush1.xpose.msra.mxu0 0.0
    %1697 = vmatprep.subr.mxu0 0.0
    %1698 = vmatpush1.xpose.msra.mxu0 0.0
    %1699 = vmatprep.subr.mxu0 0.0
    %1700 = vmatpush1.xpose.msra.mxu0 0.0
    %1701 = vmatprep.subr.mxu0 0.0
    %1702 = vmatpush1.xpose.msra.mxu0 0.0
    %1703 = vmatprep.subr.mxu0 0.0
    %1704 = vmatpush1.xpose.msra.mxu0 0.0
    %1705 = vmatprep.subr.mxu0 0.0
    %1706 = vmatpush1.xpose.msra.mxu0 0.0
    %1707 = vmatprep.subr.mxu0 0.0
    %1708 = vmatpush1.xpose.msra.mxu0 0.0
    %1709 = vmatprep.subr.mxu0 0.0
    %1710 = vmatpush1.xpose.msra.mxu0 0.0
    %1711 = vmatprep.subr.mxu0 0.0
    %1712 = vmatpush1.xpose.msra.mxu0 0.0
    %1713 = vmatprep.subr.mxu0 0.0
    %1714 = vmatpush1.xpose.msra.mxu0 0.0
    %1715 = vmatprep.subr.mxu0 0.0
    %1716 = vmatpush1.xpose.msra.mxu0 0.0
    %1717 = vmatprep.subr.mxu0 %v1594
    %1718 = vmatpush1.xpose.msra.mxu0 %v1593
    %1719 = vmatprep.subr.mxu0 %v1562
    %1720 = vmatpush1.xpose.msra.mxu0 %v1561
    %1721 = vmatprep.subr.mxu0 0.0
    %1722 = vmatpush2.xpose.msra.mxu0 0.0
    %1723 = vmatprep.subr.mxu0 0.0
    %1724 = vmatpush2.xpose.msra.mxu0 0.0
    %1725 = vmatprep.subr.mxu0 0.0
    %1726 = vmatpush2.xpose.msra.mxu0 0.0
    %1727 = vmatprep.subr.mxu0 0.0
    %1728 = vmatpush2.xpose.msra.mxu0 0.0
    %1729 = vmatprep.subr.mxu0 0.0
    %1730 = vmatpush2.xpose.msra.mxu0 0.0
    %1731 = vmatprep.subr.mxu0 0.0
    %1732 = vmatpush2.xpose.msra.mxu0 0.0
    %1733 = vmatprep.subr.mxu0 0.0
    %1734 = vmatpush2.xpose.msra.mxu0 0.0
    %1735 = vmatprep.subr.mxu0 0.0
    %1736 = vmatpush2.xpose.msra.mxu0 0.0
    %1737 = vmatprep.subr.mxu0 0.0
    %1738 = vmatpush2.xpose.msra.mxu0 0.0
    %1739 = vmatprep.subr.mxu0 0.0
    %1740 = vmatpush2.xpose.msra.mxu0 0.0
    %1741 = vmatprep.subr.mxu0 0.0
    %1742 = vmatpush2.xpose.msra.mxu0 0.0
    %1743 = vmatprep.subr.mxu0 0.0
    %1744 = vmatpush2.xpose.msra.mxu0 0.0
    %1745 = vmatprep.subr.mxu0 0.0
    %1746 = vmatpush2.xpose.msra.mxu0 0.0
    %1747 = vmatprep.subr.mxu0 0.0
    %1748 = vmatpush2.xpose.msra.mxu0 0.0
    %1749 = vmatprep.subr.mxu0 0.0
    %1750 = vmatpush2.xpose.msra.mxu0 0.0
    %1751 = vmatprep.subr.mxu0 0.0
    %1752 = vmatpush2.xpose.msra.mxu0 0.0
    %1753 = vmatprep.mubr.f32.mxu0 %v1626
    %1754 = vmatmul.mubr.f32.gmra.mxu0 %v1625
    %v1755 = vpop.f32.mrf.mxu0
    %v1756 = vadd.f32 0.0, %v1755
    %v1757 = vpop.f32.mrf.mxu0
    %1758 = vmatprep.mubr.f32.mxu0 %v1658
    %1759 = vmatmul.mubr.f32.gmra.mxu0 %v1657
    %v1760 = vpop.f32.mrf.mxu0
    %v1761 = vadd.f32 0.0, %v1760
    %v1762 = vpop.f32.mrf.mxu0
    %1763 = vdwg.mxu0
    %1764 = vmatprep.subr.mxu0 0.0
    %1765 = vmatpush1.xpose.msra.mxu0 0.0
    %1766 = vmatprep.subr.mxu0 0.0
    %1767 = vmatpush1.xpose.msra.mxu0 0.0
    %1768 = vmatprep.subr.mxu0 0.0
    %1769 = vmatpush1.xpose.msra.mxu0 0.0
    %1770 = vmatprep.subr.mxu0 0.0
    %1771 = vmatpush1.xpose.msra.mxu0 0.0
    %1772 = vmatprep.subr.mxu0 0.0
    %1773 = vmatpush1.xpose.msra.mxu0 0.0
    %1774 = vmatprep.subr.mxu0 0.0
    %1775 = vmatpush1.xpose.msra.mxu0 0.0
    %1776 = vmatprep.subr.mxu0 0.0
    %1777 = vmatpush1.xpose.msra.mxu0 0.0
    %1778 = vmatprep.subr.mxu0 0.0
    %1779 = vmatpush1.xpose.msra.mxu0 0.0
    %1780 = vmatprep.subr.mxu0 0.0
    %1781 = vmatpush1.xpose.msra.mxu0 0.0
    %1782 = vmatprep.subr.mxu0 0.0
    %1783 = vmatpush1.xpose.msra.mxu0 0.0
    %1784 = vmatprep.subr.mxu0 0.0
    %1785 = vmatpush1.xpose.msra.mxu0 0.0
    %1786 = vmatprep.subr.mxu0 0.0
    %1787 = vmatpush1.xpose.msra.mxu0 0.0
    %1788 = vmatprep.subr.mxu0 0.0
    %1789 = vmatpush1.xpose.msra.mxu0 0.0
    %1790 = vmatprep.subr.mxu0 0.0
    %1791 = vmatpush1.xpose.msra.mxu0 0.0
    %1792 = vmatprep.subr.mxu0 %v1596
    %1793 = vmatpush1.xpose.msra.mxu0 %v1595
    %1794 = vmatprep.subr.mxu0 %v1564
    %1795 = vmatpush1.xpose.msra.mxu0 %v1563
    %1796 = vmatprep.subr.mxu0 0.0
    %1797 = vmatpush2.xpose.msra.mxu0 0.0
    %1798 = vmatprep.subr.mxu0 0.0
    %1799 = vmatpush2.xpose.msra.mxu0 0.0
    %1800 = vmatprep.subr.mxu0 0.0
    %1801 = vmatpush2.xpose.msra.mxu0 0.0
    %1802 = vmatprep.subr.mxu0 0.0
    %1803 = vmatpush2.xpose.msra.mxu0 0.0
    %1804 = vmatprep.subr.mxu0 0.0
    %1805 = vmatpush2.xpose.msra.mxu0 0.0
    %1806 = vmatprep.subr.mxu0 0.0
    %1807 = vmatpush2.xpose.msra.mxu0 0.0
    %1808 = vmatprep.subr.mxu0 0.0
    %1809 = vmatpush2.xpose.msra.mxu0 0.0
    %1810 = vmatprep.subr.mxu0 0.0
    %1811 = vmatpush2.xpose.msra.mxu0 0.0
    %1812 = vmatprep.subr.mxu0 0.0
    %1813 = vmatpush2.xpose.msra.mxu0 0.0
    %1814 = vmatprep.subr.mxu0 0.0
    %1815 = vmatpush2.xpose.msra.mxu0 0.0
    %1816 = vmatprep.subr.mxu0 0.0
    %1817 = vmatpush2.xpose.msra.mxu0 0.0
    %1818 = vmatprep.subr.mxu0 0.0
    %1819 = vmatpush2.xpose.msra.mxu0 0.0
    %1820 = vmatprep.subr.mxu0 0.0
    %1821 = vmatpush2.xpose.msra.mxu0 0.0
    %1822 = vmatprep.subr.mxu0 0.0
    %1823 = vmatpush2.xpose.msra.mxu0 0.0
    %1824 = vmatprep.subr.mxu0 0.0
    %1825 = vmatpush2.xpose.msra.mxu0 0.0
    %1826 = vmatprep.subr.mxu0 0.0
    %1827 = vmatpush2.xpose.msra.mxu0 0.0
    %1828 = vmatprep.mubr.f32.mxu0 %v1628
    %1829 = vmatmul.mubr.f32.gmra.mxu0 %v1627
    %v1830 = vpop.f32.mrf.mxu0
    %v1831 = vadd.f32 %v1756, %v1830
    %v1832 = vpop.f32.mrf.mxu0
    %1833 = vmatprep.mubr.f32.mxu0 %v1660
    %1834 = vmatmul.mubr.f32.gmra.mxu0 %v1659
    %v1835 = vpop.f32.mrf.mxu0
    %v1836 = vadd.f32 %v1761, %v1835
    %v1837 = vpop.f32.mrf.mxu0
    %1838 = vdwg.mxu0
    %1839 = vmatprep.subr.mxu0 0.0
    %1840 = vmatpush1.xpose.msra.mxu0 0.0
    %1841 = vmatprep.subr.mxu0 0.0
    %1842 = vmatpush1.xpose.msra.mxu0 0.0
    %1843 = vmatprep.subr.mxu0 0.0
    %1844 = vmatpush1.xpose.msra.mxu0 0.0
    %1845 = vmatprep.subr.mxu0 0.0
    %1846 = vmatpush1.xpose.msra.mxu0 0.0
    %1847 = vmatprep.subr.mxu0 0.0
    %1848 = vmatpush1.xpose.msra.mxu0 0.0
    %1849 = vmatprep.subr.mxu0 0.0
    %1850 = vmatpush1.xpose.msra.mxu0 0.0
    %1851 = vmatprep.subr.mxu0 0.0
    %1852 = vmatpush1.xpose.msra.mxu0 0.0
    %1853 = vmatprep.subr.mxu0 0.0
    %1854 = vmatpush1.xpose.msra.mxu0 0.0
    %1855 = vmatprep.subr.mxu0 0.0
    %1856 = vmatpush1.xpose.msra.mxu0 0.0
    %1857 = vmatprep.subr.mxu0 0.0
    %1858 = vmatpush1.xpose.msra.mxu0 0.0
    %1859 = vmatprep.subr.mxu0 0.0
    %1860 = vmatpush1.xpose.msra.mxu0 0.0
    %1861 = vmatprep.subr.mxu0 0.0
    %1862 = vmatpush1.xpose.msra.mxu0 0.0
    %1863 = vmatprep.subr.mxu0 0.0
    %1864 = vmatpush1.xpose.msra.mxu0 0.0
    %1865 = vmatprep.subr.mxu0 0.0
    %1866 = vmatpush1.xpose.msra.mxu0 0.0
    %1867 = vmatprep.subr.mxu0 %v1598
    %1868 = vmatpush1.xpose.msra.mxu0 %v1597
    %1869 = vmatprep.subr.mxu0 %v1566
    %1870 = vmatpush1.xpose.msra.mxu0 %v1565
    %1871 = vmatprep.subr.mxu0 0.0
    %1872 = vmatpush2.xpose.msra.mxu0 0.0
    %1873 = vmatprep.subr.mxu0 0.0
    %1874 = vmatpush2.xpose.msra.mxu0 0.0
    %1875 = vmatprep.subr.mxu0 0.0
    %1876 = vmatpush2.xpose.msra.mxu0 0.0
    %1877 = vmatprep.subr.mxu0 0.0
    %1878 = vmatpush2.xpose.msra.mxu0 0.0
    %1879 = vmatprep.subr.mxu0 0.0
    %1880 = vmatpush2.xpose.msra.mxu0 0.0
    %1881 = vmatprep.subr.mxu0 0.0
    %1882 = vmatpush2.xpose.msra.mxu0 0.0
    %1883 = vmatprep.subr.mxu0 0.0
    %1884 = vmatpush2.xpose.msra.mxu0 0.0
    %1885 = vmatprep.subr.mxu0 0.0
    %1886 = vmatpush2.xpose.msra.mxu0 0.0
    %1887 = vmatprep.subr.mxu0 0.0
    %1888 = vmatpush2.xpose.msra.mxu0 0.0
    %1889 = vmatprep.subr.mxu0 0.0
    %1890 = vmatpush2.xpose.msra.mxu0 0.0
    %1891 = vmatprep.subr.mxu0 0.0
    %1892 = vmatpush2.xpose.msra.mxu0 0.0
    %1893 = vmatprep.subr.mxu0 0.0
    %1894 = vmatpush2.xpose.msra.mxu0 0.0
    %1895 = vmatprep.subr.mxu0 0.0
    %1896 = vmatpush2.xpose.msra.mxu0 0.0
    %1897 = vmatprep.subr.mxu0 0.0
    %1898 = vmatpush2.xpose.msra.mxu0 0.0
    %1899 = vmatprep.subr.mxu0 0.0
    %1900 = vmatpush2.xpose.msra.mxu0 0.0
    %1901 = vmatprep.subr.mxu0 0.0
    %1902 = vmatpush2.xpose.msra.mxu0 0.0
    %1903 = vmatprep.mubr.f32.mxu0 %v1630
    %1904 = vmatmul.mubr.f32.gmra.mxu0 %v1629
    %v1905 = vpop.f32.mrf.mxu0
    %v1906 = vadd.f32 %v1831, %v1905
    %v1907 = vpop.f32.mrf.mxu0
    %1908 = vmatprep.mubr.f32.mxu0 %v1662
    %1909 = vmatmul.mubr.f32.gmra.mxu0 %v1661
    %v1910 = vpop.f32.mrf.mxu0
    %v1911 = vadd.f32 %v1836, %v1910
    %v1912 = vpop.f32.mrf.mxu0
    %1913 = vdwg.mxu0
    %1914 = vmatprep.subr.mxu0 0.0
    %1915 = vmatpush1.xpose.msra.mxu0 0.0
    %1916 = vmatprep.subr.mxu0 0.0
    %1917 = vmatpush1.xpose.msra.mxu0 0.0
    %1918 = vmatprep.subr.mxu0 0.0
    %1919 = vmatpush1.xpose.msra.mxu0 0.0
    %1920 = vmatprep.subr.mxu0 0.0
    %1921 = vmatpush1.xpose.msra.mxu0 0.0
    %1922 = vmatprep.subr.mxu0 0.0
    %1923 = vmatpush1.xpose.msra.mxu0 0.0
    %1924 = vmatprep.subr.mxu0 0.0
    %1925 = vmatpush1.xpose.msra.mxu0 0.0
    %1926 = vmatprep.subr.mxu0 0.0
    %1927 = vmatpush1.xpose.msra.mxu0 0.0
    %1928 = vmatprep.subr.mxu0 0.0
    %1929 = vmatpush1.xpose.msra.mxu0 0.0
    %1930 = vmatprep.subr.mxu0 0.0
    %1931 = vmatpush1.xpose.msra.mxu0 0.0
    %1932 = vmatprep.subr.mxu0 0.0
    %1933 = vmatpush1.xpose.msra.mxu0 0.0
    %1934 = vmatprep.subr.mxu0 0.0
    %1935 = vmatpush1.xpose.msra.mxu0 0.0
    %1936 = vmatprep.subr.mxu0 0.0
    %1937 = vmatpush1.xpose.msra.mxu0 0.0
    %1938 = vmatprep.subr.mxu0 0.0
    %1939 = vmatpush1.xpose.msra.mxu0 0.0
    %1940 = vmatprep.subr.mxu0 0.0
    %1941 = vmatpush1.xpose.msra.mxu0 0.0
    %1942 = vmatprep.subr.mxu0 %v1600
    %1943 = vmatpush1.xpose.msra.mxu0 %v1599
    %1944 = vmatprep.subr.mxu0 %v1568
    %1945 = vmatpush1.xpose.msra.mxu0 %v1567
    %1946 = vmatprep.subr.mxu0 0.0
    %1947 = vmatpush2.xpose.msra.mxu0 0.0
    %1948 = vmatprep.subr.mxu0 0.0
    %1949 = vmatpush2.xpose.msra.mxu0 0.0
    %1950 = vmatprep.subr.mxu0 0.0
    %1951 = vmatpush2.xpose.msra.mxu0 0.0
    %1952 = vmatprep.subr.mxu0 0.0
    %1953 = vmatpush2.xpose.msra.mxu0 0.0
    %1954 = vmatprep.subr.mxu0 0.0
    %1955 = vmatpush2.xpose.msra.mxu0 0.0
    %1956 = vmatprep.subr.mxu0 0.0
    %1957 = vmatpush2.xpose.msra.mxu0 0.0
    %1958 = vmatprep.subr.mxu0 0.0
    %1959 = vmatpush2.xpose.msra.mxu0 0.0
    %1960 = vmatprep.subr.mxu0 0.0
    %1961 = vmatpush2.xpose.msra.mxu0 0.0
    %1962 = vmatprep.subr.mxu0 0.0
    %1963 = vmatpush2.xpose.msra.mxu0 0.0
    %1964 = vmatprep.subr.mxu0 0.0
    %1965 = vmatpush2.xpose.msra.mxu0 0.0
    %1966 = vmatprep.subr.mxu0 0.0
    %1967 = vmatpush2.xpose.msra.mxu0 0.0
    %1968 = vmatprep.subr.mxu0 0.0
    %1969 = vmatpush2.xpose.msra.mxu0 0.0
    %1970 = vmatprep.subr.mxu0 0.0
    %1971 = vmatpush2.xpose.msra.mxu0 0.0
    %1972 = vmatprep.subr.mxu0 0.0
    %1973 = vmatpush2.xpose.msra.mxu0 0.0
    %1974 = vmatprep.subr.mxu0 0.0
    %1975 = vmatpush2.xpose.msra.mxu0 0.0
    %1976 = vmatprep.subr.mxu0 0.0
    %1977 = vmatpush2.xpose.msra.mxu0 0.0
    %1978 = vmatprep.mubr.f32.mxu0 %v1632
    %1979 = vmatmul.mubr.f32.gmra.mxu0 %v1631
    %v1980 = vpop.f32.mrf.mxu0
    %v1981 = vadd.f32 %v1906, %v1980
    %v1982 = vpop.f32.mrf.mxu0
    %1983 = vmatprep.mubr.f32.mxu0 %v1664
    %1984 = vmatmul.mubr.f32.gmra.mxu0 %v1663
    %v1985 = vpop.f32.mrf.mxu0
    %v1986 = vadd.f32 %v1911, %v1985
    %v1987 = vpop.f32.mrf.mxu0
    %1988 = vdwg.mxu0
    %1989 = vmatprep.subr.mxu0 0.0
    %1990 = vmatpush1.xpose.msra.mxu0 0.0
    %1991 = vmatprep.subr.mxu0 0.0
    %1992 = vmatpush1.xpose.msra.mxu0 0.0
    %1993 = vmatprep.subr.mxu0 0.0
    %1994 = vmatpush1.xpose.msra.mxu0 0.0
    %1995 = vmatprep.subr.mxu0 0.0
    %1996 = vmatpush1.xpose.msra.mxu0 0.0
    %1997 = vmatprep.subr.mxu0 0.0
    %1998 = vmatpush1.xpose.msra.mxu0 0.0
    %1999 = vmatprep.subr.mxu0 0.0
    %2000 = vmatpush1.xpose.msra.mxu0 0.0
    %2001 = vmatprep.subr.mxu0 0.0
    %2002 = vmatpush1.xpose.msra.mxu0 0.0
    %2003 = vmatprep.subr.mxu0 0.0
    %2004 = vmatpush1.xpose.msra.mxu0 0.0
    %2005 = vmatprep.subr.mxu0 0.0
    %2006 = vmatpush1.xpose.msra.mxu0 0.0
    %2007 = vmatprep.subr.mxu0 0.0
    %2008 = vmatpush1.xpose.msra.mxu0 0.0
    %2009 = vmatprep.subr.mxu0 0.0
    %2010 = vmatpush1.xpose.msra.mxu0 0.0
    %2011 = vmatprep.subr.mxu0 0.0
    %2012 = vmatpush1.xpose.msra.mxu0 0.0
    %2013 = vmatprep.subr.mxu0 0.0
    %2014 = vmatpush1.xpose.msra.mxu0 0.0
    %2015 = vmatprep.subr.mxu0 0.0
    %2016 = vmatpush1.xpose.msra.mxu0 0.0
    %2017 = vmatprep.subr.mxu0 %v1602
    %2018 = vmatpush1.xpose.msra.mxu0 %v1601
    %2019 = vmatprep.subr.mxu0 %v1570
    %2020 = vmatpush1.xpose.msra.mxu0 %v1569
    %2021 = vmatprep.subr.mxu0 0.0
    %2022 = vmatpush2.xpose.msra.mxu0 0.0
    %2023 = vmatprep.subr.mxu0 0.0
    %2024 = vmatpush2.xpose.msra.mxu0 0.0
    %2025 = vmatprep.subr.mxu0 0.0
    %2026 = vmatpush2.xpose.msra.mxu0 0.0
    %2027 = vmatprep.subr.mxu0 0.0
    %2028 = vmatpush2.xpose.msra.mxu0 0.0
    %2029 = vmatprep.subr.mxu0 0.0
    %2030 = vmatpush2.xpose.msra.mxu0 0.0
    %2031 = vmatprep.subr.mxu0 0.0
    %2032 = vmatpush2.xpose.msra.mxu0 0.0
    %2033 = vmatprep.subr.mxu0 0.0
    %2034 = vmatpush2.xpose.msra.mxu0 0.0
    %2035 = vmatprep.subr.mxu0 0.0
    %2036 = vmatpush2.xpose.msra.mxu0 0.0
    %2037 = vmatprep.subr.mxu0 0.0
    %2038 = vmatpush2.xpose.msra.mxu0 0.0
    %2039 = vmatprep.subr.mxu0 0.0
    %2040 = vmatpush2.xpose.msra.mxu0 0.0
    %2041 = vmatprep.subr.mxu0 0.0
    %2042 = vmatpush2.xpose.msra.mxu0 0.0
    %2043 = vmatprep.subr.mxu0 0.0
    %2044 = vmatpush2.xpose.msra.mxu0 0.0
    %2045 = vmatprep.subr.mxu0 0.0
    %2046 = vmatpush2.xpose.msra.mxu0 0.0
    %2047 = vmatprep.subr.mxu0 0.0
    %2048 = vmatpush2.xpose.msra.mxu0 0.0
    %2049 = vmatprep.subr.mxu0 0.0
    %2050 = vmatpush2.xpose.msra.mxu0 0.0
    %2051 = vmatprep.subr.mxu0 0.0
    %2052 = vmatpush2.xpose.msra.mxu0 0.0
    %2053 = vmatprep.mubr.f32.mxu0 %v1634
    %2054 = vmatmul.mubr.f32.gmra.mxu0 %v1633
    %v2055 = vpop.f32.mrf.mxu0
    %v2056 = vadd.f32 %v1981, %v2055
    %v2057 = vpop.f32.mrf.mxu0
    %2058 = vmatprep.mubr.f32.mxu0 %v1666
    %2059 = vmatmul.mubr.f32.gmra.mxu0 %v1665
    %v2060 = vpop.f32.mrf.mxu0
    %v2061 = vadd.f32 %v1986, %v2060
    %v2062 = vpop.f32.mrf.mxu0
    %2063 = vdwg.mxu0
    %2064 = vmatprep.subr.mxu0 0.0
    %2065 = vmatpush1.xpose.msra.mxu0 0.0
    %2066 = vmatprep.subr.mxu0 0.0
    %2067 = vmatpush1.xpose.msra.mxu0 0.0
    %2068 = vmatprep.subr.mxu0 0.0
    %2069 = vmatpush1.xpose.msra.mxu0 0.0
    %2070 = vmatprep.subr.mxu0 0.0
    %2071 = vmatpush1.xpose.msra.mxu0 0.0
    %2072 = vmatprep.subr.mxu0 0.0
    %2073 = vmatpush1.xpose.msra.mxu0 0.0
    %2074 = vmatprep.subr.mxu0 0.0
    %2075 = vmatpush1.xpose.msra.mxu0 0.0
    %2076 = vmatprep.subr.mxu0 0.0
    %2077 = vmatpush1.xpose.msra.mxu0 0.0
    %2078 = vmatprep.subr.mxu0 0.0
    %2079 = vmatpush1.xpose.msra.mxu0 0.0
    %2080 = vmatprep.subr.mxu0 0.0
    %2081 = vmatpush1.xpose.msra.mxu0 0.0
    %2082 = vmatprep.subr.mxu0 0.0
    %2083 = vmatpush1.xpose.msra.mxu0 0.0
    %2084 = vmatprep.subr.mxu0 0.0
    %2085 = vmatpush1.xpose.msra.mxu0 0.0
    %2086 = vmatprep.subr.mxu0 0.0
    %2087 = vmatpush1.xpose.msra.mxu0 0.0
    %2088 = vmatprep.subr.mxu0 0.0
    %2089 = vmatpush1.xpose.msra.mxu0 0.0
    %2090 = vmatprep.subr.mxu0 0.0
    %2091 = vmatpush1.xpose.msra.mxu0 0.0
    %2092 = vmatprep.subr.mxu0 %v1604
    %2093 = vmatpush1.xpose.msra.mxu0 %v1603
    %2094 = vmatprep.subr.mxu0 %v1572
    %2095 = vmatpush1.xpose.msra.mxu0 %v1571
    %2096 = vmatprep.subr.mxu0 0.0
    %2097 = vmatpush2.xpose.msra.mxu0 0.0
    %2098 = vmatprep.subr.mxu0 0.0
    %2099 = vmatpush2.xpose.msra.mxu0 0.0
    %2100 = vmatprep.subr.mxu0 0.0
    %2101 = vmatpush2.xpose.msra.mxu0 0.0
    %2102 = vmatprep.subr.mxu0 0.0
    %2103 = vmatpush2.xpose.msra.mxu0 0.0
    %2104 = vmatprep.subr.mxu0 0.0
    %2105 = vmatpush2.xpose.msra.mxu0 0.0
    %2106 = vmatprep.subr.mxu0 0.0
    %2107 = vmatpush2.xpose.msra.mxu0 0.0
    %2108 = vmatprep.subr.mxu0 0.0
    %2109 = vmatpush2.xpose.msra.mxu0 0.0
    %2110 = vmatprep.subr.mxu0 0.0
    %2111 = vmatpush2.xpose.msra.mxu0 0.0
    %2112 = vmatprep.subr.mxu0 0.0
    %2113 = vmatpush2.xpose.msra.mxu0 0.0
    %2114 = vmatprep.subr.mxu0 0.0
    %2115 = vmatpush2.xpose.msra.mxu0 0.0
    %2116 = vmatprep.subr.mxu0 0.0
    %2117 = vmatpush2.xpose.msra.mxu0 0.0
    %2118 = vmatprep.subr.mxu0 0.0
    %2119 = vmatpush2.xpose.msra.mxu0 0.0
    %2120 = vmatprep.subr.mxu0 0.0
    %2121 = vmatpush2.xpose.msra.mxu0 0.0
    %2122 = vmatprep.subr.mxu0 0.0
    %2123 = vmatpush2.xpose.msra.mxu0 0.0
    %2124 = vmatprep.subr.mxu0 0.0
    %2125 = vmatpush2.xpose.msra.mxu0 0.0
    %2126 = vmatprep.subr.mxu0 0.0
    %2127 = vmatpush2.xpose.msra.mxu0 0.0
    %2128 = vmatprep.mubr.f32.mxu0 %v1636
    %2129 = vmatmul.mubr.f32.gmra.mxu0 %v1635
    %v2130 = vpop.f32.mrf.mxu0
    %v2131 = vadd.f32 %v2056, %v2130
    %v2132 = vpop.f32.mrf.mxu0
    %2133 = vmatprep.mubr.f32.mxu0 %v1668
    %2134 = vmatmul.mubr.f32.gmra.mxu0 %v1667
    %v2135 = vpop.f32.mrf.mxu0
    %v2136 = vadd.f32 %v2061, %v2135
    %v2137 = vpop.f32.mrf.mxu0
    %2138 = vdwg.mxu0
    %2139 = vmatprep.subr.mxu0 0.0
    %2140 = vmatpush1.xpose.msra.mxu0 0.0
    %2141 = vmatprep.subr.mxu0 0.0
    %2142 = vmatpush1.xpose.msra.mxu0 0.0
    %2143 = vmatprep.subr.mxu0 0.0
    %2144 = vmatpush1.xpose.msra.mxu0 0.0
    %2145 = vmatprep.subr.mxu0 0.0
    %2146 = vmatpush1.xpose.msra.mxu0 0.0
    %2147 = vmatprep.subr.mxu0 0.0
    %2148 = vmatpush1.xpose.msra.mxu0 0.0
    %2149 = vmatprep.subr.mxu0 0.0
    %2150 = vmatpush1.xpose.msra.mxu0 0.0
    %2151 = vmatprep.subr.mxu0 0.0
    %2152 = vmatpush1.xpose.msra.mxu0 0.0
    %2153 = vmatprep.subr.mxu0 0.0
    %2154 = vmatpush1.xpose.msra.mxu0 0.0
    %2155 = vmatprep.subr.mxu0 0.0
    %2156 = vmatpush1.xpose.msra.mxu0 0.0
    %2157 = vmatprep.subr.mxu0 0.0
    %2158 = vmatpush1.xpose.msra.mxu0 0.0
    %2159 = vmatprep.subr.mxu0 0.0
    %2160 = vmatpush1.xpose.msra.mxu0 0.0
    %2161 = vmatprep.subr.mxu0 0.0
    %2162 = vmatpush1.xpose.msra.mxu0 0.0
    %2163 = vmatprep.subr.mxu0 0.0
    %2164 = vmatpush1.xpose.msra.mxu0 0.0
    %2165 = vmatprep.subr.mxu0 0.0
    %2166 = vmatpush1.xpose.msra.mxu0 0.0
    %2167 = vmatprep.subr.mxu0 %v1606
    %2168 = vmatpush1.xpose.msra.mxu0 %v1605
    %2169 = vmatprep.subr.mxu0 %v1574
    %2170 = vmatpush1.xpose.msra.mxu0 %v1573
    %2171 = vmatprep.subr.mxu0 0.0
    %2172 = vmatpush2.xpose.msra.mxu0 0.0
    %2173 = vmatprep.subr.mxu0 0.0
    %2174 = vmatpush2.xpose.msra.mxu0 0.0
    %2175 = vmatprep.subr.mxu0 0.0
    %2176 = vmatpush2.xpose.msra.mxu0 0.0
    %2177 = vmatprep.subr.mxu0 0.0
    %2178 = vmatpush2.xpose.msra.mxu0 0.0
    %2179 = vmatprep.subr.mxu0 0.0
    %2180 = vmatpush2.xpose.msra.mxu0 0.0
    %2181 = vmatprep.subr.mxu0 0.0
    %2182 = vmatpush2.xpose.msra.mxu0 0.0
    %2183 = vmatprep.subr.mxu0 0.0
    %2184 = vmatpush2.xpose.msra.mxu0 0.0
    %2185 = vmatprep.subr.mxu0 0.0
    %2186 = vmatpush2.xpose.msra.mxu0 0.0
    %2187 = vmatprep.subr.mxu0 0.0
    %2188 = vmatpush2.xpose.msra.mxu0 0.0
    %2189 = vmatprep.subr.mxu0 0.0
    %2190 = vmatpush2.xpose.msra.mxu0 0.0
    %2191 = vmatprep.subr.mxu0 0.0
    %2192 = vmatpush2.xpose.msra.mxu0 0.0
    %2193 = vmatprep.subr.mxu0 0.0
    %2194 = vmatpush2.xpose.msra.mxu0 0.0
    %2195 = vmatprep.subr.mxu0 0.0
    %2196 = vmatpush2.xpose.msra.mxu0 0.0
    %2197 = vmatprep.subr.mxu0 0.0
    %2198 = vmatpush2.xpose.msra.mxu0 0.0
    %2199 = vmatprep.subr.mxu0 0.0
    %2200 = vmatpush2.xpose.msra.mxu0 0.0
    %2201 = vmatprep.subr.mxu0 0.0
    %2202 = vmatpush2.xpose.msra.mxu0 0.0
    %2203 = vmatprep.mubr.f32.mxu0 %v1638
    %2204 = vmatmul.mubr.f32.gmra.mxu0 %v1637
    %v2205 = vpop.f32.mrf.mxu0
    %v2206 = vadd.f32 %v2131, %v2205
    %v2207 = vpop.f32.mrf.mxu0
    %2208 = vmatprep.mubr.f32.mxu0 %v1670
    %2209 = vmatmul.mubr.f32.gmra.mxu0 %v1669
    %v2210 = vpop.f32.mrf.mxu0
    %v2211 = vadd.f32 %v2136, %v2210
    %v2212 = vpop.f32.mrf.mxu0
    %2213 = vdwg.mxu0
    %2214 = vmatprep.subr.mxu0 0.0
    %2215 = vmatpush1.xpose.msra.mxu0 0.0
    %2216 = vmatprep.subr.mxu0 0.0
    %2217 = vmatpush1.xpose.msra.mxu0 0.0
    %2218 = vmatprep.subr.mxu0 0.0
    %2219 = vmatpush1.xpose.msra.mxu0 0.0
    %2220 = vmatprep.subr.mxu0 0.0
    %2221 = vmatpush1.xpose.msra.mxu0 0.0
    %2222 = vmatprep.subr.mxu0 0.0
    %2223 = vmatpush1.xpose.msra.mxu0 0.0
    %2224 = vmatprep.subr.mxu0 0.0
    %2225 = vmatpush1.xpose.msra.mxu0 0.0
    %2226 = vmatprep.subr.mxu0 0.0
    %2227 = vmatpush1.xpose.msra.mxu0 0.0
    %2228 = vmatprep.subr.mxu0 0.0
    %2229 = vmatpush1.xpose.msra.mxu0 0.0
    %2230 = vmatprep.subr.mxu0 0.0
    %2231 = vmatpush1.xpose.msra.mxu0 0.0
    %2232 = vmatprep.subr.mxu0 0.0
    %2233 = vmatpush1.xpose.msra.mxu0 0.0
    %2234 = vmatprep.subr.mxu0 0.0
    %2235 = vmatpush1.xpose.msra.mxu0 0.0
    %2236 = vmatprep.subr.mxu0 0.0
    %2237 = vmatpush1.xpose.msra.mxu0 0.0
    %2238 = vmatprep.subr.mxu0 0.0
    %2239 = vmatpush1.xpose.msra.mxu0 0.0
    %2240 = vmatprep.subr.mxu0 0.0
    %2241 = vmatpush1.xpose.msra.mxu0 0.0
    %2242 = vmatprep.subr.mxu0 %v1608
    %2243 = vmatpush1.xpose.msra.mxu0 %v1607
    %2244 = vmatprep.subr.mxu0 %v1576
    %2245 = vmatpush1.xpose.msra.mxu0 %v1575
    %2246 = vmatprep.subr.mxu0 0.0
    %2247 = vmatpush2.xpose.msra.mxu0 0.0
    %2248 = vmatprep.subr.mxu0 0.0
    %2249 = vmatpush2.xpose.msra.mxu0 0.0
    %2250 = vmatprep.subr.mxu0 0.0
    %2251 = vmatpush2.xpose.msra.mxu0 0.0
    %2252 = vmatprep.subr.mxu0 0.0
    %2253 = vmatpush2.xpose.msra.mxu0 0.0
    %2254 = vmatprep.subr.mxu0 0.0
    %2255 = vmatpush2.xpose.msra.mxu0 0.0
    %2256 = vmatprep.subr.mxu0 0.0
    %2257 = vmatpush2.xpose.msra.mxu0 0.0
    %2258 = vmatprep.subr.mxu0 0.0
    %2259 = vmatpush2.xpose.msra.mxu0 0.0
    %2260 = vmatprep.subr.mxu0 0.0
    %2261 = vmatpush2.xpose.msra.mxu0 0.0
    %2262 = vmatprep.subr.mxu0 0.0
    %2263 = vmatpush2.xpose.msra.mxu0 0.0
    %2264 = vmatprep.subr.mxu0 0.0
    %2265 = vmatpush2.xpose.msra.mxu0 0.0
    %2266 = vmatprep.subr.mxu0 0.0
    %2267 = vmatpush2.xpose.msra.mxu0 0.0
    %2268 = vmatprep.subr.mxu0 0.0
    %2269 = vmatpush2.xpose.msra.mxu0 0.0
    %2270 = vmatprep.subr.mxu0 0.0
    %2271 = vmatpush2.xpose.msra.mxu0 0.0
    %2272 = vmatprep.subr.mxu0 0.0
    %2273 = vmatpush2.xpose.msra.mxu0 0.0
    %2274 = vmatprep.subr.mxu0 0.0
    %2275 = vmatpush2.xpose.msra.mxu0 0.0
    %2276 = vmatprep.subr.mxu0 0.0
    %2277 = vmatpush2.xpose.msra.mxu0 0.0
    %2278 = vmatprep.mubr.f32.mxu0 %v1640
    %2279 = vmatmul.mubr.f32.gmra.mxu0 %v1639
    %v2280 = vpop.f32.mrf.mxu0
    %v2281 = vadd.f32 %v2206, %v2280
    %v2282 = vpop.f32.mrf.mxu0
    %2283 = vmatprep.mubr.f32.mxu0 %v1672
    %2284 = vmatmul.mubr.f32.gmra.mxu0 %v1671
    %v2285 = vpop.f32.mrf.mxu0
    %v2286 = vadd.f32 %v2211, %v2285
    %v2287 = vpop.f32.mrf.mxu0
    %2288 = vdwg.mxu0
    %2289 = vmatprep.subr.mxu0 0.0
    %2290 = vmatpush1.xpose.msra.mxu0 0.0
    %2291 = vmatprep.subr.mxu0 0.0
    %2292 = vmatpush1.xpose.msra.mxu0 0.0
    %2293 = vmatprep.subr.mxu0 0.0
    %2294 = vmatpush1.xpose.msra.mxu0 0.0
    %2295 = vmatprep.subr.mxu0 0.0
    %2296 = vmatpush1.xpose.msra.mxu0 0.0
    %2297 = vmatprep.subr.mxu0 0.0
    %2298 = vmatpush1.xpose.msra.mxu0 0.0
    %2299 = vmatprep.subr.mxu0 0.0
    %2300 = vmatpush1.xpose.msra.mxu0 0.0
    %2301 = vmatprep.subr.mxu0 0.0
    %2302 = vmatpush1.xpose.msra.mxu0 0.0
    %2303 = vmatprep.subr.mxu0 0.0
    %2304 = vmatpush1.xpose.msra.mxu0 0.0
    %2305 = vmatprep.subr.mxu0 0.0
    %2306 = vmatpush1.xpose.msra.mxu0 0.0
    %2307 = vmatprep.subr.mxu0 0.0
    %2308 = vmatpush1.xpose.msra.mxu0 0.0
    %2309 = vmatprep.subr.mxu0 0.0
    %2310 = vmatpush1.xpose.msra.mxu0 0.0
    %2311 = vmatprep.subr.mxu0 0.0
    %2312 = vmatpush1.xpose.msra.mxu0 0.0
    %2313 = vmatprep.subr.mxu0 0.0
    %2314 = vmatpush1.xpose.msra.mxu0 0.0
    %2315 = vmatprep.subr.mxu0 0.0
    %2316 = vmatpush1.xpose.msra.mxu0 0.0
    %2317 = vmatprep.subr.mxu0 %v1610
    %2318 = vmatpush1.xpose.msra.mxu0 %v1609
    %2319 = vmatprep.subr.mxu0 %v1578
    %2320 = vmatpush1.xpose.msra.mxu0 %v1577
    %2321 = vmatprep.subr.mxu0 0.0
    %2322 = vmatpush2.xpose.msra.mxu0 0.0
    %2323 = vmatprep.subr.mxu0 0.0
    %2324 = vmatpush2.xpose.msra.mxu0 0.0
    %2325 = vmatprep.subr.mxu0 0.0
    %2326 = vmatpush2.xpose.msra.mxu0 0.0
    %2327 = vmatprep.subr.mxu0 0.0
    %2328 = vmatpush2.xpose.msra.mxu0 0.0
    %2329 = vmatprep.subr.mxu0 0.0
    %2330 = vmatpush2.xpose.msra.mxu0 0.0
    %2331 = vmatprep.subr.mxu0 0.0
    %2332 = vmatpush2.xpose.msra.mxu0 0.0
    %2333 = vmatprep.subr.mxu0 0.0
    %2334 = vmatpush2.xpose.msra.mxu0 0.0
    %2335 = vmatprep.subr.mxu0 0.0
    %2336 = vmatpush2.xpose.msra.mxu0 0.0
    %2337 = vmatprep.subr.mxu0 0.0
    %2338 = vmatpush2.xpose.msra.mxu0 0.0
    %2339 = vmatprep.subr.mxu0 0.0
    %2340 = vmatpush2.xpose.msra.mxu0 0.0
    %2341 = vmatprep.subr.mxu0 0.0
    %2342 = vmatpush2.xpose.msra.mxu0 0.0
    %2343 = vmatprep.subr.mxu0 0.0
    %2344 = vmatpush2.xpose.msra.mxu0 0.0
    %2345 = vmatprep.subr.mxu0 0.0
    %2346 = vmatpush2.xpose.msra.mxu0 0.0
    %2347 = vmatprep.subr.mxu0 0.0
    %2348 = vmatpush2.xpose.msra.mxu0 0.0
    %2349 = vmatprep.subr.mxu0 0.0
    %2350 = vmatpush2.xpose.msra.mxu0 0.0
    %2351 = vmatprep.subr.mxu0 0.0
    %2352 = vmatpush2.xpose.msra.mxu0 0.0
    %2353 = vmatprep.mubr.f32.mxu0 %v1642
    %2354 = vmatmul.mubr.f32.gmra.mxu0 %v1641
    %v2355 = vpop.f32.mrf.mxu0
    %v2356 = vadd.f32 %v2281, %v2355
    %v2357 = vpop.f32.mrf.mxu0
    %2358 = vmatprep.mubr.f32.mxu0 %v1674
    %2359 = vmatmul.mubr.f32.gmra.mxu0 %v1673
    %v2360 = vpop.f32.mrf.mxu0
    %v2361 = vadd.f32 %v2286, %v2360
    %v2362 = vpop.f32.mrf.mxu0
    %2363 = vdwg.mxu0
    %2364 = vmatprep.subr.mxu0 0.0
    %2365 = vmatpush1.xpose.msra.mxu0 0.0
    %2366 = vmatprep.subr.mxu0 0.0
    %2367 = vmatpush1.xpose.msra.mxu0 0.0
    %2368 = vmatprep.subr.mxu0 0.0
    %2369 = vmatpush1.xpose.msra.mxu0 0.0
    %2370 = vmatprep.subr.mxu0 0.0
    %2371 = vmatpush1.xpose.msra.mxu0 0.0
    %2372 = vmatprep.subr.mxu0 0.0
    %2373 = vmatpush1.xpose.msra.mxu0 0.0
    %2374 = vmatprep.subr.mxu0 0.0
    %2375 = vmatpush1.xpose.msra.mxu0 0.0
    %2376 = vmatprep.subr.mxu0 0.0
    %2377 = vmatpush1.xpose.msra.mxu0 0.0
    %2378 = vmatprep.subr.mxu0 0.0
    %2379 = vmatpush1.xpose.msra.mxu0 0.0
    %2380 = vmatprep.subr.mxu0 0.0
    %2381 = vmatpush1.xpose.msra.mxu0 0.0
    %2382 = vmatprep.subr.mxu0 0.0
    %2383 = vmatpush1.xpose.msra.mxu0 0.0
    %2384 = vmatprep.subr.mxu0 0.0
    %2385 = vmatpush1.xpose.msra.mxu0 0.0
    %2386 = vmatprep.subr.mxu0 0.0
    %2387 = vmatpush1.xpose.msra.mxu0 0.0
    %2388 = vmatprep.subr.mxu0 0.0
    %2389 = vmatpush1.xpose.msra.mxu0 0.0
    %2390 = vmatprep.subr.mxu0 0.0
    %2391 = vmatpush1.xpose.msra.mxu0 0.0
    %2392 = vmatprep.subr.mxu0 %v1612
    %2393 = vmatpush1.xpose.msra.mxu0 %v1611
    %2394 = vmatprep.subr.mxu0 %v1580
    %2395 = vmatpush1.xpose.msra.mxu0 %v1579
    %2396 = vmatprep.subr.mxu0 0.0
    %2397 = vmatpush2.xpose.msra.mxu0 0.0
    %2398 = vmatprep.subr.mxu0 0.0
    %2399 = vmatpush2.xpose.msra.mxu0 0.0
    %2400 = vmatprep.subr.mxu0 0.0
    %2401 = vmatpush2.xpose.msra.mxu0 0.0
    %2402 = vmatprep.subr.mxu0 0.0
    %2403 = vmatpush2.xpose.msra.mxu0 0.0
    %2404 = vmatprep.subr.mxu0 0.0
    %2405 = vmatpush2.xpose.msra.mxu0 0.0
    %2406 = vmatprep.subr.mxu0 0.0
    %2407 = vmatpush2.xpose.msra.mxu0 0.0
    %2408 = vmatprep.subr.mxu0 0.0
    %2409 = vmatpush2.xpose.msra.mxu0 0.0
    %2410 = vmatprep.subr.mxu0 0.0
    %2411 = vmatpush2.xpose.msra.mxu0 0.0
    %2412 = vmatprep.subr.mxu0 0.0
    %2413 = vmatpush2.xpose.msra.mxu0 0.0
    %2414 = vmatprep.subr.mxu0 0.0
    %2415 = vmatpush2.xpose.msra.mxu0 0.0
    %2416 = vmatprep.subr.mxu0 0.0
    %2417 = vmatpush2.xpose.msra.mxu0 0.0
    %2418 = vmatprep.subr.mxu0 0.0
    %2419 = vmatpush2.xpose.msra.mxu0 0.0
    %2420 = vmatprep.subr.mxu0 0.0
    %2421 = vmatpush2.xpose.msra.mxu0 0.0
    %2422 = vmatprep.subr.mxu0 0.0
    %2423 = vmatpush2.xpose.msra.mxu0 0.0
    %2424 = vmatprep.subr.mxu0 0.0
    %2425 = vmatpush2.xpose.msra.mxu0 0.0
    %2426 = vmatprep.subr.mxu0 0.0
    %2427 = vmatpush2.xpose.msra.mxu0 0.0
    %2428 = vmatprep.mubr.f32.mxu0 %v1644
    %2429 = vmatmul.mubr.f32.gmra.mxu0 %v1643
    %v2430 = vpop.f32.mrf.mxu0
    %v2431 = vadd.f32 %v2356, %v2430
    %v2432 = vpop.f32.mrf.mxu0
    %2433 = vmatprep.mubr.f32.mxu0 %v1676
    %2434 = vmatmul.mubr.f32.gmra.mxu0 %v1675
    %v2435 = vpop.f32.mrf.mxu0
    %v2436 = vadd.f32 %v2361, %v2435
    %v2437 = vpop.f32.mrf.mxu0
    %2438 = vdwg.mxu0
    %2439 = vmatprep.subr.mxu0 0.0
    %2440 = vmatpush1.xpose.msra.mxu0 0.0
    %2441 = vmatprep.subr.mxu0 0.0
    %2442 = vmatpush1.xpose.msra.mxu0 0.0
    %2443 = vmatprep.subr.mxu0 0.0
    %2444 = vmatpush1.xpose.msra.mxu0 0.0
    %2445 = vmatprep.subr.mxu0 0.0
    %2446 = vmatpush1.xpose.msra.mxu0 0.0
    %2447 = vmatprep.subr.mxu0 0.0
    %2448 = vmatpush1.xpose.msra.mxu0 0.0
    %2449 = vmatprep.subr.mxu0 0.0
    %2450 = vmatpush1.xpose.msra.mxu0 0.0
    %2451 = vmatprep.subr.mxu0 0.0
    %2452 = vmatpush1.xpose.msra.mxu0 0.0
    %2453 = vmatprep.subr.mxu0 0.0
    %2454 = vmatpush1.xpose.msra.mxu0 0.0
    %2455 = vmatprep.subr.mxu0 0.0
    %2456 = vmatpush1.xpose.msra.mxu0 0.0
    %2457 = vmatprep.subr.mxu0 0.0
    %2458 = vmatpush1.xpose.msra.mxu0 0.0
    %2459 = vmatprep.subr.mxu0 0.0
    %2460 = vmatpush1.xpose.msra.mxu0 0.0
    %2461 = vmatprep.subr.mxu0 0.0
    %2462 = vmatpush1.xpose.msra.mxu0 0.0
    %2463 = vmatprep.subr.mxu0 0.0
    %2464 = vmatpush1.xpose.msra.mxu0 0.0
    %2465 = vmatprep.subr.mxu0 0.0
    %2466 = vmatpush1.xpose.msra.mxu0 0.0
    %2467 = vmatprep.subr.mxu0 %v1614
    %2468 = vmatpush1.xpose.msra.mxu0 %v1613
    %2469 = vmatprep.subr.mxu0 %v1582
    %2470 = vmatpush1.xpose.msra.mxu0 %v1581
    %2471 = vmatprep.subr.mxu0 0.0
    %2472 = vmatpush2.xpose.msra.mxu0 0.0
    %2473 = vmatprep.subr.mxu0 0.0
    %2474 = vmatpush2.xpose.msra.mxu0 0.0
    %2475 = vmatprep.subr.mxu0 0.0
    %2476 = vmatpush2.xpose.msra.mxu0 0.0
    %2477 = vmatprep.subr.mxu0 0.0
    %2478 = vmatpush2.xpose.msra.mxu0 0.0
    %2479 = vmatprep.subr.mxu0 0.0
    %2480 = vmatpush2.xpose.msra.mxu0 0.0
    %2481 = vmatprep.subr.mxu0 0.0
    %2482 = vmatpush2.xpose.msra.mxu0 0.0
    %2483 = vmatprep.subr.mxu0 0.0
    %2484 = vmatpush2.xpose.msra.mxu0 0.0
    %2485 = vmatprep.subr.mxu0 0.0
    %2486 = vmatpush2.xpose.msra.mxu0 0.0
    %2487 = vmatprep.subr.mxu0 0.0
    %2488 = vmatpush2.xpose.msra.mxu0 0.0
    %2489 = vmatprep.subr.mxu0 0.0
    %2490 = vmatpush2.xpose.msra.mxu0 0.0
    %2491 = vmatprep.subr.mxu0 0.0
    %2492 = vmatpush2.xpose.msra.mxu0 0.0
    %2493 = vmatprep.subr.mxu0 0.0
    %2494 = vmatpush2.xpose.msra.mxu0 0.0
    %2495 = vmatprep.subr.mxu0 0.0
    %2496 = vmatpush2.xpose.msra.mxu0 0.0
    %2497 = vmatprep.subr.mxu0 0.0
    %2498 = vmatpush2.xpose.msra.mxu0 0.0
    %2499 = vmatprep.subr.mxu0 0.0
    %2500 = vmatpush2.xpose.msra.mxu0 0.0
    %2501 = vmatprep.subr.mxu0 0.0
    %2502 = vmatpush2.xpose.msra.mxu0 0.0
    %2503 = vmatprep.mubr.f32.mxu0 %v1646
    %2504 = vmatmul.mubr.f32.gmra.mxu0 %v1645
    %v2505 = vpop.f32.mrf.mxu0
    %v2506 = vadd.f32 %v2431, %v2505
    %v2507 = vpop.f32.mrf.mxu0
    %2508 = vmatprep.mubr.f32.mxu0 %v1678
    %2509 = vmatmul.mubr.f32.gmra.mxu0 %v1677
    %v2510 = vpop.f32.mrf.mxu0
    %v2511 = vadd.f32 %v2436, %v2510
    %v2512 = vpop.f32.mrf.mxu0
    %2513 = vdwg.mxu0
    %2514 = vmatprep.subr.mxu0 0.0
    %2515 = vmatpush1.xpose.msra.mxu0 0.0
    %2516 = vmatprep.subr.mxu0 0.0
    %2517 = vmatpush1.xpose.msra.mxu0 0.0
    %2518 = vmatprep.subr.mxu0 0.0
    %2519 = vmatpush1.xpose.msra.mxu0 0.0
    %2520 = vmatprep.subr.mxu0 0.0
    %2521 = vmatpush1.xpose.msra.mxu0 0.0
    %2522 = vmatprep.subr.mxu0 0.0
    %2523 = vmatpush1.xpose.msra.mxu0 0.0
    %2524 = vmatprep.subr.mxu0 0.0
    %2525 = vmatpush1.xpose.msra.mxu0 0.0
    %2526 = vmatprep.subr.mxu0 0.0
    %2527 = vmatpush1.xpose.msra.mxu0 0.0
    %2528 = vmatprep.subr.mxu0 0.0
    %2529 = vmatpush1.xpose.msra.mxu0 0.0
    %2530 = vmatprep.subr.mxu0 0.0
    %2531 = vmatpush1.xpose.msra.mxu0 0.0
    %2532 = vmatprep.subr.mxu0 0.0
    %2533 = vmatpush1.xpose.msra.mxu0 0.0
    %2534 = vmatprep.subr.mxu0 0.0
    %2535 = vmatpush1.xpose.msra.mxu0 0.0
    %2536 = vmatprep.subr.mxu0 0.0
    %2537 = vmatpush1.xpose.msra.mxu0 0.0
    %2538 = vmatprep.subr.mxu0 0.0
    %2539 = vmatpush1.xpose.msra.mxu0 0.0
    %2540 = vmatprep.subr.mxu0 0.0
    %2541 = vmatpush1.xpose.msra.mxu0 0.0
    %2542 = vmatprep.subr.mxu0 %v1616
    %2543 = vmatpush1.xpose.msra.mxu0 %v1615
    %2544 = vmatprep.subr.mxu0 %v1584
    %2545 = vmatpush1.xpose.msra.mxu0 %v1583
    %2546 = vmatprep.subr.mxu0 0.0
    %2547 = vmatpush2.xpose.msra.mxu0 0.0
    %2548 = vmatprep.subr.mxu0 0.0
    %2549 = vmatpush2.xpose.msra.mxu0 0.0
    %2550 = vmatprep.subr.mxu0 0.0
    %2551 = vmatpush2.xpose.msra.mxu0 0.0
    %2552 = vmatprep.subr.mxu0 0.0
    %2553 = vmatpush2.xpose.msra.mxu0 0.0
    %2554 = vmatprep.subr.mxu0 0.0
    %2555 = vmatpush2.xpose.msra.mxu0 0.0
    %2556 = vmatprep.subr.mxu0 0.0
    %2557 = vmatpush2.xpose.msra.mxu0 0.0
    %2558 = vmatprep.subr.mxu0 0.0
    %2559 = vmatpush2.xpose.msra.mxu0 0.0
    %2560 = vmatprep.subr.mxu0 0.0
    %2561 = vmatpush2.xpose.msra.mxu0 0.0
    %2562 = vmatprep.subr.mxu0 0.0
    %2563 = vmatpush2.xpose.msra.mxu0 0.0
    %2564 = vmatprep.subr.mxu0 0.0
    %2565 = vmatpush2.xpose.msra.mxu0 0.0
    %2566 = vmatprep.subr.mxu0 0.0
    %2567 = vmatpush2.xpose.msra.mxu0 0.0
    %2568 = vmatprep.subr.mxu0 0.0
    %2569 = vmatpush2.xpose.msra.mxu0 0.0
    %2570 = vmatprep.subr.mxu0 0.0
    %2571 = vmatpush2.xpose.msra.mxu0 0.0
    %2572 = vmatprep.subr.mxu0 0.0
    %2573 = vmatpush2.xpose.msra.mxu0 0.0
    %2574 = vmatprep.subr.mxu0 0.0
    %2575 = vmatpush2.xpose.msra.mxu0 0.0
    %2576 = vmatprep.subr.mxu0 0.0
    %2577 = vmatpush2.xpose.msra.mxu0 0.0
    %2578 = vmatprep.mubr.f32.mxu0 %v1648
    %2579 = vmatmul.mubr.f32.gmra.mxu0 %v1647
    %v2580 = vpop.f32.mrf.mxu0
    %v2581 = vadd.f32 %v2506, %v2580
    %v2582 = vpop.f32.mrf.mxu0
    %2583 = vmatprep.mubr.f32.mxu0 %v1680
    %2584 = vmatmul.mubr.f32.gmra.mxu0 %v1679
    %v2585 = vpop.f32.mrf.mxu0
    %v2586 = vadd.f32 %v2511, %v2585
    %v2587 = vpop.f32.mrf.mxu0
    %2588 = vdwg.mxu0
    %2589 = vmatprep.subr.mxu0 0.0
    %2590 = vmatpush1.xpose.msra.mxu0 0.0
    %2591 = vmatprep.subr.mxu0 0.0
    %2592 = vmatpush1.xpose.msra.mxu0 0.0
    %2593 = vmatprep.subr.mxu0 0.0
    %2594 = vmatpush1.xpose.msra.mxu0 0.0
    %2595 = vmatprep.subr.mxu0 0.0
    %2596 = vmatpush1.xpose.msra.mxu0 0.0
    %2597 = vmatprep.subr.mxu0 0.0
    %2598 = vmatpush1.xpose.msra.mxu0 0.0
    %2599 = vmatprep.subr.mxu0 0.0
    %2600 = vmatpush1.xpose.msra.mxu0 0.0
    %2601 = vmatprep.subr.mxu0 0.0
    %2602 = vmatpush1.xpose.msra.mxu0 0.0
    %2603 = vmatprep.subr.mxu0 0.0
    %2604 = vmatpush1.xpose.msra.mxu0 0.0
    %2605 = vmatprep.subr.mxu0 0.0
    %2606 = vmatpush1.xpose.msra.mxu0 0.0
    %2607 = vmatprep.subr.mxu0 0.0
    %2608 = vmatpush1.xpose.msra.mxu0 0.0
    %2609 = vmatprep.subr.mxu0 0.0
    %2610 = vmatpush1.xpose.msra.mxu0 0.0
    %2611 = vmatprep.subr.mxu0 0.0
    %2612 = vmatpush1.xpose.msra.mxu0 0.0
    %2613 = vmatprep.subr.mxu0 0.0
    %2614 = vmatpush1.xpose.msra.mxu0 0.0
    %2615 = vmatprep.subr.mxu0 0.0
    %2616 = vmatpush1.xpose.msra.mxu0 0.0
    %2617 = vmatprep.subr.mxu0 %v1618
    %2618 = vmatpush1.xpose.msra.mxu0 %v1617
    %2619 = vmatprep.subr.mxu0 %v1586
    %2620 = vmatpush1.xpose.msra.mxu0 %v1585
    %2621 = vmatprep.subr.mxu0 0.0
    %2622 = vmatpush2.xpose.msra.mxu0 0.0
    %2623 = vmatprep.subr.mxu0 0.0
    %2624 = vmatpush2.xpose.msra.mxu0 0.0
    %2625 = vmatprep.subr.mxu0 0.0
    %2626 = vmatpush2.xpose.msra.mxu0 0.0
    %2627 = vmatprep.subr.mxu0 0.0
    %2628 = vmatpush2.xpose.msra.mxu0 0.0
    %2629 = vmatprep.subr.mxu0 0.0
    %2630 = vmatpush2.xpose.msra.mxu0 0.0
    %2631 = vmatprep.subr.mxu0 0.0
    %2632 = vmatpush2.xpose.msra.mxu0 0.0
    %2633 = vmatprep.subr.mxu0 0.0
    %2634 = vmatpush2.xpose.msra.mxu0 0.0
    %2635 = vmatprep.subr.mxu0 0.0
    %2636 = vmatpush2.xpose.msra.mxu0 0.0
    %2637 = vmatprep.subr.mxu0 0.0
    %2638 = vmatpush2.xpose.msra.mxu0 0.0
    %2639 = vmatprep.subr.mxu0 0.0
    %2640 = vmatpush2.xpose.msra.mxu0 0.0
    %2641 = vmatprep.subr.mxu0 0.0
    %2642 = vmatpush2.xpose.msra.mxu0 0.0
    %2643 = vmatprep.subr.mxu0 0.0
    %2644 = vmatpush2.xpose.msra.mxu0 0.0
    %2645 = vmatprep.subr.mxu0 0.0
    %2646 = vmatpush2.xpose.msra.mxu0 0.0
    %2647 = vmatprep.subr.mxu0 0.0
    %2648 = vmatpush2.xpose.msra.mxu0 0.0
    %2649 = vmatprep.subr.mxu0 0.0
    %2650 = vmatpush2.xpose.msra.mxu0 0.0
    %2651 = vmatprep.subr.mxu0 0.0
    %2652 = vmatpush2.xpose.msra.mxu0 0.0
    %2653 = vmatprep.mubr.f32.mxu0 %v1650
    %2654 = vmatmul.mubr.f32.gmra.mxu0 %v1649
    %v2655 = vpop.f32.mrf.mxu0
    %v2656 = vadd.f32 %v2581, %v2655
    %v2657 = vpop.f32.mrf.mxu0
    %2658 = vmatprep.mubr.f32.mxu0 %v1682
    %2659 = vmatmul.mubr.f32.gmra.mxu0 %v1681
    %v2660 = vpop.f32.mrf.mxu0
    %v2661 = vadd.f32 %v2586, %v2660
    %v2662 = vpop.f32.mrf.mxu0
    %2663 = vdwg.mxu0
    %2664 = vmatprep.subr.mxu0 0.0
    %2665 = vmatpush1.xpose.msra.mxu0 0.0
    %2666 = vmatprep.subr.mxu0 0.0
    %2667 = vmatpush1.xpose.msra.mxu0 0.0
    %2668 = vmatprep.subr.mxu0 0.0
    %2669 = vmatpush1.xpose.msra.mxu0 0.0
    %2670 = vmatprep.subr.mxu0 0.0
    %2671 = vmatpush1.xpose.msra.mxu0 0.0
    %2672 = vmatprep.subr.mxu0 0.0
    %2673 = vmatpush1.xpose.msra.mxu0 0.0
    %2674 = vmatprep.subr.mxu0 0.0
    %2675 = vmatpush1.xpose.msra.mxu0 0.0
    %2676 = vmatprep.subr.mxu0 0.0
    %2677 = vmatpush1.xpose.msra.mxu0 0.0
    %2678 = vmatprep.subr.mxu0 0.0
    %2679 = vmatpush1.xpose.msra.mxu0 0.0
    %2680 = vmatprep.subr.mxu0 0.0
    %2681 = vmatpush1.xpose.msra.mxu0 0.0
    %2682 = vmatprep.subr.mxu0 0.0
    %2683 = vmatpush1.xpose.msra.mxu0 0.0
    %2684 = vmatprep.subr.mxu0 0.0
    %2685 = vmatpush1.xpose.msra.mxu0 0.0
    %2686 = vmatprep.subr.mxu0 0.0
    %2687 = vmatpush1.xpose.msra.mxu0 0.0
    %2688 = vmatprep.subr.mxu0 0.0
    %2689 = vmatpush1.xpose.msra.mxu0 0.0
    %2690 = vmatprep.subr.mxu0 0.0
    %2691 = vmatpush1.xpose.msra.mxu0 0.0
    %2692 = vmatprep.subr.mxu0 %v1620
    %2693 = vmatpush1.xpose.msra.mxu0 %v1619
    %2694 = vmatprep.subr.mxu0 %v1588
    %2695 = vmatpush1.xpose.msra.mxu0 %v1587
    %2696 = vmatprep.subr.mxu0 0.0
    %2697 = vmatpush2.xpose.msra.mxu0 0.0
    %2698 = vmatprep.subr.mxu0 0.0
    %2699 = vmatpush2.xpose.msra.mxu0 0.0
    %2700 = vmatprep.subr.mxu0 0.0
    %2701 = vmatpush2.xpose.msra.mxu0 0.0
    %2702 = vmatprep.subr.mxu0 0.0
    %2703 = vmatpush2.xpose.msra.mxu0 0.0
    %2704 = vmatprep.subr.mxu0 0.0
    %2705 = vmatpush2.xpose.msra.mxu0 0.0
    %2706 = vmatprep.subr.mxu0 0.0
    %2707 = vmatpush2.xpose.msra.mxu0 0.0
    %2708 = vmatprep.subr.mxu0 0.0
    %2709 = vmatpush2.xpose.msra.mxu0 0.0
    %2710 = vmatprep.subr.mxu0 0.0
    %2711 = vmatpush2.xpose.msra.mxu0 0.0
    %2712 = vmatprep.subr.mxu0 0.0
    %2713 = vmatpush2.xpose.msra.mxu0 0.0
    %2714 = vmatprep.subr.mxu0 0.0
    %2715 = vmatpush2.xpose.msra.mxu0 0.0
    %2716 = vmatprep.subr.mxu0 0.0
    %2717 = vmatpush2.xpose.msra.mxu0 0.0
    %2718 = vmatprep.subr.mxu0 0.0
    %2719 = vmatpush2.xpose.msra.mxu0 0.0
    %2720 = vmatprep.subr.mxu0 0.0
    %2721 = vmatpush2.xpose.msra.mxu0 0.0
    %2722 = vmatprep.subr.mxu0 0.0
    %2723 = vmatpush2.xpose.msra.mxu0 0.0
    %2724 = vmatprep.subr.mxu0 0.0
    %2725 = vmatpush2.xpose.msra.mxu0 0.0
    %2726 = vmatprep.subr.mxu0 0.0
    %2727 = vmatpush2.xpose.msra.mxu0 0.0
    %2728 = vmatprep.mubr.f32.mxu0 %v1652
    %2729 = vmatmul.mubr.f32.gmra.mxu0 %v1651
    %v2730 = vpop.f32.mrf.mxu0
    %v2731 = vadd.f32 %v2656, %v2730
    %v2732 = vpop.f32.mrf.mxu0
    %2733 = vmatprep.mubr.f32.mxu0 %v1684
    %2734 = vmatmul.mubr.f32.gmra.mxu0 %v1683
    %v2735 = vpop.f32.mrf.mxu0
    %v2736 = vadd.f32 %v2661, %v2735
    %v2737 = vpop.f32.mrf.mxu0
    %2738 = vdwg.mxu0
    %2739 = vmatprep.subr.mxu0 0.0
    %2740 = vmatpush1.xpose.msra.mxu0 0.0
    %2741 = vmatprep.subr.mxu0 0.0
    %2742 = vmatpush1.xpose.msra.mxu0 0.0
    %2743 = vmatprep.subr.mxu0 0.0
    %2744 = vmatpush1.xpose.msra.mxu0 0.0
    %2745 = vmatprep.subr.mxu0 0.0
    %2746 = vmatpush1.xpose.msra.mxu0 0.0
    %2747 = vmatprep.subr.mxu0 0.0
    %2748 = vmatpush1.xpose.msra.mxu0 0.0
    %2749 = vmatprep.subr.mxu0 0.0
    %2750 = vmatpush1.xpose.msra.mxu0 0.0
    %2751 = vmatprep.subr.mxu0 0.0
    %2752 = vmatpush1.xpose.msra.mxu0 0.0
    %2753 = vmatprep.subr.mxu0 0.0
    %2754 = vmatpush1.xpose.msra.mxu0 0.0
    %2755 = vmatprep.subr.mxu0 0.0
    %2756 = vmatpush1.xpose.msra.mxu0 0.0
    %2757 = vmatprep.subr.mxu0 0.0
    %2758 = vmatpush1.xpose.msra.mxu0 0.0
    %2759 = vmatprep.subr.mxu0 0.0
    %2760 = vmatpush1.xpose.msra.mxu0 0.0
    %2761 = vmatprep.subr.mxu0 0.0
    %2762 = vmatpush1.xpose.msra.mxu0 0.0
    %2763 = vmatprep.subr.mxu0 0.0
    %2764 = vmatpush1.xpose.msra.mxu0 0.0
    %2765 = vmatprep.subr.mxu0 0.0
    %2766 = vmatpush1.xpose.msra.mxu0 0.0
    %2767 = vmatprep.subr.mxu0 %v1622
    %2768 = vmatpush1.xpose.msra.mxu0 %v1621
    %2769 = vmatprep.subr.mxu0 %v1590
    %2770 = vmatpush1.xpose.msra.mxu0 %v1589
    %2771 = vmatprep.subr.mxu0 0.0
    %2772 = vmatpush2.xpose.msra.mxu0 0.0
    %2773 = vmatprep.subr.mxu0 0.0
    %2774 = vmatpush2.xpose.msra.mxu0 0.0
    %2775 = vmatprep.subr.mxu0 0.0
    %2776 = vmatpush2.xpose.msra.mxu0 0.0
    %2777 = vmatprep.subr.mxu0 0.0
    %2778 = vmatpush2.xpose.msra.mxu0 0.0
    %2779 = vmatprep.subr.mxu0 0.0
    %2780 = vmatpush2.xpose.msra.mxu0 0.0
    %2781 = vmatprep.subr.mxu0 0.0
    %2782 = vmatpush2.xpose.msra.mxu0 0.0
    %2783 = vmatprep.subr.mxu0 0.0
    %2784 = vmatpush2.xpose.msra.mxu0 0.0
    %2785 = vmatprep.subr.mxu0 0.0
    %2786 = vmatpush2.xpose.msra.mxu0 0.0
    %2787 = vmatprep.subr.mxu0 0.0
    %2788 = vmatpush2.xpose.msra.mxu0 0.0
    %2789 = vmatprep.subr.mxu0 0.0
    %2790 = vmatpush2.xpose.msra.mxu0 0.0
    %2791 = vmatprep.subr.mxu0 0.0
    %2792 = vmatpush2.xpose.msra.mxu0 0.0
    %2793 = vmatprep.subr.mxu0 0.0
    %2794 = vmatpush2.xpose.msra.mxu0 0.0
    %2795 = vmatprep.subr.mxu0 0.0
    %2796 = vmatpush2.xpose.msra.mxu0 0.0
    %2797 = vmatprep.subr.mxu0 0.0
    %2798 = vmatpush2.xpose.msra.mxu0 0.0
    %2799 = vmatprep.subr.mxu0 0.0
    %2800 = vmatpush2.xpose.msra.mxu0 0.0
    %2801 = vmatprep.subr.mxu0 0.0
    %2802 = vmatpush2.xpose.msra.mxu0 0.0
    %2803 = vmatprep.mubr.f32.mxu0 %v1654
    %2804 = vmatmul.mubr.f32.gmra.mxu0 %v1653
    %v2805 = vpop.f32.mrf.mxu0
    %v2806 = vadd.f32 %v2731, %v2805
    %v2807 = vpop.f32.mrf.mxu0
    %2808 = vmatprep.mubr.f32.mxu0 %v1686
    %2809 = vmatmul.mubr.f32.gmra.mxu0 %v1685
    %v2810 = vpop.f32.mrf.mxu0
    %v2811 = vadd.f32 %v2736, %v2810
    %v2812 = vpop.f32.mrf.mxu0
    %2813 = vdwg.mxu0
    %2814 = vmatprep.subr.mxu0 0.0
    %2815 = vmatpush1.xpose.msra.mxu0 0.0
    %2816 = vmatprep.subr.mxu0 0.0
    %2817 = vmatpush1.xpose.msra.mxu0 0.0
    %2818 = vmatprep.subr.mxu0 0.0
    %2819 = vmatpush1.xpose.msra.mxu0 0.0
    %2820 = vmatprep.subr.mxu0 0.0
    %2821 = vmatpush1.xpose.msra.mxu0 0.0
    %2822 = vmatprep.subr.mxu0 0.0
    %2823 = vmatpush1.xpose.msra.mxu0 0.0
    %2824 = vmatprep.subr.mxu0 0.0
    %2825 = vmatpush1.xpose.msra.mxu0 0.0
    %2826 = vmatprep.subr.mxu0 0.0
    %2827 = vmatpush1.xpose.msra.mxu0 0.0
    %2828 = vmatprep.subr.mxu0 0.0
    %2829 = vmatpush1.xpose.msra.mxu0 0.0
    %2830 = vmatprep.subr.mxu0 0.0
    %2831 = vmatpush1.xpose.msra.mxu0 0.0
    %2832 = vmatprep.subr.mxu0 0.0
    %2833 = vmatpush1.xpose.msra.mxu0 0.0
    %2834 = vmatprep.subr.mxu0 0.0
    %2835 = vmatpush1.xpose.msra.mxu0 0.0
    %2836 = vmatprep.subr.mxu0 0.0
    %2837 = vmatpush1.xpose.msra.mxu0 0.0
    %2838 = vmatprep.subr.mxu0 0.0
    %2839 = vmatpush1.xpose.msra.mxu0 0.0
    %2840 = vmatprep.subr.mxu0 0.0
    %2841 = vmatpush1.xpose.msra.mxu0 0.0
    %2842 = vmatprep.subr.mxu0 %v1624
    %2843 = vmatpush1.xpose.msra.mxu0 %v1623
    %2844 = vmatprep.subr.mxu0 %v1592
    %2845 = vmatpush1.xpose.msra.mxu0 %v1591
    %2846 = vmatprep.subr.mxu0 0.0
    %2847 = vmatpush2.xpose.msra.mxu0 0.0
    %2848 = vmatprep.subr.mxu0 0.0
    %2849 = vmatpush2.xpose.msra.mxu0 0.0
    %2850 = vmatprep.subr.mxu0 0.0
    %2851 = vmatpush2.xpose.msra.mxu0 0.0
    %2852 = vmatprep.subr.mxu0 0.0
    %2853 = vmatpush2.xpose.msra.mxu0 0.0
    %2854 = vmatprep.subr.mxu0 0.0
    %2855 = vmatpush2.xpose.msra.mxu0 0.0
    %2856 = vmatprep.subr.mxu0 0.0
    %2857 = vmatpush2.xpose.msra.mxu0 0.0
    %2858 = vmatprep.subr.mxu0 0.0
    %2859 = vmatpush2.xpose.msra.mxu0 0.0
    %2860 = vmatprep.subr.mxu0 0.0
    %2861 = vmatpush2.xpose.msra.mxu0 0.0
    %2862 = vmatprep.subr.mxu0 0.0
    %2863 = vmatpush2.xpose.msra.mxu0 0.0
    %2864 = vmatprep.subr.mxu0 0.0
    %2865 = vmatpush2.xpose.msra.mxu0 0.0
    %2866 = vmatprep.subr.mxu0 0.0
    %2867 = vmatpush2.xpose.msra.mxu0 0.0
    %2868 = vmatprep.subr.mxu0 0.0
    %2869 = vmatpush2.xpose.msra.mxu0 0.0
    %2870 = vmatprep.subr.mxu0 0.0
    %2871 = vmatpush2.xpose.msra.mxu0 0.0
    %2872 = vmatprep.subr.mxu0 0.0
    %2873 = vmatpush2.xpose.msra.mxu0 0.0
    %2874 = vmatprep.subr.mxu0 0.0
    %2875 = vmatpush2.xpose.msra.mxu0 0.0
    %2876 = vmatprep.subr.mxu0 0.0
    %2877 = vmatpush2.xpose.msra.mxu0 0.0
    %2878 = vmatprep.mubr.f32.mxu0 %v1656
    %2879 = vmatmul.mubr.f32.gmra.mxu0 %v1655
    %v2880 = vpop.f32.mrf.mxu0
    %v2881 = vadd.f32 %v2806, %v2880
    %v2882 = vpop.f32.mrf.mxu0
    %2883 = vmatprep.mubr.f32.mxu0 %v1688
    %2884 = vmatmul.mubr.f32.gmra.mxu0 %v1687
    %v2885 = vpop.f32.mrf.mxu0
    %v2886 = vadd.f32 %v2811, %v2885
    %v2887 = vpop.f32.mrf.mxu0
    %2888 = vdwg.mxu0
    %v2889 = vld [vmem:[%s4] sm:$0xff]
    %v2890 = vld [vmem:[%s4 + $0x8] sm:$0xff]
    %v2891 = vld [vmem:[%s5] sm:$0x1]
    %v2893 = vlaneseq
    %v2894 = vshrl.u32 %v2893, 7
    %v2895 = vsub.s32 0, %v2894
    %v2896 = vrot.slane %v2891, %v2895
    %vm2898 = vcmask 130048
    %v2900 = vsel %vm2898, %v2881, 0
    %v2903 = vsel %vm2898, %v2886, 0
    %2905 = vmatprep.subr.mxu0 0.0
    %2906 = vmatpush1.msra.mxu0 0.0
    %2907 = vmatprep.subr.mxu0 0.0
    %2908 = vmatpush1.msra.mxu0 0.0
    %2909 = vmatprep.subr.mxu0 0.0
    %2910 = vmatpush1.msra.mxu0 0.0
    %2911 = vmatprep.subr.mxu0 0.0
    %2912 = vmatpush1.msra.mxu0 0.0
    %2913 = vmatprep.subr.mxu0 0.0
    %2914 = vmatpush1.msra.mxu0 0.0
    %2915 = vmatprep.subr.mxu0 0.0
    %2916 = vmatpush1.msra.mxu0 0.0
    %2917 = vmatprep.subr.mxu0 0.0
    %2918 = vmatpush1.msra.mxu0 0.0
    %2919 = vmatprep.subr.mxu0 0.0
    %2920 = vmatpush1.msra.mxu0 0.0
    %2921 = vmatprep.subr.mxu0 0.0
    %2922 = vmatpush1.msra.mxu0 0.0
    %2923 = vmatprep.subr.mxu0 0.0
    %2924 = vmatpush1.msra.mxu0 0.0
    %2925 = vmatprep.subr.mxu0 0.0
    %2926 = vmatpush1.msra.mxu0 0.0
    %2927 = vmatprep.subr.mxu0 0.0
    %2928 = vmatpush1.msra.mxu0 0.0
    %2929 = vmatprep.subr.mxu0 0.0
    %2930 = vmatpush1.msra.mxu0 0.0
    %2931 = vmatprep.subr.mxu0 0.0
    %2932 = vmatpush1.msra.mxu0 0.0
    %2933 = vmatprep.subr.mxu0 0.0
    %2934 = vmatpush1.msra.mxu0 %v2890
    %2935 = vmatprep.subr.mxu0 0.0
    %2936 = vmatpush1.msra.mxu0 %v2889
    %2937 = vmatprep.subr.mxu0 0.0
    %2938 = vmatpush2.msra.mxu0 0.0
    %2939 = vmatprep.subr.mxu0 0.0
    %2940 = vmatpush2.msra.mxu0 0.0
    %2941 = vmatprep.subr.mxu0 0.0
    %2942 = vmatpush2.msra.mxu0 0.0
    %2943 = vmatprep.subr.mxu0 0.0
    %2944 = vmatpush2.msra.mxu0 0.0
    %2945 = vmatprep.subr.mxu0 0.0
    %2946 = vmatpush2.msra.mxu0 0.0
    %2947 = vmatprep.subr.mxu0 0.0
    %2948 = vmatpush2.msra.mxu0 0.0
    %2949 = vmatprep.subr.mxu0 0.0
    %2950 = vmatpush2.msra.mxu0 0.0
    %2951 = vmatprep.subr.mxu0 0.0
    %2952 = vmatpush2.msra.mxu0 0.0
    %2953 = vmatprep.subr.mxu0 0.0
    %2954 = vmatpush2.msra.mxu0 0.0
    %2955 = vmatprep.subr.mxu0 0.0
    %2956 = vmatpush2.msra.mxu0 0.0
    %2957 = vmatprep.subr.mxu0 0.0
    %2958 = vmatpush2.msra.mxu0 0.0
    %2959 = vmatprep.subr.mxu0 0.0
    %2960 = vmatpush2.msra.mxu0 0.0
    %2961 = vmatprep.subr.mxu0 0.0
    %2962 = vmatpush2.msra.mxu0 0.0
    %2963 = vmatprep.subr.mxu0 0.0
    %2964 = vmatpush2.msra.mxu0 0.0
    %2965 = vmatprep.subr.mxu0 0.0
    %2966 = vmatpush2.msra.mxu0 0.0
    %2967 = vmatprep.subr.mxu0 0.0
    %2968 = vmatpush2.msra.mxu0 0.0
    %2969 = vmatprep.mubr.f32.mxu0 0.0
    %2970 = vmatmul.mubr.f32.gmra.mxu0 %v2900
    %v2971 = vpop.f32.mrf.mxu0
    %v2972 = vadd.f32 %v2896, %v2971
    %v2973 = vpop.f32.mrf.mxu0
    %2974 = vmatprep.mubr.f32.mxu0 0.0
    %2975 = vmatmul.mubr.f32.gmra.mxu0 %v2903
    %v2976 = vpop.f32.mrf.mxu0
    %v2977 = vadd.f32 %v2896, %v2976
    %v2978 = vpop.f32.mrf.mxu0
    %2979 = vdwg.mxu0
    %v2980 = vmax.f32 %v2972, 0.0
    %v2981 = vmax.f32 %v2977, 0.0
    %v2982 = vld [vmem:[%s7] sm:$0xff]
    %v2983 = vld [vmem:[%s7 + $0x8] sm:$0xff]
    %v2984 = vld [vmem:[%s7 + $0x10] sm:$0xff]
    %v2985 = vld [vmem:[%s7 + $0x18] sm:$0xff]
    %vm2986 = vcmask 261120
    %v2988 = vsel %vm2986, %v2980, 0
    %v2991 = vsel %vm2986, %v2981, 0
    %2993 = vmatprep.subr.mxu0 0.0
    %2994 = vmatpush1.msra.mxu0 0.0
    %2995 = vmatprep.subr.mxu0 0.0
    %2996 = vmatpush1.msra.mxu0 0.0
    %2997 = vmatprep.subr.mxu0 0.0
    %2998 = vmatpush1.msra.mxu0 0.0
    %2999 = vmatprep.subr.mxu0 0.0
    %3000 = vmatpush1.msra.mxu0 0.0
    %3001 = vmatprep.subr.mxu0 0.0
    %3002 = vmatpush1.msra.mxu0 0.0
    %3003 = vmatprep.subr.mxu0 0.0
    %3004 = vmatpush1.msra.mxu0 0.0
    %3005 = vmatprep.subr.mxu0 0.0
    %3006 = vmatpush1.msra.mxu0 0.0
    %3007 = vmatprep.subr.mxu0 0.0
    %3008 = vmatpush1.msra.mxu0 0.0
    %3009 = vmatprep.subr.mxu0 0.0
    %3010 = vmatpush1.msra.mxu0 0.0
    %3011 = vmatprep.subr.mxu0 0.0
    %3012 = vmatpush1.msra.mxu0 0.0
    %3013 = vmatprep.subr.mxu0 0.0
    %3014 = vmatpush1.msra.mxu0 0.0
    %3015 = vmatprep.subr.mxu0 0.0
    %3016 = vmatpush1.msra.mxu0 0.0
    %3017 = vmatprep.subr.mxu0 0.0
    %3018 = vmatpush1.msra.mxu0 %v2985
    %3019 = vmatprep.subr.mxu0 0.0
    %3020 = vmatpush1.msra.mxu0 %v2984
    %3021 = vmatprep.subr.mxu0 0.0
    %3022 = vmatpush1.msra.mxu0 %v2983
    %3023 = vmatprep.subr.mxu0 0.0
    %3024 = vmatpush1.msra.mxu0 %v2982
    %3025 = vmatprep.subr.mxu0 0.0
    %3026 = vmatpush2.msra.mxu0 0.0
    %3027 = vmatprep.subr.mxu0 0.0
    %3028 = vmatpush2.msra.mxu0 0.0
    %3029 = vmatprep.subr.mxu0 0.0
    %3030 = vmatpush2.msra.mxu0 0.0
    %3031 = vmatprep.subr.mxu0 0.0
    %3032 = vmatpush2.msra.mxu0 0.0
    %3033 = vmatprep.subr.mxu0 0.0
    %3034 = vmatpush2.msra.mxu0 0.0
    %3035 = vmatprep.subr.mxu0 0.0
    %3036 = vmatpush2.msra.mxu0 0.0
    %3037 = vmatprep.subr.mxu0 0.0
    %3038 = vmatpush2.msra.mxu0 0.0
    %3039 = vmatprep.subr.mxu0 0.0
    %3040 = vmatpush2.msra.mxu0 0.0
    %3041 = vmatprep.subr.mxu0 0.0
    %3042 = vmatpush2.msra.mxu0 0.0
    %3043 = vmatprep.subr.mxu0 0.0
    %3044 = vmatpush2.msra.mxu0 0.0
    %3045 = vmatprep.subr.mxu0 0.0
    %3046 = vmatpush2.msra.mxu0 0.0
    %3047 = vmatprep.subr.mxu0 0.0
    %3048 = vmatpush2.msra.mxu0 0.0
    %3049 = vmatprep.subr.mxu0 0.0
    %3050 = vmatpush2.msra.mxu0 0.0
    %3051 = vmatprep.subr.mxu0 0.0
    %3052 = vmatpush2.msra.mxu0 0.0
    %3053 = vmatprep.subr.mxu0 0.0
    %3054 = vmatpush2.msra.mxu0 0.0
    %3055 = vmatprep.subr.mxu0 0.0
    %3056 = vmatpush2.msra.mxu0 0.0
    %3057 = vmatprep.mubr.f32.mxu0 0.0
    %3058 = vmatmul.mubr.f32.gmra.mxu0 %v2988
    %v3059 = vpop.f32.mrf.mxu0
    %v3060 = vadd.f32 0.0, %v3059
    %v3061 = vpop.f32.mrf.mxu0
    %3062 = vmatprep.mubr.f32.mxu0 0.0
    %3063 = vmatmul.mubr.f32.gmra.mxu0 %v2991
    %v3064 = vpop.f32.mrf.mxu0
    %v3065 = vadd.f32 0.0, %v3064
    %v3066 = vpop.f32.mrf.mxu0
    %3067 = vdwg.mxu0
    %v3068 = vld [vmem:[%s6] sm:$0xff]
    %v3069 = vld [vmem:[%s6 + $0x8] sm:$0xff]
    %v3070 = vld [vmem:[%s8] sm:$0x1]
    %v3072 = vlaneseq
    %v3073 = vshrl.u32 %v3072, 7
    %v3074 = vsub.s32 0, %v3073
    %v3075 = vrot.slane %v3070, %v3074
    %v3078 = vsel %vm2898, %v3068, 0
    %v3081 = vsel %vm2898, %v3069, 0
    %3083 = vmatprep.subr.mxu0 0.0
    %3084 = vmatpush1.msra.mxu0 0.0
    %3085 = vmatprep.subr.mxu0 0.0
    %3086 = vmatpush1.msra.mxu0 0.0
    %3087 = vmatprep.subr.mxu0 0.0
    %3088 = vmatpush1.msra.mxu0 0.0
    %3089 = vmatprep.subr.mxu0 0.0
    %3090 = vmatpush1.msra.mxu0 0.0
    %3091 = vmatprep.subr.mxu0 0.0
    %3092 = vmatpush1.msra.mxu0 0.0
    %3093 = vmatprep.subr.mxu0 0.0
    %3094 = vmatpush1.msra.mxu0 0.0
    %3095 = vmatprep.subr.mxu0 0.0
    %3096 = vmatpush1.msra.mxu0 0.0
    %3097 = vmatprep.subr.mxu0 0.0
    %3098 = vmatpush1.msra.mxu0 0.0
    %3099 = vmatprep.subr.mxu0 0.0
    %3100 = vmatpush1.msra.mxu0 0.0
    %3101 = vmatprep.subr.mxu0 0.0
    %3102 = vmatpush1.msra.mxu0 0.0
    %3103 = vmatprep.subr.mxu0 0.0
    %3104 = vmatpush1.msra.mxu0 0.0
    %3105 = vmatprep.subr.mxu0 0.0
    %3106 = vmatpush1.msra.mxu0 0.0
    %3107 = vmatprep.subr.mxu0 0.0
    %3108 = vmatpush1.msra.mxu0 0.0
    %3109 = vmatprep.subr.mxu0 0.0
    %3110 = vmatpush1.msra.mxu0 0.0
    %3111 = vmatprep.subr.mxu0 0.0
    %3112 = vmatpush1.msra.mxu0 %v3065
    %3113 = vmatprep.subr.mxu0 0.0
    %3114 = vmatpush1.msra.mxu0 %v3060
    %3115 = vmatprep.subr.mxu0 0.0
    %3116 = vmatpush2.msra.mxu0 0.0
    %3117 = vmatprep.subr.mxu0 0.0
    %3118 = vmatpush2.msra.mxu0 0.0
    %3119 = vmatprep.subr.mxu0 0.0
    %3120 = vmatpush2.msra.mxu0 0.0
    %3121 = vmatprep.subr.mxu0 0.0
    %3122 = vmatpush2.msra.mxu0 0.0
    %3123 = vmatprep.subr.mxu0 0.0
    %3124 = vmatpush2.msra.mxu0 0.0
    %3125 = vmatprep.subr.mxu0 0.0
    %3126 = vmatpush2.msra.mxu0 0.0
    %3127 = vmatprep.subr.mxu0 0.0
    %3128 = vmatpush2.msra.mxu0 0.0
    %3129 = vmatprep.subr.mxu0 0.0
    %3130 = vmatpush2.msra.mxu0 0.0
    %3131 = vmatprep.subr.mxu0 0.0
    %3132 = vmatpush2.msra.mxu0 0.0
    %3133 = vmatprep.subr.mxu0 0.0
    %3134 = vmatpush2.msra.mxu0 0.0
    %3135 = vmatprep.subr.mxu0 0.0
    %3136 = vmatpush2.msra.mxu0 0.0
    %3137 = vmatprep.subr.mxu0 0.0
    %3138 = vmatpush2.msra.mxu0 0.0
    %3139 = vmatprep.subr.mxu0 0.0
    %3140 = vmatpush2.msra.mxu0 0.0
    %3141 = vmatprep.subr.mxu0 0.0
    %3142 = vmatpush2.msra.mxu0 0.0
    %3143 = vmatprep.subr.mxu0 0.0
    %3144 = vmatpush2.msra.mxu0 0.0
    %3145 = vmatprep.subr.mxu0 0.0
    %3146 = vmatpush2.msra.mxu0 0.0
    %3147 = vmatprep.mubr.f32.mxu0 0.0
    %3148 = vmatmul.mubr.f32.gmra.mxu0 %v3078
    %v3149 = vpop.f32.mrf.mxu0
    %v3150 = vadd.f32 %v3075, %v3149
    %v3151 = vpop.f32.mrf.mxu0
    %3152 = vmatprep.mubr.f32.mxu0 0.0
    %3153 = vmatmul.mubr.f32.gmra.mxu0 %v3081
    %v3154 = vpop.f32.mrf.mxu0
    %v3155 = vadd.f32 %v3075, %v3154
    %v3156 = vpop.f32.mrf.mxu0
    %3157 = vdwg.mxu0
    %v3158 = vmax.f32 %v3150, 0.0
    %v3159 = vmax.f32 %v3155, 0.0
    %v3160 = vld [vmem:[%s9] sm:$0x3]
    %v3162 = vsel %vm2898, %v3160, 0
    %3164 = vmatprep.subr.mxu0 0.0
    %3165 = vmatpush1.msra.mxu0 0.0
    %3166 = vmatprep.subr.mxu0 0.0
    %3167 = vmatpush1.msra.mxu0 0.0
    %3168 = vmatprep.subr.mxu0 0.0
    %3169 = vmatpush1.msra.mxu0 0.0
    %3170 = vmatprep.subr.mxu0 0.0
    %3171 = vmatpush1.msra.mxu0 0.0
    %3172 = vmatprep.subr.mxu0 0.0
    %3173 = vmatpush1.msra.mxu0 0.0
    %3174 = vmatprep.subr.mxu0 0.0
    %3175 = vmatpush1.msra.mxu0 0.0
    %3176 = vmatprep.subr.mxu0 0.0
    %3177 = vmatpush1.msra.mxu0 0.0
    %3178 = vmatprep.subr.mxu0 0.0
    %3179 = vmatpush1.msra.mxu0 0.0
    %3180 = vmatprep.subr.mxu0 0.0
    %3181 = vmatpush1.msra.mxu0 0.0
    %3182 = vmatprep.subr.mxu0 0.0
    %3183 = vmatpush1.msra.mxu0 0.0
    %3184 = vmatprep.subr.mxu0 0.0
    %3185 = vmatpush1.msra.mxu0 0.0
    %3186 = vmatprep.subr.mxu0 0.0
    %3187 = vmatpush1.msra.mxu0 0.0
    %3188 = vmatprep.subr.mxu0 0.0
    %3189 = vmatpush1.msra.mxu0 0.0
    %3190 = vmatprep.subr.mxu0 0.0
    %3191 = vmatpush1.msra.mxu0 0.0
    %3192 = vmatprep.subr.mxu0 0.0
    %3193 = vmatpush1.msra.mxu0 %v3159
    %3194 = vmatprep.subr.mxu0 0.0
    %3195 = vmatpush1.msra.mxu0 %v3158
    %3196 = vmatprep.subr.mxu0 0.0
    %3197 = vmatpush2.msra.mxu0 0.0
    %3198 = vmatprep.subr.mxu0 0.0
    %3199 = vmatpush2.msra.mxu0 0.0
    %3200 = vmatprep.subr.mxu0 0.0
    %3201 = vmatpush2.msra.mxu0 0.0
    %3202 = vmatprep.subr.mxu0 0.0
    %3203 = vmatpush2.msra.mxu0 0.0
    %3204 = vmatprep.subr.mxu0 0.0
    %3205 = vmatpush2.msra.mxu0 0.0
    %3206 = vmatprep.subr.mxu0 0.0
    %3207 = vmatpush2.msra.mxu0 0.0
    %3208 = vmatprep.subr.mxu0 0.0
    %3209 = vmatpush2.msra.mxu0 0.0
    %3210 = vmatprep.subr.mxu0 0.0
    %3211 = vmatpush2.msra.mxu0 0.0
    %3212 = vmatprep.subr.mxu0 0.0
    %3213 = vmatpush2.msra.mxu0 0.0
    %3214 = vmatprep.subr.mxu0 0.0
    %3215 = vmatpush2.msra.mxu0 0.0
    %3216 = vmatprep.subr.mxu0 0.0
    %3217 = vmatpush2.msra.mxu0 0.0
    %3218 = vmatprep.subr.mxu0 0.0
    %3219 = vmatpush2.msra.mxu0 0.0
    %3220 = vmatprep.subr.mxu0 0.0
    %3221 = vmatpush2.msra.mxu0 0.0
    %3222 = vmatprep.subr.mxu0 0.0
    %3223 = vmatpush2.msra.mxu0 0.0
    %3224 = vmatprep.subr.mxu0 0.0
    %3225 = vmatpush2.msra.mxu0 0.0
    %3226 = vmatprep.subr.mxu0 0.0
    %3227 = vmatpush2.msra.mxu0 0.0
    %3228 = vmatprep.mubr.f32.mxu0 0.0
    %3229 = vmatmul.mubr.f32.gmra.mxu0 %v3162
    %v3230 = vpop.f32.mrf.mxu0
    %v3231 = vadd.f32 0.0, %v3230
    %v3232 = vpop.f32.mrf.mxu0
    %3233 = vdwg.mxu0
    %v3234 = vld [vmem:[%s10] sm:$0xff]
    %v3235 = vld [vmem:[%s10 + $0x8] sm:$0xff]
    %v3236 = vld [vmem:[%s10 + $0x10] sm:$0xff]
    %v3237 = vld [vmem:[%s10 + $0x18] sm:$0xff]
    %v3238 = vld [vmem:[%s10 + $0x20] sm:$0xff]
    %v3239 = vld [vmem:[%s10 + $0x28] sm:$0xff]
    %v3240 = vld [vmem:[%s10 + $0x30] sm:$0xff]
    %v3241 = vld [vmem:[%s10 + $0x38] sm:$0xff]
    %v3242 = vld [vmem:[%s11] sm:$0x1]
    %v3244 = vlaneseq
    %v3245 = vshrl.u32 %v3244, 7
    %v3246 = vsub.s32 0, %v3245
    %v3247 = vrot.slane %v3242, %v3246
    %vm3249 = vcmask 523264
    %v3251 = vsel %vm3249, %v3231, 0
    %3253 = vmatprep.subr.mxu0 0.0
    %3254 = vmatpush1.msra.mxu0 0.0
    %3255 = vmatprep.subr.mxu0 0.0
    %3256 = vmatpush1.msra.mxu0 0.0
    %3257 = vmatprep.subr.mxu0 0.0
    %3258 = vmatpush1.msra.mxu0 0.0
    %3259 = vmatprep.subr.mxu0 0.0
    %3260 = vmatpush1.msra.mxu0 0.0
    %3261 = vmatprep.subr.mxu0 0.0
    %3262 = vmatpush1.msra.mxu0 0.0
    %3263 = vmatprep.subr.mxu0 0.0
    %3264 = vmatpush1.msra.mxu0 0.0
    %3265 = vmatprep.subr.mxu0 0.0
    %3266 = vmatpush1.msra.mxu0 0.0
    %3267 = vmatprep.subr.mxu0 0.0
    %3268 = vmatpush1.msra.mxu0 0.0
    %3269 = vmatprep.subr.mxu0 0.0
    %3270 = vmatpush1.msra.mxu0 %v3241
    %3271 = vmatprep.subr.mxu0 0.0
    %3272 = vmatpush1.msra.mxu0 %v3240
    %3273 = vmatprep.subr.mxu0 0.0
    %3274 = vmatpush1.msra.mxu0 %v3239
    %3275 = vmatprep.subr.mxu0 0.0
    %3276 = vmatpush1.msra.mxu0 %v3238
    %3277 = vmatprep.subr.mxu0 0.0
    %3278 = vmatpush1.msra.mxu0 %v3237
    %3279 = vmatprep.subr.mxu0 0.0
    %3280 = vmatpush1.msra.mxu0 %v3236
    %3281 = vmatprep.subr.mxu0 0.0
    %3282 = vmatpush1.msra.mxu0 %v3235
    %3283 = vmatprep.subr.mxu0 0.0
    %3284 = vmatpush1.msra.mxu0 %v3234
    %3285 = vmatprep.subr.mxu0 0.0
    %3286 = vmatpush2.msra.mxu0 0.0
    %3287 = vmatprep.subr.mxu0 0.0
    %3288 = vmatpush2.msra.mxu0 0.0
    %3289 = vmatprep.subr.mxu0 0.0
    %3290 = vmatpush2.msra.mxu0 0.0
    %3291 = vmatprep.subr.mxu0 0.0
    %3292 = vmatpush2.msra.mxu0 0.0
    %3293 = vmatprep.subr.mxu0 0.0
    %3294 = vmatpush2.msra.mxu0 0.0
    %3295 = vmatprep.subr.mxu0 0.0
    %3296 = vmatpush2.msra.mxu0 0.0
    %3297 = vmatprep.subr.mxu0 0.0
    %3298 = vmatpush2.msra.mxu0 0.0
    %3299 = vmatprep.subr.mxu0 0.0
    %3300 = vmatpush2.msra.mxu0 0.0
    %3301 = vmatprep.subr.mxu0 0.0
    %3302 = vmatpush2.msra.mxu0 0.0
    %3303 = vmatprep.subr.mxu0 0.0
    %3304 = vmatpush2.msra.mxu0 0.0
    %3305 = vmatprep.subr.mxu0 0.0
    %3306 = vmatpush2.msra.mxu0 0.0
    %3307 = vmatprep.subr.mxu0 0.0
    %3308 = vmatpush2.msra.mxu0 0.0
    %3309 = vmatprep.subr.mxu0 0.0
    %3310 = vmatpush2.msra.mxu0 0.0
    %3311 = vmatprep.subr.mxu0 0.0
    %3312 = vmatpush2.msra.mxu0 0.0
    %3313 = vmatprep.subr.mxu0 0.0
    %3314 = vmatpush2.msra.mxu0 0.0
    %3315 = vmatprep.subr.mxu0 0.0
    %3316 = vmatpush2.msra.mxu0 0.0
    %3317 = vmatprep.mubr.f32.mxu0 0.0
    %3318 = vmatmul.mubr.f32.gmra.mxu0 %v3251
    %v3319 = vpop.f32.mrf.mxu0
    %v3320 = vadd.f32 %v3247, %v3319
    %v3321 = vpop.f32.mrf.mxu0
    %3322 = vdwg.mxu0
    %v3323 = vmax.f32 %v3320, 0.0
    %v3324 = vld [vmem:[%s12] sm:$0xff]
    %v3325 = vld [vmem:[%s12 + $0x8] sm:$0xff]
    %v3326 = vld [vmem:[%s12 + $0x10] sm:$0xff]
    %v3327 = vld [vmem:[%s12 + $0x18] sm:$0xff]
    %v3328 = vld [vmem:[%s12 + $0x20] sm:$0xff]
    %v3329 = vld [vmem:[%s12 + $0x28] sm:$0xff]
    %v3330 = vld [vmem:[%s12 + $0x30] sm:$0xff]
    %v3331 = vld [vmem:[%s12 + $0x38] sm:$0xff]
    %v3332 = vld [vmem:[%s13] sm:$0x1]
    %v3334 = vlaneseq
    %v3335 = vshrl.u32 %v3334, 7
    %v3336 = vsub.s32 0, %v3335
    %v3337 = vrot.slane %v3332, %v3336
    %v3340 = vsel %vm3249, %v3323, 0
    %3342 = vmatprep.subr.mxu0 0.0
    %3343 = vmatpush1.msra.mxu0 0.0
    %3344 = vmatprep.subr.mxu0 0.0
    %3345 = vmatpush1.msra.mxu0 0.0
    %3346 = vmatprep.subr.mxu0 0.0
    %3347 = vmatpush1.msra.mxu0 0.0
    %3348 = vmatprep.subr.mxu0 0.0
    %3349 = vmatpush1.msra.mxu0 0.0
    %3350 = vmatprep.subr.mxu0 0.0
    %3351 = vmatpush1.msra.mxu0 0.0
    %3352 = vmatprep.subr.mxu0 0.0
    %3353 = vmatpush1.msra.mxu0 0.0
    %3354 = vmatprep.subr.mxu0 0.0
    %3355 = vmatpush1.msra.mxu0 0.0
    %3356 = vmatprep.subr.mxu0 0.0
    %3357 = vmatpush1.msra.mxu0 0.0
    %3358 = vmatprep.subr.mxu0 0.0
    %3359 = vmatpush1.msra.mxu0 %v3331
    %3360 = vmatprep.subr.mxu0 0.0
    %3361 = vmatpush1.msra.mxu0 %v3330
    %3362 = vmatprep.subr.mxu0 0.0
    %3363 = vmatpush1.msra.mxu0 %v3329
    %3364 = vmatprep.subr.mxu0 0.0
    %3365 = vmatpush1.msra.mxu0 %v3328
    %3366 = vmatprep.subr.mxu0 0.0
    %3367 = vmatpush1.msra.mxu0 %v3327
    %3368 = vmatprep.subr.mxu0 0.0
    %3369 = vmatpush1.msra.mxu0 %v3326
    %3370 = vmatprep.subr.mxu0 0.0
    %3371 = vmatpush1.msra.mxu0 %v3325
    %3372 = vmatprep.subr.mxu0 0.0
    %3373 = vmatpush1.msra.mxu0 %v3324
    %3374 = vmatprep.subr.mxu0 0.0
    %3375 = vmatpush2.msra.mxu0 0.0
    %3376 = vmatprep.subr.mxu0 0.0
    %3377 = vmatpush2.msra.mxu0 0.0
    %3378 = vmatprep.subr.mxu0 0.0
    %3379 = vmatpush2.msra.mxu0 0.0
    %3380 = vmatprep.subr.mxu0 0.0
    %3381 = vmatpush2.msra.mxu0 0.0
    %3382 = vmatprep.subr.mxu0 0.0
    %3383 = vmatpush2.msra.mxu0 0.0
    %3384 = vmatprep.subr.mxu0 0.0
    %3385 = vmatpush2.msra.mxu0 0.0
    %3386 = vmatprep.subr.mxu0 0.0
    %3387 = vmatpush2.msra.mxu0 0.0
    %3388 = vmatprep.subr.mxu0 0.0
    %3389 = vmatpush2.msra.mxu0 0.0
    %3390 = vmatprep.subr.mxu0 0.0
    %3391 = vmatpush2.msra.mxu0 0.0
    %3392 = vmatprep.subr.mxu0 0.0
    %3393 = vmatpush2.msra.mxu0 0.0
    %3394 = vmatprep.subr.mxu0 0.0
    %3395 = vmatpush2.msra.mxu0 0.0
    %3396 = vmatprep.subr.mxu0 0.0
    %3397 = vmatpush2.msra.mxu0 0.0
    %3398 = vmatprep.subr.mxu0 0.0
    %3399 = vmatpush2.msra.mxu0 0.0
    %3400 = vmatprep.subr.mxu0 0.0
    %3401 = vmatpush2.msra.mxu0 0.0
    %3402 = vmatprep.subr.mxu0 0.0
    %3403 = vmatpush2.msra.mxu0 0.0
    %3404 = vmatprep.subr.mxu0 0.0
    %3405 = vmatpush2.msra.mxu0 0.0
    %3406 = vmatprep.mubr.f32.mxu0 0.0
    %3407 = vmatmul.mubr.f32.gmra.mxu0 %v3340
    %v3408 = vpop.f32.mrf.mxu0
    %v3409 = vadd.f32 %v3337, %v3408
    %v3410 = vpop.f32.mrf.mxu0
    %3411 = vdwg.mxu0
    %vm3412 = vcmask 74752
    %3413 = vst.msk [vmem:[#allocation2] sm:$0x3] %vm3412, %v3409
    %vm3414 = vcmask 517120
    %3415 = vst.msk [vmem:[#allocation4] sm:$0x3] %vm3414, %v3323
    // Predicated region
    $region58: #{_lambda_.1} parent=1 // pred_check
      _
    $region59: #{_lambda_.1} parent=1 // pred_check_branch
      %3417 = sbr.rel (0) target = $region61
    $region60: #{_lambda_.1} parent=1 // pred_region
      %s3419 = ssub.s32 32, 32
      %3420 = vsyncadd [#allocation3], %s3419
      %s3422 = sshll.u32 [#allocation2], 4
      %s3423 = int_to_ptr.vmem [resolvable:$true] %s3422
      %3425 = dma.vmem_to_hbm [thread:$0]  %s3423, 32, %s14, [#allocation3]
    $region61: #{_lambda_.1} parent=1 // pred_fallthru
      _
    // Predicated region
    $region62: #{_lambda_.1} parent=1 // pred_check
      _
    $region63: #{_lambda_.1} parent=1 // pred_check_branch
      %3427 = sbr.rel (0) target = $region65
    $region64: #{_lambda_.1} parent=1 // pred_region
      %s3429 = ssub.s32 32, 32
      %3430 = vsyncadd [#allocation5], %s3429
      %s3432 = sshll.u32 [#allocation4], 4
      %s3433 = int_to_ptr.vmem [resolvable:$true] %s3432
      %3435 = dma.vmem_to_hbm [thread:$0]  %s3433, 32, %s15, [#allocation5]
    $region65: #{_lambda_.1} parent=1 // pred_fallthru
      _
    // Predicated region
    $region66: #{_lambda_.1} parent=1 // pred_check
      _
    $region67: #{_lambda_.1} parent=1 // pred_check_branch
      %3437 = sbr.rel (0) target = $region69
    $region68: #{_lambda_.1} parent=1 // pred_region
      %3438 = dma.done [#allocation3], 32
    $region69: #{_lambda_.1} parent=1 // pred_fallthru
      _
    // Predicated region
    $region70: #{_lambda_.1} parent=1 // pred_check
      _
    $region71: #{_lambda_.1} parent=1 // pred_check_branch
      %3440 = sbr.rel (0) target = $region73
    $region72: #{_lambda_.1} parent=1 // pred_region
      %3441 = dma.done [#allocation5], 32
    $region73: #{_lambda_.1} parent=1 // pred_fallthru
      _
    %3442 = vsyncpa [#allocation3], 1
    %3443 = vsyncpa [#allocation5], 1

</llo_original>
